<compile_context>
chip_gen: v6e
topology: v6e:2x2x1
jax: 0.10.0
libtpu: 0.0.40
codegen_flags: <defaults>
</compile_context>

<pallas_src>
import functools

import jax
import jax.numpy as jnp
from jax import lax
from jax.experimental import pallas as pl
from jax.experimental.pallas import tpu as pltpu


# ---------------------------------------------------------------------------
# Shared in-kernel helpers (pure jnp on VMEM tiles)
# ---------------------------------------------------------------------------
def _centered_xy(src_nb, src_ctr, trg_nb, trg_ctr, if_elastic):
    # src_nb / trg_nb : (3, Dp, vt)   src_ctr / trg_ctr : (3, vt)
    X = src_nb - src_ctr[:, None, :]
    Y = trg_nb - trg_ctr[:, None, :]
    if if_elastic:
        # trace(X^T X) / 2 per vertex == sum over (coord, neighbor) of X^2 / 2.
        sx = jnp.sum(jnp.sum(X * X, axis=1), axis=0)[None, None, :]   # (1, 1, vt)
        sy = jnp.sum(jnp.sum(Y * Y, axis=1), axis=0)[None, None, :]
        X = X * lax.rsqrt(0.5 * sx + 1e-6)        # rsqrt+mul -> EUP slot
        Y = Y * lax.rsqrt(0.5 * sy + 1e-6)
    return X, Y


def _cross_cov(X, Y):
    # M[i][j] : (1, vt);  per-vertex  X^T Y + 1e-6 * I  (sublane reduce over Dp)
    return [[jnp.sum(X[i] * Y[j], axis=0, keepdims=True) + (1e-6 if i == j else 0.0)
             for j in range(3)] for i in range(3)]


def _polar_newton_schulz(M, iters):
    # Polar orthogonal factor Q = U V^T of M (entries are (1, vt) lane vectors).
    # Pre-scale by 1/||M||_F so all singular values land in (0, 1]; Newton-Schulz
    # then converges to the same orthogonal factor (scale-invariant).
    s = None
    for i in range(3):
        for j in range(3):
            t = M[i][j] * M[i][j]
            s = t if s is None else s + t
    inv = lax.rsqrt(s + 1e-30)
    Q = [[M[i][j] * inv for j in range(3)] for i in range(3)]
    for _ in range(iters):
        # B = Q^T Q (symmetric -> 6 unique entries)
        B = [[None] * 3 for _ in range(3)]
        for i in range(3):
            for j in range(i, 3):
                b = Q[0][i] * Q[0][j] + Q[1][i] * Q[1][j] + Q[2][i] * Q[2][j]
                B[i][j] = b
                B[j][i] = b
        # Z = 1.5 I - 0.5 B ;  Q <- Q @ Z
        Z = [[(1.5 - 0.5 * B[i][j]) if i == j else (-0.5 * B[i][j])
              for j in range(3)] for i in range(3)]
        Q = [[Q[i][0] * Z[0][j] + Q[i][1] * Z[1][j] + Q[i][2] * Z[2][j]
              for j in range(3)] for i in range(3)]
    return Q


def _weighted_residuals(X, Y, RiT, W):
    # RiT[i][j] : (1, vt)  holds R_i^T[i, j]  (torch's V @ U^T);  Y_hat = X @ R_i^T.
    sq = None
    for j in range(3):
        yhat_j = X[0] * RiT[0][j] + X[1] * RiT[1][j] + X[2] * RiT[2][j]   # (Dp, vt)
        d = yhat_j - Y[j]
        sq = d * d if sq is None else sq + d * d
    diff = jnp.sqrt(sq)                                # (Dp, vt)
    # TODO(synk): forward-only; add an eps inside sqrt if a backward pass is planned.
    num = jnp.sum(diff * W, axis=0, keepdims=True)     # (1, vt)
    den = jnp.sum(W, axis=0, keepdims=True)            # (1, vt)
    return num, den


# ---------------------------------------------------------------------------
# Fused kernel (main path): covariance -> Newton-Schulz polar -> weighted residuals
# ---------------------------------------------------------------------------
def _rigid_polar_kernel(src_nb_ref, src_ctr_ref, trg_nb_ref, trg_ctr_ref, w_ref,
                        num_ref, den_ref, *, if_elastic, ns_iters):
    X, Y = _centered_xy(src_nb_ref[...], src_ctr_ref[...],
                        trg_nb_ref[...], trg_ctr_ref[...], if_elastic)
    M = _cross_cov(X, Y)                               # XtY + 1e-6 I
    Q = _polar_newton_schulz(M, ns_iters)              # Q ~= U V^T
    RiT = [[Q[j][i] for j in range(3)] for i in range(3)]   # R_i^T = V U^T = Q^T
    num, den = _weighted_residuals(X, Y, RiT, w_ref[...])
    num_ref[...] = num
    den_ref[...] = den


# ---------------------------------------------------------------------------
# Fallback kernels ("svd" path): flattened (9, vt) covariance / rotation
# ---------------------------------------------------------------------------
def _xty_kernel(src_nb_ref, src_ctr_ref, trg_nb_ref, trg_ctr_ref, xty_ref,
                *, if_elastic):
    X, Y = _centered_xy(src_nb_ref[...], src_ctr_ref[...],
                        trg_nb_ref[...], trg_ctr_ref[...], if_elastic)
    M = _cross_cov(X, Y)
    # Row 3*i+j of the (9, vt) output holds (XtY + 1e-6 I)[i, j]; single store.
    xty_ref[...] = jnp.concatenate([M[i][j] for i in range(3) for j in range(3)],
                                   axis=0)


def _loss_kernel(src_nb_ref, src_ctr_ref, trg_nb_ref, trg_ctr_ref, r_ref, w_ref,
                 num_ref, den_ref, *, if_elastic):
    X, Y = _centered_xy(src_nb_ref[...], src_ctr_ref[...],
                        trg_nb_ref[...], trg_ctr_ref[...], if_elastic)
    # r_ref is (9, vt); row 3*i+j holds R_i^T[i, j].
    RiT = [[r_ref[pl.ds(3 * i + j, 1), :] for j in range(3)] for i in range(3)]
    num, den = _weighted_residuals(X, Y, RiT, w_ref[...])
    num_ref[...] = num
    den_ref[...] = den


# ---------------------------------------------------------------------------
# Wrapper (glue: degree padding, gather in target layout, lane padding, grid)
# ---------------------------------------------------------------------------
def _next_pow2(n):
    p = 1
    while p < n:
        p *= 2
    return p


def _pow2_floor_ge128(n):
    p = 128
    while p * 2 <= n:
        p *= 2
    return p


def rigid_loss_pallas(new_verts, verts_src, nb_idx, weights, if_elastic=False,
                      method="polar", ns_iters=18, vt_cap=2048):
    """new_verts: (V, 3); module buffers: verts_src (V, 3), nb_idx (V, D) int32,
    weights (V, D).  Returns the scalar ARAP loss (matches the torch forward)."""
    f32 = jnp.float32
    V, D = nb_idx.shape

    verts_src = jnp.asarray(verts_src, f32)
    new_verts = jnp.asarray(new_verts, f32)
    nb_idx = jnp.asarray(nb_idx, jnp.int32)
    weights = jnp.asarray(weights, f32)

    # Pad the degree axis to a multiple of 8 sublanes with inert self-loops
    # (neighbor = the vertex itself, weight = 0), exactly like the module's own
    # self-loop padding, so layout padding never carries garbage.
    d_pad = (-D) % 8
    if d_pad:
        self_idx = jnp.broadcast_to(jnp.arange(V, dtype=jnp.int32)[:, None], (V, d_pad))
        nb_idx = jnp.concatenate([nb_idx, self_idx], axis=1)
        weights = jnp.concatenate([weights, jnp.zeros((V, d_pad), f32)], axis=1)
    Dp = D + d_pad

    # Lane tile: as large as the VMEM budget / cap allow (amortizes ~0.35us/step),
    # floored at 128 and halved until the grid has >= 2 steps so v7x's two
    # TensorCores both get work (neutral on single-TC v5e/v6e).
    bytes_per_vertex = 4 * (2 * 3 * Dp + 2 * 3 + Dp + 2) * 2        # double-buffered
    vt_budget = _pow2_floor_ge128((8 << 20) // max(bytes_per_vertex, 1))
    vt = max(128, min(vt_cap, vt_budget, _next_pow2(V)))
    while vt > 128 and -(-V // vt) < 2:
        vt //= 2
    Vp = -(-V // vt) * vt
    pad = Vp - V

    # Glue: gather neighbor coordinates directly in (3, Dp, V) layout.
    # TODO(synk): an in-kernel lane gather from resident (3, V) verts would cut HBM
    # traffic further, but arbitrary per-lane gather lowering is not guaranteed in
    # Mosaic, so the gather stays in the XLA wrapper.
    vs_t = verts_src.T                                  # (3, V)
    nv_t = new_verts.T                                  # (3, V)
    idx_t = nb_idx.T                                    # (Dp, V)
    src_nb_t = vs_t[:, idx_t]                           # (3, Dp, V)
    trg_nb_t = nv_t[:, idx_t]                           # (3, Dp, V)
    w_t = weights.T                                     # (Dp, V)

    if pad:
        lane_pad = lambda a: jnp.pad(a, [(0, 0)] * (a.ndim - 1) + [(0, pad)])
        src_nb_t, trg_nb_t = lane_pad(src_nb_t), lane_pad(trg_nb_t)
        vs_t, nv_t, w_t = lane_pad(vs_t), lane_pad(nv_t), lane_pad(w_t)

    grid = (Vp // vt,)
    cparams = pltpu.CompilerParams(
        dimension_semantics=("parallel",),              # no resident accumulator
        vmem_limit_bytes=32 * 1024 * 1024)

    nb_spec = pl.BlockSpec((3, Dp, vt), lambda i: (0, 0, i))
    ctr_spec = pl.BlockSpec((3, vt), lambda i: (0, i))
    w_spec = pl.BlockSpec((Dp, vt), lambda i: (0, i))
    vec_spec = pl.BlockSpec((1, vt), lambda i: (0, i))
    r_spec = pl.BlockSpec((9, vt), lambda i: (0, i))

    if method == "polar":
        num_per_v, den_per_v = pl.pallas_call(
            functools.partial(_rigid_polar_kernel, if_elastic=if_elastic,
                              ns_iters=ns_iters),
            out_shape=(jax.ShapeDtypeStruct((1, Vp), f32),
                       jax.ShapeDtypeStruct((1, Vp), f32)),
            grid_spec=pltpu.PrefetchScalarGridSpec(
                num_scalar_prefetch=0, grid=grid,
                in_specs=[nb_spec, ctr_spec, nb_spec, ctr_spec, w_spec],
                out_specs=(vec_spec, vec_spec)),
            compiler_params=cparams,
        )(src_nb_t, vs_t, trg_nb_t, nv_t, w_t)

    elif method == "svd":
        xty_flat = pl.pallas_call(
            functools.partial(_xty_kernel, if_elastic=if_elastic),
            out_shape=jax.ShapeDtypeStruct((9, Vp), f32),
            grid_spec=pltpu.PrefetchScalarGridSpec(
                num_scalar_prefetch=0, grid=grid,
                in_specs=[nb_spec, ctr_spec, nb_spec, ctr_spec],
                out_specs=r_spec),
            compiler_params=cparams,
        )(src_nb_t, vs_t, trg_nb_t, nv_t)

        # TODO(synk): batched 3x3 SVD has no Pallas/Mosaic equivalent; kept in JAX.
        xty = xty_flat[:, :V].T.reshape(V, 3, 3)        # [v, i, j]
        U, _, Vh = jnp.linalg.svd(xty)
        # torch.svd returns V (not Vh); R_i^T = V @ U^T = (U @ Vh)^T.  Single
        # transpose straight into the (9, V) layout kernel B expects
        # (row 3*i+j <- R_i^T[i, j]).
        r_flat = jnp.transpose(U @ Vh, (2, 1, 0)).reshape(9, V).astype(f32)
        if pad:
            r_flat = jnp.pad(r_flat, ((0, 0), (0, pad)))

        num_per_v, den_per_v = pl.pallas_call(
            functools.partial(_loss_kernel, if_elastic=if_elastic),
            out_shape=(jax.ShapeDtypeStruct((1, Vp), f32),
                       jax.ShapeDtypeStruct((1, Vp), f32)),
            grid_spec=pltpu.PrefetchScalarGridSpec(
                num_scalar_prefetch=0, grid=grid,
                in_specs=[nb_spec, ctr_spec, nb_spec, ctr_spec, r_spec, w_spec],
                out_specs=(vec_spec, vec_spec)),
            compiler_params=cparams,
        )(src_nb_t, vs_t, trg_nb_t, nv_t, r_flat, w_t)
    else:
        raise ValueError(f"unknown method: {method}")

    # Padded lanes / padded degree rows contribute exactly 0 to both sums.
    return jnp.sum(num_per_v) / (jnp.sum(den_per_v) + 1e-6)


# ---------------------------------------------------------------------------
# Pure-JAX reference (mirrors the torch forward exactly)
# ---------------------------------------------------------------------------
def rigid_loss_ref(new_verts, verts_src, nb_idx, weights, if_elastic=False):
    nb_src = verts_src[nb_idx]                          # (V, D, 3)
    nb_trg = new_verts[nb_idx]
    X = nb_src - verts_src[:, None, :]
    Y = nb_trg - new_verts[:, None, :]
    if if_elastic:
        tr_x = jnp.sum(X * X, axis=(1, 2), keepdims=True) / 2.0
        tr_y = jnp.sum(Y * Y, axis=(1, 2), keepdims=True) / 2.0
        X = X / jnp.sqrt(tr_x + 1e-6)
        Y = Y / jnp.sqrt(tr_y + 1e-6)
    XtY = jnp.einsum('vdi,vdj->vij', X, Y) + 1e-6 * jnp.eye(3, dtype=X.dtype)
    U, _, Vh = jnp.linalg.svd(XtY)
    R_iT = jnp.transpose(jnp.matmul(U, Vh), (0, 2, 1))
    Y_hat = jnp.einsum('vdi,vij->vdj', X, R_iT)
    diff = jnp.linalg.norm(Y_hat - Y, axis=-1)
    return jnp.sum(diff * weights) / (jnp.sum(weights) + 1e-6)


if __name__ == "__main__":
    key = jax.random.PRNGKey(0)
    # (V, D): V vertices, max vertex degree (after self-loop padding).
    # Second case exercises both the lane-padding (V % 128 != 0) and the
    # degree-padding (D % 8 != 0) paths.
    for case_i, (V, D) in enumerate(((256, 8), (200, 6))):
        k1, k2, k3, k4 = jax.random.split(jax.random.fold_in(key, V), 4)
        verts_src = jax.random.normal(k1, (V, 3), jnp.float32)          # meshes_src verts
        nb_idx = jax.random.randint(k2, (V, D), 0, V, dtype=jnp.int32)  # neighborhood_indices
        weights = jax.random.uniform(k3, (V, D), jnp.float32)           # neighborhood_weights
        new_verts = verts_src + 0.1 * jax.random.normal(k4, (V, 3), jnp.float32)

        for elastic in (False, True):
            ref = rigid_loss_ref(new_verts, verts_src, nb_idx, weights,
                                 if_elastic=elastic)
            out = jax.block_until_ready(
                rigid_loss_pallas(new_verts, verts_src, nb_idx, weights,
                                  if_elastic=elastic, method="polar"))
            assert jnp.allclose(out, ref, rtol=1e-3, atol=1e-4), (
                "polar", V, D, elastic, float(out), float(ref))

        if case_i == 0:
            # SVD fallback path sanity check on one configuration.
            ref = rigid_loss_ref(new_verts, verts_src, nb_idx, weights,
                                 if_elastic=False)
            out = jax.block_until_ready(
                rigid_loss_pallas(new_verts, verts_src, nb_idx, weights,
                                  if_elastic=False, method="svd"))
            assert jnp.allclose(out, ref, rtol=1e-3, atol=1e-4), (
                "svd", V, D, float(out), float(ref))

    print("KERNEL_OK")
</pallas_src>

<mosaic_0001>
module attributes {stable_mosaic.version = 11 : i64} {
  func.func @_rigid_polar_kernel(%arg0: i32, %arg1: memref<3x8x128xf32, #tpu.memory_space<vmem>>, %arg2: memref<3x128xf32, #tpu.memory_space<vmem>>, %arg3: memref<3x8x128xf32, #tpu.memory_space<vmem>>, %arg4: memref<3x128xf32, #tpu.memory_space<vmem>>, %arg5: memref<8x128xf32, #tpu.memory_space<vmem>>, %arg6: memref<1x128xf32, #tpu.memory_space<vmem>>, %arg7: memref<1x128xf32, #tpu.memory_space<vmem>>) attributes {dimension_semantics = [#tpu.dimension_semantics<parallel>], iteration_bounds = array<i64: 2>, scalar_prefetch = 0 : i64, scratch_operands = 0 : i64, tpu.core_type = #tpu.core_type<tc>, window_params = [{transform_indices = @transform_0, window_bounds = array<i64: 3, 8, 128>}, {transform_indices = @transform_1, window_bounds = array<i64: 3, 128>}, {transform_indices = @transform_2, window_bounds = array<i64: 3, 8, 128>}, {transform_indices = @transform_3, window_bounds = array<i64: 3, 128>}, {transform_indices = @transform_4, window_bounds = array<i64: 8, 128>}, {transform_indices = @transform_5, window_bounds = array<i64: 1, 128>}, {transform_indices = @transform_6, window_bounds = array<i64: 1, 128>}]} {
    %c0 = arith.constant 0 : index
    %c0_0 = arith.constant 0 : index
    %c0_1 = arith.constant 0 : index
    %0 = vector.load %arg1[%c0, %c0_0, %c0_1] : memref<3x8x128xf32, #tpu.memory_space<vmem>>, vector<3x8x128xf32>
    %c0_2 = arith.constant 0 : index
    %c0_3 = arith.constant 0 : index
    %1 = vector.load %arg2[%c0_2, %c0_3] : memref<3x128xf32, #tpu.memory_space<vmem>>, vector<3x128xf32>
    %c0_4 = arith.constant 0 : index
    %c0_5 = arith.constant 0 : index
    %c0_6 = arith.constant 0 : index
    %2 = vector.load %arg3[%c0_4, %c0_5, %c0_6] : memref<3x8x128xf32, #tpu.memory_space<vmem>>, vector<3x8x128xf32>
    %c0_7 = arith.constant 0 : index
    %c0_8 = arith.constant 0 : index
    %3 = vector.load %arg4[%c0_7, %c0_8] : memref<3x128xf32, #tpu.memory_space<vmem>>, vector<3x128xf32>
    %4 = vector.shape_cast %1 : vector<3x128xf32> to vector<3x1x128xf32>
    %5 = vector.broadcast %4 : vector<3x1x128xf32> to vector<3x8x128xf32>
    %6 = arith.subf %0, %5 : vector<3x8x128xf32>
    %7 = vector.shape_cast %3 : vector<3x128xf32> to vector<3x1x128xf32>
    %8 = vector.broadcast %7 : vector<3x1x128xf32> to vector<3x8x128xf32>
    %9 = arith.subf %2, %8 : vector<3x8x128xf32>
    %10 = vector.extract_strided_slice %6 {offsets = [0, 0, 0], sizes = [1, 8, 128], strides = [1, 1, 1]} : vector<3x8x128xf32> to vector<1x8x128xf32>
    %11 = vector.shape_cast %10 : vector<1x8x128xf32> to vector<8x128xf32>
    %12 = vector.extract_strided_slice %9 {offsets = [0, 0, 0], sizes = [1, 8, 128], strides = [1, 1, 1]} : vector<3x8x128xf32> to vector<1x8x128xf32>
    %13 = vector.shape_cast %12 : vector<1x8x128xf32> to vector<8x128xf32>
    %14 = arith.mulf %11, %13 : vector<8x128xf32>
    %cst = arith.constant dense<0.000000e+00> : vector<128xf32>
    %15 = vector.multi_reduction <add>, %14, %cst [0] : vector<8x128xf32> to vector<128xf32>
    %16 = vector.shape_cast %15 : vector<128xf32> to vector<1x128xf32>
    %cst_9 = arith.constant 9.99999997E-7 : f32
    %17 = vector.broadcast %cst_9 : f32 to vector<1x128xf32>
    %18 = arith.addf %16, %17 : vector<1x128xf32>
    %19 = vector.extract_strided_slice %6 {offsets = [0, 0, 0], sizes = [1, 8, 128], strides = [1, 1, 1]} : vector<3x8x128xf32> to vector<1x8x128xf32>
    %20 = vector.shape_cast %19 : vector<1x8x128xf32> to vector<8x128xf32>
    %21 = vector.extract_strided_slice %9 {offsets = [1, 0, 0], sizes = [1, 8, 128], strides = [1, 1, 1]} : vector<3x8x128xf32> to vector<1x8x128xf32>
    %22 = vector.shape_cast %21 : vector<1x8x128xf32> to vector<8x128xf32>
    %23 = arith.mulf %20, %22 : vector<8x128xf32>
    %cst_10 = arith.constant dense<0.000000e+00> : vector<128xf32>
    %24 = vector.multi_reduction <add>, %23, %cst_10 [0] : vector<8x128xf32> to vector<128xf32>
    %25 = vector.shape_cast %24 : vector<128xf32> to vector<1x128xf32>
    %cst_11 = arith.constant 0.000000e+00 : f32
    %26 = vector.broadcast %cst_11 : f32 to vector<1x128xf32>
    %27 = arith.addf %25, %26 : vector<1x128xf32>
    %28 = vector.extract_strided_slice %6 {offsets = [0, 0, 0], sizes = [1, 8, 128], strides = [1, 1, 1]} : vector<3x8x128xf32> to vector<1x8x128xf32>
    %29 = vector.shape_cast %28 : vector<1x8x128xf32> to vector<8x128xf32>
    %30 = vector.extract_strided_slice %9 {offsets = [2, 0, 0], sizes = [1, 8, 128], strides = [1, 1, 1]} : vector<3x8x128xf32> to vector<1x8x128xf32>
    %31 = vector.shape_cast %30 : vector<1x8x128xf32> to vector<8x128xf32>
    %32 = arith.mulf %29, %31 : vector<8x128xf32>
    %cst_12 = arith.constant dense<0.000000e+00> : vector<128xf32>
    %33 = vector.multi_reduction <add>, %32, %cst_12 [0] : vector<8x128xf32> to vector<128xf32>
    %34 = vector.shape_cast %33 : vector<128xf32> to vector<1x128xf32>
    %cst_13 = arith.constant 0.000000e+00 : f32
    %35 = vector.broadcast %cst_13 : f32 to vector<1x128xf32>
    %36 = arith.addf %34, %35 : vector<1x128xf32>
    %37 = vector.extract_strided_slice %6 {offsets = [1, 0, 0], sizes = [1, 8, 128], strides = [1, 1, 1]} : vector<3x8x128xf32> to vector<1x8x128xf32>
    %38 = vector.shape_cast %37 : vector<1x8x128xf32> to vector<8x128xf32>
    %39 = vector.extract_strided_slice %9 {offsets = [0, 0, 0], sizes = [1, 8, 128], strides = [1, 1, 1]} : vector<3x8x128xf32> to vector<1x8x128xf32>
    %40 = vector.shape_cast %39 : vector<1x8x128xf32> to vector<8x128xf32>
    %41 = arith.mulf %38, %40 : vector<8x128xf32>
    %cst_14 = arith.constant dense<0.000000e+00> : vector<128xf32>
    %42 = vector.multi_reduction <add>, %41, %cst_14 [0] : vector<8x128xf32> to vector<128xf32>
    %43 = vector.shape_cast %42 : vector<128xf32> to vector<1x128xf32>
    %cst_15 = arith.constant 0.000000e+00 : f32
    %44 = vector.broadcast %cst_15 : f32 to vector<1x128xf32>
    %45 = arith.addf %43, %44 : vector<1x128xf32>
    %46 = vector.extract_strided_slice %6 {offsets = [1, 0, 0], sizes = [1, 8, 128], strides = [1, 1, 1]} : vector<3x8x128xf32> to vector<1x8x128xf32>
    %47 = vector.shape_cast %46 : vector<1x8x128xf32> to vector<8x128xf32>
    %48 = vector.extract_strided_slice %9 {offsets = [1, 0, 0], sizes = [1, 8, 128], strides = [1, 1, 1]} : vector<3x8x128xf32> to vector<1x8x128xf32>
    %49 = vector.shape_cast %48 : vector<1x8x128xf32> to vector<8x128xf32>
    %50 = arith.mulf %47, %49 : vector<8x128xf32>
    %cst_16 = arith.constant dense<0.000000e+00> : vector<128xf32>
    %51 = vector.multi_reduction <add>, %50, %cst_16 [0] : vector<8x128xf32> to vector<128xf32>
    %52 = vector.shape_cast %51 : vector<128xf32> to vector<1x128xf32>
    %cst_17 = arith.constant 9.99999997E-7 : f32
    %53 = vector.broadcast %cst_17 : f32 to vector<1x128xf32>
    %54 = arith.addf %52, %53 : vector<1x128xf32>
    %55 = vector.extract_strided_slice %6 {offsets = [1, 0, 0], sizes = [1, 8, 128], strides = [1, 1, 1]} : vector<3x8x128xf32> to vector<1x8x128xf32>
    %56 = vector.shape_cast %55 : vector<1x8x128xf32> to vector<8x128xf32>
    %57 = vector.extract_strided_slice %9 {offsets = [2, 0, 0], sizes = [1, 8, 128], strides = [1, 1, 1]} : vector<3x8x128xf32> to vector<1x8x128xf32>
    %58 = vector.shape_cast %57 : vector<1x8x128xf32> to vector<8x128xf32>
    %59 = arith.mulf %56, %58 : vector<8x128xf32>
    %cst_18 = arith.constant dense<0.000000e+00> : vector<128xf32>
    %60 = vector.multi_reduction <add>, %59, %cst_18 [0] : vector<8x128xf32> to vector<128xf32>
    %61 = vector.shape_cast %60 : vector<128xf32> to vector<1x128xf32>
    %cst_19 = arith.constant 0.000000e+00 : f32
    %62 = vector.broadcast %cst_19 : f32 to vector<1x128xf32>
    %63 = arith.addf %61, %62 : vector<1x128xf32>
    %64 = vector.extract_strided_slice %6 {offsets = [2, 0, 0], sizes = [1, 8, 128], strides = [1, 1, 1]} : vector<3x8x128xf32> to vector<1x8x128xf32>
    %65 = vector.shape_cast %64 : vector<1x8x128xf32> to vector<8x128xf32>
    %66 = vector.extract_strided_slice %9 {offsets = [0, 0, 0], sizes = [1, 8, 128], strides = [1, 1, 1]} : vector<3x8x128xf32> to vector<1x8x128xf32>
    %67 = vector.shape_cast %66 : vector<1x8x128xf32> to vector<8x128xf32>
    %68 = arith.mulf %65, %67 : vector<8x128xf32>
    %cst_20 = arith.constant dense<0.000000e+00> : vector<128xf32>
    %69 = vector.multi_reduction <add>, %68, %cst_20 [0] : vector<8x128xf32> to vector<128xf32>
    %70 = vector.shape_cast %69 : vector<128xf32> to vector<1x128xf32>
    %cst_21 = arith.constant 0.000000e+00 : f32
    %71 = vector.broadcast %cst_21 : f32 to vector<1x128xf32>
    %72 = arith.addf %70, %71 : vector<1x128xf32>
    %73 = vector.extract_strided_slice %6 {offsets = [2, 0, 0], sizes = [1, 8, 128], strides = [1, 1, 1]} : vector<3x8x128xf32> to vector<1x8x128xf32>
    %74 = vector.shape_cast %73 : vector<1x8x128xf32> to vector<8x128xf32>
    %75 = vector.extract_strided_slice %9 {offsets = [1, 0, 0], sizes = [1, 8, 128], strides = [1, 1, 1]} : vector<3x8x128xf32> to vector<1x8x128xf32>
    %76 = vector.shape_cast %75 : vector<1x8x128xf32> to vector<8x128xf32>
    %77 = arith.mulf %74, %76 : vector<8x128xf32>
    %cst_22 = arith.constant dense<0.000000e+00> : vector<128xf32>
    %78 = vector.multi_reduction <add>, %77, %cst_22 [0] : vector<8x128xf32> to vector<128xf32>
    %79 = vector.shape_cast %78 : vector<128xf32> to vector<1x128xf32>
    %cst_23 = arith.constant 0.000000e+00 : f32
    %80 = vector.broadcast %cst_23 : f32 to vector<1x128xf32>
    %81 = arith.addf %79, %80 : vector<1x128xf32>
    %82 = vector.extract_strided_slice %6 {offsets = [2, 0, 0], sizes = [1, 8, 128], strides = [1, 1, 1]} : vector<3x8x128xf32> to vector<1x8x128xf32>
    %83 = vector.shape_cast %82 : vector<1x8x128xf32> to vector<8x128xf32>
    %84 = vector.extract_strided_slice %9 {offsets = [2, 0, 0], sizes = [1, 8, 128], strides = [1, 1, 1]} : vector<3x8x128xf32> to vector<1x8x128xf32>
    %85 = vector.shape_cast %84 : vector<1x8x128xf32> to vector<8x128xf32>
    %86 = arith.mulf %83, %85 : vector<8x128xf32>
    %cst_24 = arith.constant dense<0.000000e+00> : vector<128xf32>
    %87 = vector.multi_reduction <add>, %86, %cst_24 [0] : vector<8x128xf32> to vector<128xf32>
    %88 = vector.shape_cast %87 : vector<128xf32> to vector<1x128xf32>
    %cst_25 = arith.constant 9.99999997E-7 : f32
    %89 = vector.broadcast %cst_25 : f32 to vector<1x128xf32>
    %90 = arith.addf %88, %89 : vector<1x128xf32>
    %91 = arith.mulf %18, %18 : vector<1x128xf32>
    %92 = arith.mulf %27, %27 : vector<1x128xf32>
    %93 = arith.addf %91, %92 : vector<1x128xf32>
    %94 = arith.mulf %36, %36 : vector<1x128xf32>
    %95 = arith.addf %93, %94 : vector<1x128xf32>
    %96 = arith.mulf %45, %45 : vector<1x128xf32>
    %97 = arith.addf %95, %96 : vector<1x128xf32>
    %98 = arith.mulf %54, %54 : vector<1x128xf32>
    %99 = arith.addf %97, %98 : vector<1x128xf32>
    %100 = arith.mulf %63, %63 : vector<1x128xf32>
    %101 = arith.addf %99, %100 : vector<1x128xf32>
    %102 = arith.mulf %72, %72 : vector<1x128xf32>
    %103 = arith.addf %101, %102 : vector<1x128xf32>
    %104 = arith.mulf %81, %81 : vector<1x128xf32>
    %105 = arith.addf %103, %104 : vector<1x128xf32>
    %106 = arith.mulf %90, %90 : vector<1x128xf32>
    %107 = arith.addf %105, %106 : vector<1x128xf32>
    %cst_26 = arith.constant 1.000000e-30 : f32
    %108 = vector.broadcast %cst_26 : f32 to vector<1x128xf32>
    %109 = arith.addf %107, %108 : vector<1x128xf32>
    %110 = math.rsqrt %109 : vector<1x128xf32>
    %111 = arith.mulf %18, %110 : vector<1x128xf32>
    %112 = arith.mulf %27, %110 : vector<1x128xf32>
    %113 = arith.mulf %36, %110 : vector<1x128xf32>
    %114 = arith.mulf %45, %110 : vector<1x128xf32>
    %115 = arith.mulf %54, %110 : vector<1x128xf32>
    %116 = arith.mulf %63, %110 : vector<1x128xf32>
    %117 = arith.mulf %72, %110 : vector<1x128xf32>
    %118 = arith.mulf %81, %110 : vector<1x128xf32>
    %119 = arith.mulf %90, %110 : vector<1x128xf32>
    %120 = arith.mulf %111, %111 : vector<1x128xf32>
    %121 = arith.mulf %114, %114 : vector<1x128xf32>
    %122 = arith.addf %120, %121 : vector<1x128xf32>
    %123 = arith.mulf %117, %117 : vector<1x128xf32>
    %124 = arith.addf %122, %123 : vector<1x128xf32>
    %125 = arith.mulf %111, %112 : vector<1x128xf32>
    %126 = arith.mulf %114, %115 : vector<1x128xf32>
    %127 = arith.addf %125, %126 : vector<1x128xf32>
    %128 = arith.mulf %117, %118 : vector<1x128xf32>
    %129 = arith.addf %127, %128 : vector<1x128xf32>
    %130 = arith.mulf %111, %113 : vector<1x128xf32>
    %131 = arith.mulf %114, %116 : vector<1x128xf32>
    %132 = arith.addf %130, %131 : vector<1x128xf32>
    %133 = arith.mulf %117, %119 : vector<1x128xf32>
    %134 = arith.addf %132, %133 : vector<1x128xf32>
    %135 = arith.mulf %112, %112 : vector<1x128xf32>
    %136 = arith.mulf %115, %115 : vector<1x128xf32>
    %137 = arith.addf %135, %136 : vector<1x128xf32>
    %138 = arith.mulf %118, %118 : vector<1x128xf32>
    %139 = arith.addf %137, %138 : vector<1x128xf32>
    %140 = arith.mulf %112, %113 : vector<1x128xf32>
    %141 = arith.mulf %115, %116 : vector<1x128xf32>
    %142 = arith.addf %140, %141 : vector<1x128xf32>
    %143 = arith.mulf %118, %119 : vector<1x128xf32>
    %144 = arith.addf %142, %143 : vector<1x128xf32>
    %145 = arith.mulf %113, %113 : vector<1x128xf32>
    %146 = arith.mulf %116, %116 : vector<1x128xf32>
    %147 = arith.addf %145, %146 : vector<1x128xf32>
    %148 = arith.mulf %119, %119 : vector<1x128xf32>
    %149 = arith.addf %147, %148 : vector<1x128xf32>
    %cst_27 = arith.constant 5.000000e-01 : f32
    %150 = vector.broadcast %cst_27 : f32 to vector<1x128xf32>
    %151 = arith.mulf %150, %124 : vector<1x128xf32>
    %cst_28 = arith.constant 1.500000e+00 : f32
    %152 = vector.broadcast %cst_28 : f32 to vector<1x128xf32>
    %153 = arith.subf %152, %151 : vector<1x128xf32>
    %cst_29 = arith.constant -5.000000e-01 : f32
    %154 = vector.broadcast %cst_29 : f32 to vector<1x128xf32>
    %155 = arith.mulf %154, %129 : vector<1x128xf32>
    %cst_30 = arith.constant -5.000000e-01 : f32
    %156 = vector.broadcast %cst_30 : f32 to vector<1x128xf32>
    %157 = arith.mulf %156, %134 : vector<1x128xf32>
    %cst_31 = arith.constant -5.000000e-01 : f32
    %158 = vector.broadcast %cst_31 : f32 to vector<1x128xf32>
    %159 = arith.mulf %158, %129 : vector<1x128xf32>
    %cst_32 = arith.constant 5.000000e-01 : f32
    %160 = vector.broadcast %cst_32 : f32 to vector<1x128xf32>
    %161 = arith.mulf %160, %139 : vector<1x128xf32>
    %cst_33 = arith.constant 1.500000e+00 : f32
    %162 = vector.broadcast %cst_33 : f32 to vector<1x128xf32>
    %163 = arith.subf %162, %161 : vector<1x128xf32>
    %cst_34 = arith.constant -5.000000e-01 : f32
    %164 = vector.broadcast %cst_34 : f32 to vector<1x128xf32>
    %165 = arith.mulf %164, %144 : vector<1x128xf32>
    %cst_35 = arith.constant -5.000000e-01 : f32
    %166 = vector.broadcast %cst_35 : f32 to vector<1x128xf32>
    %167 = arith.mulf %166, %134 : vector<1x128xf32>
    %cst_36 = arith.constant -5.000000e-01 : f32
    %168 = vector.broadcast %cst_36 : f32 to vector<1x128xf32>
    %169 = arith.mulf %168, %144 : vector<1x128xf32>
    %cst_37 = arith.constant 5.000000e-01 : f32
    %170 = vector.broadcast %cst_37 : f32 to vector<1x128xf32>
    %171 = arith.mulf %170, %149 : vector<1x128xf32>
    %cst_38 = arith.constant 1.500000e+00 : f32
    %172 = vector.broadcast %cst_38 : f32 to vector<1x128xf32>
    %173 = arith.subf %172, %171 : vector<1x128xf32>
    %174 = arith.mulf %111, %153 : vector<1x128xf32>
    %175 = arith.mulf %112, %159 : vector<1x128xf32>
    %176 = arith.addf %174, %175 : vector<1x128xf32>
    %177 = arith.mulf %113, %167 : vector<1x128xf32>
    %178 = arith.addf %176, %177 : vector<1x128xf32>
    %179 = arith.mulf %111, %155 : vector<1x128xf32>
    %180 = arith.mulf %112, %163 : vector<1x128xf32>
    %181 = arith.addf %179, %180 : vector<1x128xf32>
    %182 = arith.mulf %113, %169 : vector<1x128xf32>
    %183 = arith.addf %181, %182 : vector<1x128xf32>
    %184 = arith.mulf %111, %157 : vector<1x128xf32>
    %185 = arith.mulf %112, %165 : vector<1x128xf32>
    %186 = arith.addf %184, %185 : vector<1x128xf32>
    %187 = arith.mulf %113, %173 : vector<1x128xf32>
    %188 = arith.addf %186, %187 : vector<1x128xf32>
    %189 = arith.mulf %114, %153 : vector<1x128xf32>
    %190 = arith.mulf %115, %159 : vector<1x128xf32>
    %191 = arith.addf %189, %190 : vector<1x128xf32>
    %192 = arith.mulf %116, %167 : vector<1x128xf32>
    %193 = arith.addf %191, %192 : vector<1x128xf32>
    %194 = arith.mulf %114, %155 : vector<1x128xf32>
    %195 = arith.mulf %115, %163 : vector<1x128xf32>
    %196 = arith.addf %194, %195 : vector<1x128xf32>
    %197 = arith.mulf %116, %169 : vector<1x128xf32>
    %198 = arith.addf %196, %197 : vector<1x128xf32>
    %199 = arith.mulf %114, %157 : vector<1x128xf32>
    %200 = arith.mulf %115, %165 : vector<1x128xf32>
    %201 = arith.addf %199, %200 : vector<1x128xf32>
    %202 = arith.mulf %116, %173 : vector<1x128xf32>
    %203 = arith.addf %201, %202 : vector<1x128xf32>
    %204 = arith.mulf %117, %153 : vector<1x128xf32>
    %205 = arith.mulf %118, %159 : vector<1x128xf32>
    %206 = arith.addf %204, %205 : vector<1x128xf32>
    %207 = arith.mulf %119, %167 : vector<1x128xf32>
    %208 = arith.addf %206, %207 : vector<1x128xf32>
    %209 = arith.mulf %117, %155 : vector<1x128xf32>
    %210 = arith.mulf %118, %163 : vector<1x128xf32>
    %211 = arith.addf %209, %210 : vector<1x128xf32>
    %212 = arith.mulf %119, %169 : vector<1x128xf32>
    %213 = arith.addf %211, %212 : vector<1x128xf32>
    %214 = arith.mulf %117, %157 : vector<1x128xf32>
    %215 = arith.mulf %118, %165 : vector<1x128xf32>
    %216 = arith.addf %214, %215 : vector<1x128xf32>
    %217 = arith.mulf %119, %173 : vector<1x128xf32>
    %218 = arith.addf %216, %217 : vector<1x128xf32>
    %219 = arith.mulf %178, %178 : vector<1x128xf32>
    %220 = arith.mulf %193, %193 : vector<1x128xf32>
    %221 = arith.addf %219, %220 : vector<1x128xf32>
    %222 = arith.mulf %208, %208 : vector<1x128xf32>
    %223 = arith.addf %221, %222 : vector<1x128xf32>
    %224 = arith.mulf %178, %183 : vector<1x128xf32>
    %225 = arith.mulf %193, %198 : vector<1x128xf32>
    %226 = arith.addf %224, %225 : vector<1x128xf32>
    %227 = arith.mulf %208, %213 : vector<1x128xf32>
    %228 = arith.addf %226, %227 : vector<1x128xf32>
    %229 = arith.mulf %178, %188 : vector<1x128xf32>
    %230 = arith.mulf %193, %203 : vector<1x128xf32>
    %231 = arith.addf %229, %230 : vector<1x128xf32>
    %232 = arith.mulf %208, %218 : vector<1x128xf32>
    %233 = arith.addf %231, %232 : vector<1x128xf32>
    %234 = arith.mulf %183, %183 : vector<1x128xf32>
    %235 = arith.mulf %198, %198 : vector<1x128xf32>
    %236 = arith.addf %234, %235 : vector<1x128xf32>
    %237 = arith.mulf %213, %213 : vector<1x128xf32>
    %238 = arith.addf %236, %237 : vector<1x128xf32>
    %239 = arith.mulf %183, %188 : vector<1x128xf32>
    %240 = arith.mulf %198, %203 : vector<1x128xf32>
    %241 = arith.addf %239, %240 : vector<1x128xf32>
    %242 = arith.mulf %213, %218 : vector<1x128xf32>
    %243 = arith.addf %241, %242 : vector<1x128xf32>
    %244 = arith.mulf %188, %188 : vector<1x128xf32>
    %245 = arith.mulf %203, %203 : vector<1x128xf32>
    %246 = arith.addf %244, %245 : vector<1x128xf32>
    %247 = arith.mulf %218, %218 : vector<1x128xf32>
    %248 = arith.addf %246, %247 : vector<1x128xf32>
    %cst_39 = arith.constant 5.000000e-01 : f32
    %249 = vector.broadcast %cst_39 : f32 to vector<1x128xf32>
    %250 = arith.mulf %249, %223 : vector<1x128xf32>
    %cst_40 = arith.constant 1.500000e+00 : f32
    %251 = vector.broadcast %cst_40 : f32 to vector<1x128xf32>
    %252 = arith.subf %251, %250 : vector<1x128xf32>
    %cst_41 = arith.constant -5.000000e-01 : f32
    %253 = vector.broadcast %cst_41 : f32 to vector<1x128xf32>
    %254 = arith.mulf %253, %228 : vector<1x128xf32>
    %cst_42 = arith.constant -5.000000e-01 : f32
    %255 = vector.broadcast %cst_42 : f32 to vector<1x128xf32>
    %256 = arith.mulf %255, %233 : vector<1x128xf32>
    %cst_43 = arith.constant -5.000000e-01 : f32
    %257 = vector.broadcast %cst_43 : f32 to vector<1x128xf32>
    %258 = arith.mulf %257, %228 : vector<1x128xf32>
    %cst_44 = arith.constant 5.000000e-01 : f32
    %259 = vector.broadcast %cst_44 : f32 to vector<1x128xf32>
    %260 = arith.mulf %259, %238 : vector<1x128xf32>
    %cst_45 = arith.constant 1.500000e+00 : f32
    %261 = vector.broadcast %cst_45 : f32 to vector<1x128xf32>
    %262 = arith.subf %261, %260 : vector<1x128xf32>
    %cst_46 = arith.constant -5.000000e-01 : f32
    %263 = vector.broadcast %cst_46 : f32 to vector<1x128xf32>
    %264 = arith.mulf %263, %243 : vector<1x128xf32>
    %cst_47 = arith.constant -5.000000e-01 : f32
    %265 = vector.broadcast %cst_47 : f32 to vector<1x128xf32>
    %266 = arith.mulf %265, %233 : vector<1x128xf32>
    %cst_48 = arith.constant -5.000000e-01 : f32
    %267 = vector.broadcast %cst_48 : f32 to vector<1x128xf32>
    %268 = arith.mulf %267, %243 : vector<1x128xf32>
    %cst_49 = arith.constant 5.000000e-01 : f32
    %269 = vector.broadcast %cst_49 : f32 to vector<1x128xf32>
    %270 = arith.mulf %269, %248 : vector<1x128xf32>
    %cst_50 = arith.constant 1.500000e+00 : f32
    %271 = vector.broadcast %cst_50 : f32 to vector<1x128xf32>
    %272 = arith.subf %271, %270 : vector<1x128xf32>
    %273 = arith.mulf %178, %252 : vector<1x128xf32>
    %274 = arith.mulf %183, %258 : vector<1x128xf32>
    %275 = arith.addf %273, %274 : vector<1x128xf32>
    %276 = arith.mulf %188, %266 : vector<1x128xf32>
    %277 = arith.addf %275, %276 : vector<1x128xf32>
    %278 = arith.mulf %178, %254 : vector<1x128xf32>
    %279 = arith.mulf %183, %262 : vector<1x128xf32>
    %280 = arith.addf %278, %279 : vector<1x128xf32>
    %281 = arith.mulf %188, %268 : vector<1x128xf32>
    %282 = arith.addf %280, %281 : vector<1x128xf32>
    %283 = arith.mulf %178, %256 : vector<1x128xf32>
    %284 = arith.mulf %183, %264 : vector<1x128xf32>
    %285 = arith.addf %283, %284 : vector<1x128xf32>
    %286 = arith.mulf %188, %272 : vector<1x128xf32>
    %287 = arith.addf %285, %286 : vector<1x128xf32>
    %288 = arith.mulf %193, %252 : vector<1x128xf32>
    %289 = arith.mulf %198, %258 : vector<1x128xf32>
    %290 = arith.addf %288, %289 : vector<1x128xf32>
    %291 = arith.mulf %203, %266 : vector<1x128xf32>
    %292 = arith.addf %290, %291 : vector<1x128xf32>
    %293 = arith.mulf %193, %254 : vector<1x128xf32>
    %294 = arith.mulf %198, %262 : vector<1x128xf32>
    %295 = arith.addf %293, %294 : vector<1x128xf32>
    %296 = arith.mulf %203, %268 : vector<1x128xf32>
    %297 = arith.addf %295, %296 : vector<1x128xf32>
    %298 = arith.mulf %193, %256 : vector<1x128xf32>
    %299 = arith.mulf %198, %264 : vector<1x128xf32>
    %300 = arith.addf %298, %299 : vector<1x128xf32>
    %301 = arith.mulf %203, %272 : vector<1x128xf32>
    %302 = arith.addf %300, %301 : vector<1x128xf32>
    %303 = arith.mulf %208, %252 : vector<1x128xf32>
    %304 = arith.mulf %213, %258 : vector<1x128xf32>
    %305 = arith.addf %303, %304 : vector<1x128xf32>
    %306 = arith.mulf %218, %266 : vector<1x128xf32>
    %307 = arith.addf %305, %306 : vector<1x128xf32>
    %308 = arith.mulf %208, %254 : vector<1x128xf32>
    %309 = arith.mulf %213, %262 : vector<1x128xf32>
    %310 = arith.addf %308, %309 : vector<1x128xf32>
    %311 = arith.mulf %218, %268 : vector<1x128xf32>
    %312 = arith.addf %310, %311 : vector<1x128xf32>
    %313 = arith.mulf %208, %256 : vector<1x128xf32>
    %314 = arith.mulf %213, %264 : vector<1x128xf32>
    %315 = arith.addf %313, %314 : vector<1x128xf32>
    %316 = arith.mulf %218, %272 : vector<1x128xf32>
    %317 = arith.addf %315, %316 : vector<1x128xf32>
    %318 = arith.mulf %277, %277 : vector<1x128xf32>
    %319 = arith.mulf %292, %292 : vector<1x128xf32>
    %320 = arith.addf %318, %319 : vector<1x128xf32>
    %321 = arith.mulf %307, %307 : vector<1x128xf32>
    %322 = arith.addf %320, %321 : vector<1x128xf32>
    %323 = arith.mulf %277, %282 : vector<1x128xf32>
    %324 = arith.mulf %292, %297 : vector<1x128xf32>
    %325 = arith.addf %323, %324 : vector<1x128xf32>
    %326 = arith.mulf %307, %312 : vector<1x128xf32>
    %327 = arith.addf %325, %326 : vector<1x128xf32>
    %328 = arith.mulf %277, %287 : vector<1x128xf32>
    %329 = arith.mulf %292, %302 : vector<1x128xf32>
    %330 = arith.addf %328, %329 : vector<1x128xf32>
    %331 = arith.mulf %307, %317 : vector<1x128xf32>
    %332 = arith.addf %330, %331 : vector<1x128xf32>
    %333 = arith.mulf %282, %282 : vector<1x128xf32>
    %334 = arith.mulf %297, %297 : vector<1x128xf32>
    %335 = arith.addf %333, %334 : vector<1x128xf32>
    %336 = arith.mulf %312, %312 : vector<1x128xf32>
    %337 = arith.addf %335, %336 : vector<1x128xf32>
    %338 = arith.mulf %282, %287 : vector<1x128xf32>
    %339 = arith.mulf %297, %302 : vector<1x128xf32>
    %340 = arith.addf %338, %339 : vector<1x128xf32>
    %341 = arith.mulf %312, %317 : vector<1x128xf32>
    %342 = arith.addf %340, %341 : vector<1x128xf32>
    %343 = arith.mulf %287, %287 : vector<1x128xf32>
    %344 = arith.mulf %302, %302 : vector<1x128xf32>
    %345 = arith.addf %343, %344 : vector<1x128xf32>
    %346 = arith.mulf %317, %317 : vector<1x128xf32>
    %347 = arith.addf %345, %346 : vector<1x128xf32>
    %cst_51 = arith.constant 5.000000e-01 : f32
    %348 = vector.broadcast %cst_51 : f32 to vector<1x128xf32>
    %349 = arith.mulf %348, %322 : vector<1x128xf32>
    %cst_52 = arith.constant 1.500000e+00 : f32
    %350 = vector.broadcast %cst_52 : f32 to vector<1x128xf32>
    %351 = arith.subf %350, %349 : vector<1x128xf32>
    %cst_53 = arith.constant -5.000000e-01 : f32
    %352 = vector.broadcast %cst_53 : f32 to vector<1x128xf32>
    %353 = arith.mulf %352, %327 : vector<1x128xf32>
    %cst_54 = arith.constant -5.000000e-01 : f32
    %354 = vector.broadcast %cst_54 : f32 to vector<1x128xf32>
    %355 = arith.mulf %354, %332 : vector<1x128xf32>
    %cst_55 = arith.constant -5.000000e-01 : f32
    %356 = vector.broadcast %cst_55 : f32 to vector<1x128xf32>
    %357 = arith.mulf %356, %327 : vector<1x128xf32>
    %cst_56 = arith.constant 5.000000e-01 : f32
    %358 = vector.broadcast %cst_56 : f32 to vector<1x128xf32>
    %359 = arith.mulf %358, %337 : vector<1x128xf32>
    %cst_57 = arith.constant 1.500000e+00 : f32
    %360 = vector.broadcast %cst_57 : f32 to vector<1x128xf32>
    %361 = arith.subf %360, %359 : vector<1x128xf32>
    %cst_58 = arith.constant -5.000000e-01 : f32
    %362 = vector.broadcast %cst_58 : f32 to vector<1x128xf32>
    %363 = arith.mulf %362, %342 : vector<1x128xf32>
    %cst_59 = arith.constant -5.000000e-01 : f32
    %364 = vector.broadcast %cst_59 : f32 to vector<1x128xf32>
    %365 = arith.mulf %364, %332 : vector<1x128xf32>
    %cst_60 = arith.constant -5.000000e-01 : f32
    %366 = vector.broadcast %cst_60 : f32 to vector<1x128xf32>
    %367 = arith.mulf %366, %342 : vector<1x128xf32>
    %cst_61 = arith.constant 5.000000e-01 : f32
    %368 = vector.broadcast %cst_61 : f32 to vector<1x128xf32>
    %369 = arith.mulf %368, %347 : vector<1x128xf32>
    %cst_62 = arith.constant 1.500000e+00 : f32
    %370 = vector.broadcast %cst_62 : f32 to vector<1x128xf32>
    %371 = arith.subf %370, %369 : vector<1x128xf32>
    %372 = arith.mulf %277, %351 : vector<1x128xf32>
    %373 = arith.mulf %282, %357 : vector<1x128xf32>
    %374 = arith.addf %372, %373 : vector<1x128xf32>
    %375 = arith.mulf %287, %365 : vector<1x128xf32>
    %376 = arith.addf %374, %375 : vector<1x128xf32>
    %377 = arith.mulf %277, %353 : vector<1x128xf32>
    %378 = arith.mulf %282, %361 : vector<1x128xf32>
    %379 = arith.addf %377, %378 : vector<1x128xf32>
    %380 = arith.mulf %287, %367 : vector<1x128xf32>
    %381 = arith.addf %379, %380 : vector<1x128xf32>
    %382 = arith.mulf %277, %355 : vector<1x128xf32>
    %383 = arith.mulf %282, %363 : vector<1x128xf32>
    %384 = arith.addf %382, %383 : vector<1x128xf32>
    %385 = arith.mulf %287, %371 : vector<1x128xf32>
    %386 = arith.addf %384, %385 : vector<1x128xf32>
    %387 = arith.mulf %292, %351 : vector<1x128xf32>
    %388 = arith.mulf %297, %357 : vector<1x128xf32>
    %389 = arith.addf %387, %388 : vector<1x128xf32>
    %390 = arith.mulf %302, %365 : vector<1x128xf32>
    %391 = arith.addf %389, %390 : vector<1x128xf32>
    %392 = arith.mulf %292, %353 : vector<1x128xf32>
    %393 = arith.mulf %297, %361 : vector<1x128xf32>
    %394 = arith.addf %392, %393 : vector<1x128xf32>
    %395 = arith.mulf %302, %367 : vector<1x128xf32>
    %396 = arith.addf %394, %395 : vector<1x128xf32>
    %397 = arith.mulf %292, %355 : vector<1x128xf32>
    %398 = arith.mulf %297, %363 : vector<1x128xf32>
    %399 = arith.addf %397, %398 : vector<1x128xf32>
    %400 = arith.mulf %302, %371 : vector<1x128xf32>
    %401 = arith.addf %399, %400 : vector<1x128xf32>
    %402 = arith.mulf %307, %351 : vector<1x128xf32>
    %403 = arith.mulf %312, %357 : vector<1x128xf32>
    %404 = arith.addf %402, %403 : vector<1x128xf32>
    %405 = arith.mulf %317, %365 : vector<1x128xf32>
    %406 = arith.addf %404, %405 : vector<1x128xf32>
    %407 = arith.mulf %307, %353 : vector<1x128xf32>
    %408 = arith.mulf %312, %361 : vector<1x128xf32>
    %409 = arith.addf %407, %408 : vector<1x128xf32>
    %410 = arith.mulf %317, %367 : vector<1x128xf32>
    %411 = arith.addf %409, %410 : vector<1x128xf32>
    %412 = arith.mulf %307, %355 : vector<1x128xf32>
    %413 = arith.mulf %312, %363 : vector<1x128xf32>
    %414 = arith.addf %412, %413 : vector<1x128xf32>
    %415 = arith.mulf %317, %371 : vector<1x128xf32>
    %416 = arith.addf %414, %415 : vector<1x128xf32>
    %417 = arith.mulf %376, %376 : vector<1x128xf32>
    %418 = arith.mulf %391, %391 : vector<1x128xf32>
    %419 = arith.addf %417, %418 : vector<1x128xf32>
    %420 = arith.mulf %406, %406 : vector<1x128xf32>
    %421 = arith.addf %419, %420 : vector<1x128xf32>
    %422 = arith.mulf %376, %381 : vector<1x128xf32>
    %423 = arith.mulf %391, %396 : vector<1x128xf32>
    %424 = arith.addf %422, %423 : vector<1x128xf32>
    %425 = arith.mulf %406, %411 : vector<1x128xf32>
    %426 = arith.addf %424, %425 : vector<1x128xf32>
    %427 = arith.mulf %376, %386 : vector<1x128xf32>
    %428 = arith.mulf %391, %401 : vector<1x128xf32>
    %429 = arith.addf %427, %428 : vector<1x128xf32>
    %430 = arith.mulf %406, %416 : vector<1x128xf32>
    %431 = arith.addf %429, %430 : vector<1x128xf32>
    %432 = arith.mulf %381, %381 : vector<1x128xf32>
    %433 = arith.mulf %396, %396 : vector<1x128xf32>
    %434 = arith.addf %432, %433 : vector<1x128xf32>
    %435 = arith.mulf %411, %411 : vector<1x128xf32>
    %436 = arith.addf %434, %435 : vector<1x128xf32>
    %437 = arith.mulf %381, %386 : vector<1x128xf32>
    %438 = arith.mulf %396, %401 : vector<1x128xf32>
    %439 = arith.addf %437, %438 : vector<1x128xf32>
    %440 = arith.mulf %411, %416 : vector<1x128xf32>
    %441 = arith.addf %439, %440 : vector<1x128xf32>
    %442 = arith.mulf %386, %386 : vector<1x128xf32>
    %443 = arith.mulf %401, %401 : vector<1x128xf32>
    %444 = arith.addf %442, %443 : vector<1x128xf32>
    %445 = arith.mulf %416, %416 : vector<1x128xf32>
    %446 = arith.addf %444, %445 : vector<1x128xf32>
    %cst_63 = arith.constant 5.000000e-01 : f32
    %447 = vector.broadcast %cst_63 : f32 to vector<1x128xf32>
    %448 = arith.mulf %447, %421 : vector<1x128xf32>
    %cst_64 = arith.constant 1.500000e+00 : f32
    %449 = vector.broadcast %cst_64 : f32 to vector<1x128xf32>
    %450 = arith.subf %449, %448 : vector<1x128xf32>
    %cst_65 = arith.constant -5.000000e-01 : f32
    %451 = vector.broadcast %cst_65 : f32 to vector<1x128xf32>
    %452 = arith.mulf %451, %426 : vector<1x128xf32>
    %cst_66 = arith.constant -5.000000e-01 : f32
    %453 = vector.broadcast %cst_66 : f32 to vector<1x128xf32>
    %454 = arith.mulf %453, %431 : vector<1x128xf32>
    %cst_67 = arith.constant -5.000000e-01 : f32
    %455 = vector.broadcast %cst_67 : f32 to vector<1x128xf32>
    %456 = arith.mulf %455, %426 : vector<1x128xf32>
    %cst_68 = arith.constant 5.000000e-01 : f32
    %457 = vector.broadcast %cst_68 : f32 to vector<1x128xf32>
    %458 = arith.mulf %457, %436 : vector<1x128xf32>
    %cst_69 = arith.constant 1.500000e+00 : f32
    %459 = vector.broadcast %cst_69 : f32 to vector<1x128xf32>
    %460 = arith.subf %459, %458 : vector<1x128xf32>
    %cst_70 = arith.constant -5.000000e-01 : f32
    %461 = vector.broadcast %cst_70 : f32 to vector<1x128xf32>
    %462 = arith.mulf %461, %441 : vector<1x128xf32>
    %cst_71 = arith.constant -5.000000e-01 : f32
    %463 = vector.broadcast %cst_71 : f32 to vector<1x128xf32>
    %464 = arith.mulf %463, %431 : vector<1x128xf32>
    %cst_72 = arith.constant -5.000000e-01 : f32
    %465 = vector.broadcast %cst_72 : f32 to vector<1x128xf32>
    %466 = arith.mulf %465, %441 : vector<1x128xf32>
    %cst_73 = arith.constant 5.000000e-01 : f32
    %467 = vector.broadcast %cst_73 : f32 to vector<1x128xf32>
    %468 = arith.mulf %467, %446 : vector<1x128xf32>
    %cst_74 = arith.constant 1.500000e+00 : f32
    %469 = vector.broadcast %cst_74 : f32 to vector<1x128xf32>
    %470 = arith.subf %469, %468 : vector<1x128xf32>
    %471 = arith.mulf %376, %450 : vector<1x128xf32>
    %472 = arith.mulf %381, %456 : vector<1x128xf32>
    %473 = arith.addf %471, %472 : vector<1x128xf32>
    %474 = arith.mulf %386, %464 : vector<1x128xf32>
    %475 = arith.addf %473, %474 : vector<1x128xf32>
    %476 = arith.mulf %376, %452 : vector<1x128xf32>
    %477 = arith.mulf %381, %460 : vector<1x128xf32>
    %478 = arith.addf %476, %477 : vector<1x128xf32>
    %479 = arith.mulf %386, %466 : vector<1x128xf32>
    %480 = arith.addf %478, %479 : vector<1x128xf32>
    %481 = arith.mulf %376, %454 : vector<1x128xf32>
    %482 = arith.mulf %381, %462 : vector<1x128xf32>
    %483 = arith.addf %481, %482 : vector<1x128xf32>
    %484 = arith.mulf %386, %470 : vector<1x128xf32>
    %485 = arith.addf %483, %484 : vector<1x128xf32>
    %486 = arith.mulf %391, %450 : vector<1x128xf32>
    %487 = arith.mulf %396, %456 : vector<1x128xf32>
    %488 = arith.addf %486, %487 : vector<1x128xf32>
    %489 = arith.mulf %401, %464 : vector<1x128xf32>
    %490 = arith.addf %488, %489 : vector<1x128xf32>
    %491 = arith.mulf %391, %452 : vector<1x128xf32>
    %492 = arith.mulf %396, %460 : vector<1x128xf32>
    %493 = arith.addf %491, %492 : vector<1x128xf32>
    %494 = arith.mulf %401, %466 : vector<1x128xf32>
    %495 = arith.addf %493, %494 : vector<1x128xf32>
    %496 = arith.mulf %391, %454 : vector<1x128xf32>
    %497 = arith.mulf %396, %462 : vector<1x128xf32>
    %498 = arith.addf %496, %497 : vector<1x128xf32>
    %499 = arith.mulf %401, %470 : vector<1x128xf32>
    %500 = arith.addf %498, %499 : vector<1x128xf32>
    %501 = arith.mulf %406, %450 : vector<1x128xf32>
    %502 = arith.mulf %411, %456 : vector<1x128xf32>
    %503 = arith.addf %501, %502 : vector<1x128xf32>
    %504 = arith.mulf %416, %464 : vector<1x128xf32>
    %505 = arith.addf %503, %504 : vector<1x128xf32>
    %506 = arith.mulf %406, %452 : vector<1x128xf32>
    %507 = arith.mulf %411, %460 : vector<1x128xf32>
    %508 = arith.addf %506, %507 : vector<1x128xf32>
    %509 = arith.mulf %416, %466 : vector<1x128xf32>
    %510 = arith.addf %508, %509 : vector<1x128xf32>
    %511 = arith.mulf %406, %454 : vector<1x128xf32>
    %512 = arith.mulf %411, %462 : vector<1x128xf32>
    %513 = arith.addf %511, %512 : vector<1x128xf32>
    %514 = arith.mulf %416, %470 : vector<1x128xf32>
    %515 = arith.addf %513, %514 : vector<1x128xf32>
    %516 = arith.mulf %475, %475 : vector<1x128xf32>
    %517 = arith.mulf %490, %490 : vector<1x128xf32>
    %518 = arith.addf %516, %517 : vector<1x128xf32>
    %519 = arith.mulf %505, %505 : vector<1x128xf32>
    %520 = arith.addf %518, %519 : vector<1x128xf32>
    %521 = arith.mulf %475, %480 : vector<1x128xf32>
    %522 = arith.mulf %490, %495 : vector<1x128xf32>
    %523 = arith.addf %521, %522 : vector<1x128xf32>
    %524 = arith.mulf %505, %510 : vector<1x128xf32>
    %525 = arith.addf %523, %524 : vector<1x128xf32>
    %526 = arith.mulf %475, %485 : vector<1x128xf32>
    %527 = arith.mulf %490, %500 : vector<1x128xf32>
    %528 = arith.addf %526, %527 : vector<1x128xf32>
    %529 = arith.mulf %505, %515 : vector<1x128xf32>
    %530 = arith.addf %528, %529 : vector<1x128xf32>
    %531 = arith.mulf %480, %480 : vector<1x128xf32>
    %532 = arith.mulf %495, %495 : vector<1x128xf32>
    %533 = arith.addf %531, %532 : vector<1x128xf32>
    %534 = arith.mulf %510, %510 : vector<1x128xf32>
    %535 = arith.addf %533, %534 : vector<1x128xf32>
    %536 = arith.mulf %480, %485 : vector<1x128xf32>
    %537 = arith.mulf %495, %500 : vector<1x128xf32>
    %538 = arith.addf %536, %537 : vector<1x128xf32>
    %539 = arith.mulf %510, %515 : vector<1x128xf32>
    %540 = arith.addf %538, %539 : vector<1x128xf32>
    %541 = arith.mulf %485, %485 : vector<1x128xf32>
    %542 = arith.mulf %500, %500 : vector<1x128xf32>
    %543 = arith.addf %541, %542 : vector<1x128xf32>
    %544 = arith.mulf %515, %515 : vector<1x128xf32>
    %545 = arith.addf %543, %544 : vector<1x128xf32>
    %cst_75 = arith.constant 5.000000e-01 : f32
    %546 = vector.broadcast %cst_75 : f32 to vector<1x128xf32>
    %547 = arith.mulf %546, %520 : vector<1x128xf32>
    %cst_76 = arith.constant 1.500000e+00 : f32
    %548 = vector.broadcast %cst_76 : f32 to vector<1x128xf32>
    %549 = arith.subf %548, %547 : vector<1x128xf32>
    %cst_77 = arith.constant -5.000000e-01 : f32
    %550 = vector.broadcast %cst_77 : f32 to vector<1x128xf32>
    %551 = arith.mulf %550, %525 : vector<1x128xf32>
    %cst_78 = arith.constant -5.000000e-01 : f32
    %552 = vector.broadcast %cst_78 : f32 to vector<1x128xf32>
    %553 = arith.mulf %552, %530 : vector<1x128xf32>
    %cst_79 = arith.constant -5.000000e-01 : f32
    %554 = vector.broadcast %cst_79 : f32 to vector<1x128xf32>
    %555 = arith.mulf %554, %525 : vector<1x128xf32>
    %cst_80 = arith.constant 5.000000e-01 : f32
    %556 = vector.broadcast %cst_80 : f32 to vector<1x128xf32>
    %557 = arith.mulf %556, %535 : vector<1x128xf32>
    %cst_81 = arith.constant 1.500000e+00 : f32
    %558 = vector.broadcast %cst_81 : f32 to vector<1x128xf32>
    %559 = arith.subf %558, %557 : vector<1x128xf32>
    %cst_82 = arith.constant -5.000000e-01 : f32
    %560 = vector.broadcast %cst_82 : f32 to vector<1x128xf32>
    %561 = arith.mulf %560, %540 : vector<1x128xf32>
    %cst_83 = arith.constant -5.000000e-01 : f32
    %562 = vector.broadcast %cst_83 : f32 to vector<1x128xf32>
    %563 = arith.mulf %562, %530 : vector<1x128xf32>
    %cst_84 = arith.constant -5.000000e-01 : f32
    %564 = vector.broadcast %cst_84 : f32 to vector<1x128xf32>
    %565 = arith.mulf %564, %540 : vector<1x128xf32>
    %cst_85 = arith.constant 5.000000e-01 : f32
    %566 = vector.broadcast %cst_85 : f32 to vector<1x128xf32>
    %567 = arith.mulf %566, %545 : vector<1x128xf32>
    %cst_86 = arith.constant 1.500000e+00 : f32
    %568 = vector.broadcast %cst_86 : f32 to vector<1x128xf32>
    %569 = arith.subf %568, %567 : vector<1x128xf32>
    %570 = arith.mulf %475, %549 : vector<1x128xf32>
    %571 = arith.mulf %480, %555 : vector<1x128xf32>
    %572 = arith.addf %570, %571 : vector<1x128xf32>
    %573 = arith.mulf %485, %563 : vector<1x128xf32>
    %574 = arith.addf %572, %573 : vector<1x128xf32>
    %575 = arith.mulf %475, %551 : vector<1x128xf32>
    %576 = arith.mulf %480, %559 : vector<1x128xf32>
    %577 = arith.addf %575, %576 : vector<1x128xf32>
    %578 = arith.mulf %485, %565 : vector<1x128xf32>
    %579 = arith.addf %577, %578 : vector<1x128xf32>
    %580 = arith.mulf %475, %553 : vector<1x128xf32>
    %581 = arith.mulf %480, %561 : vector<1x128xf32>
    %582 = arith.addf %580, %581 : vector<1x128xf32>
    %583 = arith.mulf %485, %569 : vector<1x128xf32>
    %584 = arith.addf %582, %583 : vector<1x128xf32>
    %585 = arith.mulf %490, %549 : vector<1x128xf32>
    %586 = arith.mulf %495, %555 : vector<1x128xf32>
    %587 = arith.addf %585, %586 : vector<1x128xf32>
    %588 = arith.mulf %500, %563 : vector<1x128xf32>
    %589 = arith.addf %587, %588 : vector<1x128xf32>
    %590 = arith.mulf %490, %551 : vector<1x128xf32>
    %591 = arith.mulf %495, %559 : vector<1x128xf32>
    %592 = arith.addf %590, %591 : vector<1x128xf32>
    %593 = arith.mulf %500, %565 : vector<1x128xf32>
    %594 = arith.addf %592, %593 : vector<1x128xf32>
    %595 = arith.mulf %490, %553 : vector<1x128xf32>
    %596 = arith.mulf %495, %561 : vector<1x128xf32>
    %597 = arith.addf %595, %596 : vector<1x128xf32>
    %598 = arith.mulf %500, %569 : vector<1x128xf32>
    %599 = arith.addf %597, %598 : vector<1x128xf32>
    %600 = arith.mulf %505, %549 : vector<1x128xf32>
    %601 = arith.mulf %510, %555 : vector<1x128xf32>
    %602 = arith.addf %600, %601 : vector<1x128xf32>
    %603 = arith.mulf %515, %563 : vector<1x128xf32>
    %604 = arith.addf %602, %603 : vector<1x128xf32>
    %605 = arith.mulf %505, %551 : vector<1x128xf32>
    %606 = arith.mulf %510, %559 : vector<1x128xf32>
    %607 = arith.addf %605, %606 : vector<1x128xf32>
    %608 = arith.mulf %515, %565 : vector<1x128xf32>
    %609 = arith.addf %607, %608 : vector<1x128xf32>
    %610 = arith.mulf %505, %553 : vector<1x128xf32>
    %611 = arith.mulf %510, %561 : vector<1x128xf32>
    %612 = arith.addf %610, %611 : vector<1x128xf32>
    %613 = arith.mulf %515, %569 : vector<1x128xf32>
    %614 = arith.addf %612, %613 : vector<1x128xf32>
    %615 = arith.mulf %574, %574 : vector<1x128xf32>
    %616 = arith.mulf %589, %589 : vector<1x128xf32>
    %617 = arith.addf %615, %616 : vector<1x128xf32>
    %618 = arith.mulf %604, %604 : vector<1x128xf32>
    %619 = arith.addf %617, %618 : vector<1x128xf32>
    %620 = arith.mulf %574, %579 : vector<1x128xf32>
    %621 = arith.mulf %589, %594 : vector<1x128xf32>
    %622 = arith.addf %620, %621 : vector<1x128xf32>
    %623 = arith.mulf %604, %609 : vector<1x128xf32>
    %624 = arith.addf %622, %623 : vector<1x128xf32>
    %625 = arith.mulf %574, %584 : vector<1x128xf32>
    %626 = arith.mulf %589, %599 : vector<1x128xf32>
    %627 = arith.addf %625, %626 : vector<1x128xf32>
    %628 = arith.mulf %604, %614 : vector<1x128xf32>
    %629 = arith.addf %627, %628 : vector<1x128xf32>
    %630 = arith.mulf %579, %579 : vector<1x128xf32>
    %631 = arith.mulf %594, %594 : vector<1x128xf32>
    %632 = arith.addf %630, %631 : vector<1x128xf32>
    %633 = arith.mulf %609, %609 : vector<1x128xf32>
    %634 = arith.addf %632, %633 : vector<1x128xf32>
    %635 = arith.mulf %579, %584 : vector<1x128xf32>
    %636 = arith.mulf %594, %599 : vector<1x128xf32>
    %637 = arith.addf %635, %636 : vector<1x128xf32>
    %638 = arith.mulf %609, %614 : vector<1x128xf32>
    %639 = arith.addf %637, %638 : vector<1x128xf32>
    %640 = arith.mulf %584, %584 : vector<1x128xf32>
    %641 = arith.mulf %599, %599 : vector<1x128xf32>
    %642 = arith.addf %640, %641 : vector<1x128xf32>
    %643 = arith.mulf %614, %614 : vector<1x128xf32>
    %644 = arith.addf %642, %643 : vector<1x128xf32>
    %cst_87 = arith.constant 5.000000e-01 : f32
    %645 = vector.broadcast %cst_87 : f32 to vector<1x128xf32>
    %646 = arith.mulf %645, %619 : vector<1x128xf32>
    %cst_88 = arith.constant 1.500000e+00 : f32
    %647 = vector.broadcast %cst_88 : f32 to vector<1x128xf32>
    %648 = arith.subf %647, %646 : vector<1x128xf32>
    %cst_89 = arith.constant -5.000000e-01 : f32
    %649 = vector.broadcast %cst_89 : f32 to vector<1x128xf32>
    %650 = arith.mulf %649, %624 : vector<1x128xf32>
    %cst_90 = arith.constant -5.000000e-01 : f32
    %651 = vector.broadcast %cst_90 : f32 to vector<1x128xf32>
    %652 = arith.mulf %651, %629 : vector<1x128xf32>
    %cst_91 = arith.constant -5.000000e-01 : f32
    %653 = vector.broadcast %cst_91 : f32 to vector<1x128xf32>
    %654 = arith.mulf %653, %624 : vector<1x128xf32>
    %cst_92 = arith.constant 5.000000e-01 : f32
    %655 = vector.broadcast %cst_92 : f32 to vector<1x128xf32>
    %656 = arith.mulf %655, %634 : vector<1x128xf32>
    %cst_93 = arith.constant 1.500000e+00 : f32
    %657 = vector.broadcast %cst_93 : f32 to vector<1x128xf32>
    %658 = arith.subf %657, %656 : vector<1x128xf32>
    %cst_94 = arith.constant -5.000000e-01 : f32
    %659 = vector.broadcast %cst_94 : f32 to vector<1x128xf32>
    %660 = arith.mulf %659, %639 : vector<1x128xf32>
    %cst_95 = arith.constant -5.000000e-01 : f32
    %661 = vector.broadcast %cst_95 : f32 to vector<1x128xf32>
    %662 = arith.mulf %661, %629 : vector<1x128xf32>
    %cst_96 = arith.constant -5.000000e-01 : f32
    %663 = vector.broadcast %cst_96 : f32 to vector<1x128xf32>
    %664 = arith.mulf %663, %639 : vector<1x128xf32>
    %cst_97 = arith.constant 5.000000e-01 : f32
    %665 = vector.broadcast %cst_97 : f32 to vector<1x128xf32>
    %666 = arith.mulf %665, %644 : vector<1x128xf32>
    %cst_98 = arith.constant 1.500000e+00 : f32
    %667 = vector.broadcast %cst_98 : f32 to vector<1x128xf32>
    %668 = arith.subf %667, %666 : vector<1x128xf32>
    %669 = arith.mulf %574, %648 : vector<1x128xf32>
    %670 = arith.mulf %579, %654 : vector<1x128xf32>
    %671 = arith.addf %669, %670 : vector<1x128xf32>
    %672 = arith.mulf %584, %662 : vector<1x128xf32>
    %673 = arith.addf %671, %672 : vector<1x128xf32>
    %674 = arith.mulf %574, %650 : vector<1x128xf32>
    %675 = arith.mulf %579, %658 : vector<1x128xf32>
    %676 = arith.addf %674, %675 : vector<1x128xf32>
    %677 = arith.mulf %584, %664 : vector<1x128xf32>
    %678 = arith.addf %676, %677 : vector<1x128xf32>
    %679 = arith.mulf %574, %652 : vector<1x128xf32>
    %680 = arith.mulf %579, %660 : vector<1x128xf32>
    %681 = arith.addf %679, %680 : vector<1x128xf32>
    %682 = arith.mulf %584, %668 : vector<1x128xf32>
    %683 = arith.addf %681, %682 : vector<1x128xf32>
    %684 = arith.mulf %589, %648 : vector<1x128xf32>
    %685 = arith.mulf %594, %654 : vector<1x128xf32>
    %686 = arith.addf %684, %685 : vector<1x128xf32>
    %687 = arith.mulf %599, %662 : vector<1x128xf32>
    %688 = arith.addf %686, %687 : vector<1x128xf32>
    %689 = arith.mulf %589, %650 : vector<1x128xf32>
    %690 = arith.mulf %594, %658 : vector<1x128xf32>
    %691 = arith.addf %689, %690 : vector<1x128xf32>
    %692 = arith.mulf %599, %664 : vector<1x128xf32>
    %693 = arith.addf %691, %692 : vector<1x128xf32>
    %694 = arith.mulf %589, %652 : vector<1x128xf32>
    %695 = arith.mulf %594, %660 : vector<1x128xf32>
    %696 = arith.addf %694, %695 : vector<1x128xf32>
    %697 = arith.mulf %599, %668 : vector<1x128xf32>
    %698 = arith.addf %696, %697 : vector<1x128xf32>
    %699 = arith.mulf %604, %648 : vector<1x128xf32>
    %700 = arith.mulf %609, %654 : vector<1x128xf32>
    %701 = arith.addf %699, %700 : vector<1x128xf32>
    %702 = arith.mulf %614, %662 : vector<1x128xf32>
    %703 = arith.addf %701, %702 : vector<1x128xf32>
    %704 = arith.mulf %604, %650 : vector<1x128xf32>
    %705 = arith.mulf %609, %658 : vector<1x128xf32>
    %706 = arith.addf %704, %705 : vector<1x128xf32>
    %707 = arith.mulf %614, %664 : vector<1x128xf32>
    %708 = arith.addf %706, %707 : vector<1x128xf32>
    %709 = arith.mulf %604, %652 : vector<1x128xf32>
    %710 = arith.mulf %609, %660 : vector<1x128xf32>
    %711 = arith.addf %709, %710 : vector<1x128xf32>
    %712 = arith.mulf %614, %668 : vector<1x128xf32>
    %713 = arith.addf %711, %712 : vector<1x128xf32>
    %714 = arith.mulf %673, %673 : vector<1x128xf32>
    %715 = arith.mulf %688, %688 : vector<1x128xf32>
    %716 = arith.addf %714, %715 : vector<1x128xf32>
    %717 = arith.mulf %703, %703 : vector<1x128xf32>
    %718 = arith.addf %716, %717 : vector<1x128xf32>
    %719 = arith.mulf %673, %678 : vector<1x128xf32>
    %720 = arith.mulf %688, %693 : vector<1x128xf32>
    %721 = arith.addf %719, %720 : vector<1x128xf32>
    %722 = arith.mulf %703, %708 : vector<1x128xf32>
    %723 = arith.addf %721, %722 : vector<1x128xf32>
    %724 = arith.mulf %673, %683 : vector<1x128xf32>
    %725 = arith.mulf %688, %698 : vector<1x128xf32>
    %726 = arith.addf %724, %725 : vector<1x128xf32>
    %727 = arith.mulf %703, %713 : vector<1x128xf32>
    %728 = arith.addf %726, %727 : vector<1x128xf32>
    %729 = arith.mulf %678, %678 : vector<1x128xf32>
    %730 = arith.mulf %693, %693 : vector<1x128xf32>
    %731 = arith.addf %729, %730 : vector<1x128xf32>
    %732 = arith.mulf %708, %708 : vector<1x128xf32>
    %733 = arith.addf %731, %732 : vector<1x128xf32>
    %734 = arith.mulf %678, %683 : vector<1x128xf32>
    %735 = arith.mulf %693, %698 : vector<1x128xf32>
    %736 = arith.addf %734, %735 : vector<1x128xf32>
    %737 = arith.mulf %708, %713 : vector<1x128xf32>
    %738 = arith.addf %736, %737 : vector<1x128xf32>
    %739 = arith.mulf %683, %683 : vector<1x128xf32>
    %740 = arith.mulf %698, %698 : vector<1x128xf32>
    %741 = arith.addf %739, %740 : vector<1x128xf32>
    %742 = arith.mulf %713, %713 : vector<1x128xf32>
    %743 = arith.addf %741, %742 : vector<1x128xf32>
    %cst_99 = arith.constant 5.000000e-01 : f32
    %744 = vector.broadcast %cst_99 : f32 to vector<1x128xf32>
    %745 = arith.mulf %744, %718 : vector<1x128xf32>
    %cst_100 = arith.constant 1.500000e+00 : f32
    %746 = vector.broadcast %cst_100 : f32 to vector<1x128xf32>
    %747 = arith.subf %746, %745 : vector<1x128xf32>
    %cst_101 = arith.constant -5.000000e-01 : f32
    %748 = vector.broadcast %cst_101 : f32 to vector<1x128xf32>
    %749 = arith.mulf %748, %723 : vector<1x128xf32>
    %cst_102 = arith.constant -5.000000e-01 : f32
    %750 = vector.broadcast %cst_102 : f32 to vector<1x128xf32>
    %751 = arith.mulf %750, %728 : vector<1x128xf32>
    %cst_103 = arith.constant -5.000000e-01 : f32
    %752 = vector.broadcast %cst_103 : f32 to vector<1x128xf32>
    %753 = arith.mulf %752, %723 : vector<1x128xf32>
    %cst_104 = arith.constant 5.000000e-01 : f32
    %754 = vector.broadcast %cst_104 : f32 to vector<1x128xf32>
    %755 = arith.mulf %754, %733 : vector<1x128xf32>
    %cst_105 = arith.constant 1.500000e+00 : f32
    %756 = vector.broadcast %cst_105 : f32 to vector<1x128xf32>
    %757 = arith.subf %756, %755 : vector<1x128xf32>
    %cst_106 = arith.constant -5.000000e-01 : f32
    %758 = vector.broadcast %cst_106 : f32 to vector<1x128xf32>
    %759 = arith.mulf %758, %738 : vector<1x128xf32>
    %cst_107 = arith.constant -5.000000e-01 : f32
    %760 = vector.broadcast %cst_107 : f32 to vector<1x128xf32>
    %761 = arith.mulf %760, %728 : vector<1x128xf32>
    %cst_108 = arith.constant -5.000000e-01 : f32
    %762 = vector.broadcast %cst_108 : f32 to vector<1x128xf32>
    %763 = arith.mulf %762, %738 : vector<1x128xf32>
    %cst_109 = arith.constant 5.000000e-01 : f32
    %764 = vector.broadcast %cst_109 : f32 to vector<1x128xf32>
    %765 = arith.mulf %764, %743 : vector<1x128xf32>
    %cst_110 = arith.constant 1.500000e+00 : f32
    %766 = vector.broadcast %cst_110 : f32 to vector<1x128xf32>
    %767 = arith.subf %766, %765 : vector<1x128xf32>
    %768 = arith.mulf %673, %747 : vector<1x128xf32>
    %769 = arith.mulf %678, %753 : vector<1x128xf32>
    %770 = arith.addf %768, %769 : vector<1x128xf32>
    %771 = arith.mulf %683, %761 : vector<1x128xf32>
    %772 = arith.addf %770, %771 : vector<1x128xf32>
    %773 = arith.mulf %673, %749 : vector<1x128xf32>
    %774 = arith.mulf %678, %757 : vector<1x128xf32>
    %775 = arith.addf %773, %774 : vector<1x128xf32>
    %776 = arith.mulf %683, %763 : vector<1x128xf32>
    %777 = arith.addf %775, %776 : vector<1x128xf32>
    %778 = arith.mulf %673, %751 : vector<1x128xf32>
    %779 = arith.mulf %678, %759 : vector<1x128xf32>
    %780 = arith.addf %778, %779 : vector<1x128xf32>
    %781 = arith.mulf %683, %767 : vector<1x128xf32>
    %782 = arith.addf %780, %781 : vector<1x128xf32>
    %783 = arith.mulf %688, %747 : vector<1x128xf32>
    %784 = arith.mulf %693, %753 : vector<1x128xf32>
    %785 = arith.addf %783, %784 : vector<1x128xf32>
    %786 = arith.mulf %698, %761 : vector<1x128xf32>
    %787 = arith.addf %785, %786 : vector<1x128xf32>
    %788 = arith.mulf %688, %749 : vector<1x128xf32>
    %789 = arith.mulf %693, %757 : vector<1x128xf32>
    %790 = arith.addf %788, %789 : vector<1x128xf32>
    %791 = arith.mulf %698, %763 : vector<1x128xf32>
    %792 = arith.addf %790, %791 : vector<1x128xf32>
    %793 = arith.mulf %688, %751 : vector<1x128xf32>
    %794 = arith.mulf %693, %759 : vector<1x128xf32>
    %795 = arith.addf %793, %794 : vector<1x128xf32>
    %796 = arith.mulf %698, %767 : vector<1x128xf32>
    %797 = arith.addf %795, %796 : vector<1x128xf32>
    %798 = arith.mulf %703, %747 : vector<1x128xf32>
    %799 = arith.mulf %708, %753 : vector<1x128xf32>
    %800 = arith.addf %798, %799 : vector<1x128xf32>
    %801 = arith.mulf %713, %761 : vector<1x128xf32>
    %802 = arith.addf %800, %801 : vector<1x128xf32>
    %803 = arith.mulf %703, %749 : vector<1x128xf32>
    %804 = arith.mulf %708, %757 : vector<1x128xf32>
    %805 = arith.addf %803, %804 : vector<1x128xf32>
    %806 = arith.mulf %713, %763 : vector<1x128xf32>
    %807 = arith.addf %805, %806 : vector<1x128xf32>
    %808 = arith.mulf %703, %751 : vector<1x128xf32>
    %809 = arith.mulf %708, %759 : vector<1x128xf32>
    %810 = arith.addf %808, %809 : vector<1x128xf32>
    %811 = arith.mulf %713, %767 : vector<1x128xf32>
    %812 = arith.addf %810, %811 : vector<1x128xf32>
    %813 = arith.mulf %772, %772 : vector<1x128xf32>
    %814 = arith.mulf %787, %787 : vector<1x128xf32>
    %815 = arith.addf %813, %814 : vector<1x128xf32>
    %816 = arith.mulf %802, %802 : vector<1x128xf32>
    %817 = arith.addf %815, %816 : vector<1x128xf32>
    %818 = arith.mulf %772, %777 : vector<1x128xf32>
    %819 = arith.mulf %787, %792 : vector<1x128xf32>
    %820 = arith.addf %818, %819 : vector<1x128xf32>
    %821 = arith.mulf %802, %807 : vector<1x128xf32>
    %822 = arith.addf %820, %821 : vector<1x128xf32>
    %823 = arith.mulf %772, %782 : vector<1x128xf32>
    %824 = arith.mulf %787, %797 : vector<1x128xf32>
    %825 = arith.addf %823, %824 : vector<1x128xf32>
    %826 = arith.mulf %802, %812 : vector<1x128xf32>
    %827 = arith.addf %825, %826 : vector<1x128xf32>
    %828 = arith.mulf %777, %777 : vector<1x128xf32>
    %829 = arith.mulf %792, %792 : vector<1x128xf32>
    %830 = arith.addf %828, %829 : vector<1x128xf32>
    %831 = arith.mulf %807, %807 : vector<1x128xf32>
    %832 = arith.addf %830, %831 : vector<1x128xf32>
    %833 = arith.mulf %777, %782 : vector<1x128xf32>
    %834 = arith.mulf %792, %797 : vector<1x128xf32>
    %835 = arith.addf %833, %834 : vector<1x128xf32>
    %836 = arith.mulf %807, %812 : vector<1x128xf32>
    %837 = arith.addf %835, %836 : vector<1x128xf32>
    %838 = arith.mulf %782, %782 : vector<1x128xf32>
    %839 = arith.mulf %797, %797 : vector<1x128xf32>
    %840 = arith.addf %838, %839 : vector<1x128xf32>
    %841 = arith.mulf %812, %812 : vector<1x128xf32>
    %842 = arith.addf %840, %841 : vector<1x128xf32>
    %cst_111 = arith.constant 5.000000e-01 : f32
    %843 = vector.broadcast %cst_111 : f32 to vector<1x128xf32>
    %844 = arith.mulf %843, %817 : vector<1x128xf32>
    %cst_112 = arith.constant 1.500000e+00 : f32
    %845 = vector.broadcast %cst_112 : f32 to vector<1x128xf32>
    %846 = arith.subf %845, %844 : vector<1x128xf32>
    %cst_113 = arith.constant -5.000000e-01 : f32
    %847 = vector.broadcast %cst_113 : f32 to vector<1x128xf32>
    %848 = arith.mulf %847, %822 : vector<1x128xf32>
    %cst_114 = arith.constant -5.000000e-01 : f32
    %849 = vector.broadcast %cst_114 : f32 to vector<1x128xf32>
    %850 = arith.mulf %849, %827 : vector<1x128xf32>
    %cst_115 = arith.constant -5.000000e-01 : f32
    %851 = vector.broadcast %cst_115 : f32 to vector<1x128xf32>
    %852 = arith.mulf %851, %822 : vector<1x128xf32>
    %cst_116 = arith.constant 5.000000e-01 : f32
    %853 = vector.broadcast %cst_116 : f32 to vector<1x128xf32>
    %854 = arith.mulf %853, %832 : vector<1x128xf32>
    %cst_117 = arith.constant 1.500000e+00 : f32
    %855 = vector.broadcast %cst_117 : f32 to vector<1x128xf32>
    %856 = arith.subf %855, %854 : vector<1x128xf32>
    %cst_118 = arith.constant -5.000000e-01 : f32
    %857 = vector.broadcast %cst_118 : f32 to vector<1x128xf32>
    %858 = arith.mulf %857, %837 : vector<1x128xf32>
    %cst_119 = arith.constant -5.000000e-01 : f32
    %859 = vector.broadcast %cst_119 : f32 to vector<1x128xf32>
    %860 = arith.mulf %859, %827 : vector<1x128xf32>
    %cst_120 = arith.constant -5.000000e-01 : f32
    %861 = vector.broadcast %cst_120 : f32 to vector<1x128xf32>
    %862 = arith.mulf %861, %837 : vector<1x128xf32>
    %cst_121 = arith.constant 5.000000e-01 : f32
    %863 = vector.broadcast %cst_121 : f32 to vector<1x128xf32>
    %864 = arith.mulf %863, %842 : vector<1x128xf32>
    %cst_122 = arith.constant 1.500000e+00 : f32
    %865 = vector.broadcast %cst_122 : f32 to vector<1x128xf32>
    %866 = arith.subf %865, %864 : vector<1x128xf32>
    %867 = arith.mulf %772, %846 : vector<1x128xf32>
    %868 = arith.mulf %777, %852 : vector<1x128xf32>
    %869 = arith.addf %867, %868 : vector<1x128xf32>
    %870 = arith.mulf %782, %860 : vector<1x128xf32>
    %871 = arith.addf %869, %870 : vector<1x128xf32>
    %872 = arith.mulf %772, %848 : vector<1x128xf32>
    %873 = arith.mulf %777, %856 : vector<1x128xf32>
    %874 = arith.addf %872, %873 : vector<1x128xf32>
    %875 = arith.mulf %782, %862 : vector<1x128xf32>
    %876 = arith.addf %874, %875 : vector<1x128xf32>
    %877 = arith.mulf %772, %850 : vector<1x128xf32>
    %878 = arith.mulf %777, %858 : vector<1x128xf32>
    %879 = arith.addf %877, %878 : vector<1x128xf32>
    %880 = arith.mulf %782, %866 : vector<1x128xf32>
    %881 = arith.addf %879, %880 : vector<1x128xf32>
    %882 = arith.mulf %787, %846 : vector<1x128xf32>
    %883 = arith.mulf %792, %852 : vector<1x128xf32>
    %884 = arith.addf %882, %883 : vector<1x128xf32>
    %885 = arith.mulf %797, %860 : vector<1x128xf32>
    %886 = arith.addf %884, %885 : vector<1x128xf32>
    %887 = arith.mulf %787, %848 : vector<1x128xf32>
    %888 = arith.mulf %792, %856 : vector<1x128xf32>
    %889 = arith.addf %887, %888 : vector<1x128xf32>
    %890 = arith.mulf %797, %862 : vector<1x128xf32>
    %891 = arith.addf %889, %890 : vector<1x128xf32>
    %892 = arith.mulf %787, %850 : vector<1x128xf32>
    %893 = arith.mulf %792, %858 : vector<1x128xf32>
    %894 = arith.addf %892, %893 : vector<1x128xf32>
    %895 = arith.mulf %797, %866 : vector<1x128xf32>
    %896 = arith.addf %894, %895 : vector<1x128xf32>
    %897 = arith.mulf %802, %846 : vector<1x128xf32>
    %898 = arith.mulf %807, %852 : vector<1x128xf32>
    %899 = arith.addf %897, %898 : vector<1x128xf32>
    %900 = arith.mulf %812, %860 : vector<1x128xf32>
    %901 = arith.addf %899, %900 : vector<1x128xf32>
    %902 = arith.mulf %802, %848 : vector<1x128xf32>
    %903 = arith.mulf %807, %856 : vector<1x128xf32>
    %904 = arith.addf %902, %903 : vector<1x128xf32>
    %905 = arith.mulf %812, %862 : vector<1x128xf32>
    %906 = arith.addf %904, %905 : vector<1x128xf32>
    %907 = arith.mulf %802, %850 : vector<1x128xf32>
    %908 = arith.mulf %807, %858 : vector<1x128xf32>
    %909 = arith.addf %907, %908 : vector<1x128xf32>
    %910 = arith.mulf %812, %866 : vector<1x128xf32>
    %911 = arith.addf %909, %910 : vector<1x128xf32>
    %912 = arith.mulf %871, %871 : vector<1x128xf32>
    %913 = arith.mulf %886, %886 : vector<1x128xf32>
    %914 = arith.addf %912, %913 : vector<1x128xf32>
    %915 = arith.mulf %901, %901 : vector<1x128xf32>
    %916 = arith.addf %914, %915 : vector<1x128xf32>
    %917 = arith.mulf %871, %876 : vector<1x128xf32>
    %918 = arith.mulf %886, %891 : vector<1x128xf32>
    %919 = arith.addf %917, %918 : vector<1x128xf32>
    %920 = arith.mulf %901, %906 : vector<1x128xf32>
    %921 = arith.addf %919, %920 : vector<1x128xf32>
    %922 = arith.mulf %871, %881 : vector<1x128xf32>
    %923 = arith.mulf %886, %896 : vector<1x128xf32>
    %924 = arith.addf %922, %923 : vector<1x128xf32>
    %925 = arith.mulf %901, %911 : vector<1x128xf32>
    %926 = arith.addf %924, %925 : vector<1x128xf32>
    %927 = arith.mulf %876, %876 : vector<1x128xf32>
    %928 = arith.mulf %891, %891 : vector<1x128xf32>
    %929 = arith.addf %927, %928 : vector<1x128xf32>
    %930 = arith.mulf %906, %906 : vector<1x128xf32>
    %931 = arith.addf %929, %930 : vector<1x128xf32>
    %932 = arith.mulf %876, %881 : vector<1x128xf32>
    %933 = arith.mulf %891, %896 : vector<1x128xf32>
    %934 = arith.addf %932, %933 : vector<1x128xf32>
    %935 = arith.mulf %906, %911 : vector<1x128xf32>
    %936 = arith.addf %934, %935 : vector<1x128xf32>
    %937 = arith.mulf %881, %881 : vector<1x128xf32>
    %938 = arith.mulf %896, %896 : vector<1x128xf32>
    %939 = arith.addf %937, %938 : vector<1x128xf32>
    %940 = arith.mulf %911, %911 : vector<1x128xf32>
    %941 = arith.addf %939, %940 : vector<1x128xf32>
    %cst_123 = arith.constant 5.000000e-01 : f32
    %942 = vector.broadcast %cst_123 : f32 to vector<1x128xf32>
    %943 = arith.mulf %942, %916 : vector<1x128xf32>
    %cst_124 = arith.constant 1.500000e+00 : f32
    %944 = vector.broadcast %cst_124 : f32 to vector<1x128xf32>
    %945 = arith.subf %944, %943 : vector<1x128xf32>
    %cst_125 = arith.constant -5.000000e-01 : f32
    %946 = vector.broadcast %cst_125 : f32 to vector<1x128xf32>
    %947 = arith.mulf %946, %921 : vector<1x128xf32>
    %cst_126 = arith.constant -5.000000e-01 : f32
    %948 = vector.broadcast %cst_126 : f32 to vector<1x128xf32>
    %949 = arith.mulf %948, %926 : vector<1x128xf32>
    %cst_127 = arith.constant -5.000000e-01 : f32
    %950 = vector.broadcast %cst_127 : f32 to vector<1x128xf32>
    %951 = arith.mulf %950, %921 : vector<1x128xf32>
    %cst_128 = arith.constant 5.000000e-01 : f32
    %952 = vector.broadcast %cst_128 : f32 to vector<1x128xf32>
    %953 = arith.mulf %952, %931 : vector<1x128xf32>
    %cst_129 = arith.constant 1.500000e+00 : f32
    %954 = vector.broadcast %cst_129 : f32 to vector<1x128xf32>
    %955 = arith.subf %954, %953 : vector<1x128xf32>
    %cst_130 = arith.constant -5.000000e-01 : f32
    %956 = vector.broadcast %cst_130 : f32 to vector<1x128xf32>
    %957 = arith.mulf %956, %936 : vector<1x128xf32>
    %cst_131 = arith.constant -5.000000e-01 : f32
    %958 = vector.broadcast %cst_131 : f32 to vector<1x128xf32>
    %959 = arith.mulf %958, %926 : vector<1x128xf32>
    %cst_132 = arith.constant -5.000000e-01 : f32
    %960 = vector.broadcast %cst_132 : f32 to vector<1x128xf32>
    %961 = arith.mulf %960, %936 : vector<1x128xf32>
    %cst_133 = arith.constant 5.000000e-01 : f32
    %962 = vector.broadcast %cst_133 : f32 to vector<1x128xf32>
    %963 = arith.mulf %962, %941 : vector<1x128xf32>
    %cst_134 = arith.constant 1.500000e+00 : f32
    %964 = vector.broadcast %cst_134 : f32 to vector<1x128xf32>
    %965 = arith.subf %964, %963 : vector<1x128xf32>
    %966 = arith.mulf %871, %945 : vector<1x128xf32>
    %967 = arith.mulf %876, %951 : vector<1x128xf32>
    %968 = arith.addf %966, %967 : vector<1x128xf32>
    %969 = arith.mulf %881, %959 : vector<1x128xf32>
    %970 = arith.addf %968, %969 : vector<1x128xf32>
    %971 = arith.mulf %871, %947 : vector<1x128xf32>
    %972 = arith.mulf %876, %955 : vector<1x128xf32>
    %973 = arith.addf %971, %972 : vector<1x128xf32>
    %974 = arith.mulf %881, %961 : vector<1x128xf32>
    %975 = arith.addf %973, %974 : vector<1x128xf32>
    %976 = arith.mulf %871, %949 : vector<1x128xf32>
    %977 = arith.mulf %876, %957 : vector<1x128xf32>
    %978 = arith.addf %976, %977 : vector<1x128xf32>
    %979 = arith.mulf %881, %965 : vector<1x128xf32>
    %980 = arith.addf %978, %979 : vector<1x128xf32>
    %981 = arith.mulf %886, %945 : vector<1x128xf32>
    %982 = arith.mulf %891, %951 : vector<1x128xf32>
    %983 = arith.addf %981, %982 : vector<1x128xf32>
    %984 = arith.mulf %896, %959 : vector<1x128xf32>
    %985 = arith.addf %983, %984 : vector<1x128xf32>
    %986 = arith.mulf %886, %947 : vector<1x128xf32>
    %987 = arith.mulf %891, %955 : vector<1x128xf32>
    %988 = arith.addf %986, %987 : vector<1x128xf32>
    %989 = arith.mulf %896, %961 : vector<1x128xf32>
    %990 = arith.addf %988, %989 : vector<1x128xf32>
    %991 = arith.mulf %886, %949 : vector<1x128xf32>
    %992 = arith.mulf %891, %957 : vector<1x128xf32>
    %993 = arith.addf %991, %992 : vector<1x128xf32>
    %994 = arith.mulf %896, %965 : vector<1x128xf32>
    %995 = arith.addf %993, %994 : vector<1x128xf32>
    %996 = arith.mulf %901, %945 : vector<1x128xf32>
    %997 = arith.mulf %906, %951 : vector<1x128xf32>
    %998 = arith.addf %996, %997 : vector<1x128xf32>
    %999 = arith.mulf %911, %959 : vector<1x128xf32>
    %1000 = arith.addf %998, %999 : vector<1x128xf32>
    %1001 = arith.mulf %901, %947 : vector<1x128xf32>
    %1002 = arith.mulf %906, %955 : vector<1x128xf32>
    %1003 = arith.addf %1001, %1002 : vector<1x128xf32>
    %1004 = arith.mulf %911, %961 : vector<1x128xf32>
    %1005 = arith.addf %1003, %1004 : vector<1x128xf32>
    %1006 = arith.mulf %901, %949 : vector<1x128xf32>
    %1007 = arith.mulf %906, %957 : vector<1x128xf32>
    %1008 = arith.addf %1006, %1007 : vector<1x128xf32>
    %1009 = arith.mulf %911, %965 : vector<1x128xf32>
    %1010 = arith.addf %1008, %1009 : vector<1x128xf32>
    %1011 = arith.mulf %970, %970 : vector<1x128xf32>
    %1012 = arith.mulf %985, %985 : vector<1x128xf32>
    %1013 = arith.addf %1011, %1012 : vector<1x128xf32>
    %1014 = arith.mulf %1000, %1000 : vector<1x128xf32>
    %1015 = arith.addf %1013, %1014 : vector<1x128xf32>
    %1016 = arith.mulf %970, %975 : vector<1x128xf32>
    %1017 = arith.mulf %985, %990 : vector<1x128xf32>
    %1018 = arith.addf %1016, %1017 : vector<1x128xf32>
    %1019 = arith.mulf %1000, %1005 : vector<1x128xf32>
    %1020 = arith.addf %1018, %1019 : vector<1x128xf32>
    %1021 = arith.mulf %970, %980 : vector<1x128xf32>
    %1022 = arith.mulf %985, %995 : vector<1x128xf32>
    %1023 = arith.addf %1021, %1022 : vector<1x128xf32>
    %1024 = arith.mulf %1000, %1010 : vector<1x128xf32>
    %1025 = arith.addf %1023, %1024 : vector<1x128xf32>
    %1026 = arith.mulf %975, %975 : vector<1x128xf32>
    %1027 = arith.mulf %990, %990 : vector<1x128xf32>
    %1028 = arith.addf %1026, %1027 : vector<1x128xf32>
    %1029 = arith.mulf %1005, %1005 : vector<1x128xf32>
    %1030 = arith.addf %1028, %1029 : vector<1x128xf32>
    %1031 = arith.mulf %975, %980 : vector<1x128xf32>
    %1032 = arith.mulf %990, %995 : vector<1x128xf32>
    %1033 = arith.addf %1031, %1032 : vector<1x128xf32>
    %1034 = arith.mulf %1005, %1010 : vector<1x128xf32>
    %1035 = arith.addf %1033, %1034 : vector<1x128xf32>
    %1036 = arith.mulf %980, %980 : vector<1x128xf32>
    %1037 = arith.mulf %995, %995 : vector<1x128xf32>
    %1038 = arith.addf %1036, %1037 : vector<1x128xf32>
    %1039 = arith.mulf %1010, %1010 : vector<1x128xf32>
    %1040 = arith.addf %1038, %1039 : vector<1x128xf32>
    %cst_135 = arith.constant 5.000000e-01 : f32
    %1041 = vector.broadcast %cst_135 : f32 to vector<1x128xf32>
    %1042 = arith.mulf %1041, %1015 : vector<1x128xf32>
    %cst_136 = arith.constant 1.500000e+00 : f32
    %1043 = vector.broadcast %cst_136 : f32 to vector<1x128xf32>
    %1044 = arith.subf %1043, %1042 : vector<1x128xf32>
    %cst_137 = arith.constant -5.000000e-01 : f32
    %1045 = vector.broadcast %cst_137 : f32 to vector<1x128xf32>
    %1046 = arith.mulf %1045, %1020 : vector<1x128xf32>
    %cst_138 = arith.constant -5.000000e-01 : f32
    %1047 = vector.broadcast %cst_138 : f32 to vector<1x128xf32>
    %1048 = arith.mulf %1047, %1025 : vector<1x128xf32>
    %cst_139 = arith.constant -5.000000e-01 : f32
    %1049 = vector.broadcast %cst_139 : f32 to vector<1x128xf32>
    %1050 = arith.mulf %1049, %1020 : vector<1x128xf32>
    %cst_140 = arith.constant 5.000000e-01 : f32
    %1051 = vector.broadcast %cst_140 : f32 to vector<1x128xf32>
    %1052 = arith.mulf %1051, %1030 : vector<1x128xf32>
    %cst_141 = arith.constant 1.500000e+00 : f32
    %1053 = vector.broadcast %cst_141 : f32 to vector<1x128xf32>
    %1054 = arith.subf %1053, %1052 : vector<1x128xf32>
    %cst_142 = arith.constant -5.000000e-01 : f32
    %1055 = vector.broadcast %cst_142 : f32 to vector<1x128xf32>
    %1056 = arith.mulf %1055, %1035 : vector<1x128xf32>
    %cst_143 = arith.constant -5.000000e-01 : f32
    %1057 = vector.broadcast %cst_143 : f32 to vector<1x128xf32>
    %1058 = arith.mulf %1057, %1025 : vector<1x128xf32>
    %cst_144 = arith.constant -5.000000e-01 : f32
    %1059 = vector.broadcast %cst_144 : f32 to vector<1x128xf32>
    %1060 = arith.mulf %1059, %1035 : vector<1x128xf32>
    %cst_145 = arith.constant 5.000000e-01 : f32
    %1061 = vector.broadcast %cst_145 : f32 to vector<1x128xf32>
    %1062 = arith.mulf %1061, %1040 : vector<1x128xf32>
    %cst_146 = arith.constant 1.500000e+00 : f32
    %1063 = vector.broadcast %cst_146 : f32 to vector<1x128xf32>
    %1064 = arith.subf %1063, %1062 : vector<1x128xf32>
    %1065 = arith.mulf %970, %1044 : vector<1x128xf32>
    %1066 = arith.mulf %975, %1050 : vector<1x128xf32>
    %1067 = arith.addf %1065, %1066 : vector<1x128xf32>
    %1068 = arith.mulf %980, %1058 : vector<1x128xf32>
    %1069 = arith.addf %1067, %1068 : vector<1x128xf32>
    %1070 = arith.mulf %970, %1046 : vector<1x128xf32>
    %1071 = arith.mulf %975, %1054 : vector<1x128xf32>
    %1072 = arith.addf %1070, %1071 : vector<1x128xf32>
    %1073 = arith.mulf %980, %1060 : vector<1x128xf32>
    %1074 = arith.addf %1072, %1073 : vector<1x128xf32>
    %1075 = arith.mulf %970, %1048 : vector<1x128xf32>
    %1076 = arith.mulf %975, %1056 : vector<1x128xf32>
    %1077 = arith.addf %1075, %1076 : vector<1x128xf32>
    %1078 = arith.mulf %980, %1064 : vector<1x128xf32>
    %1079 = arith.addf %1077, %1078 : vector<1x128xf32>
    %1080 = arith.mulf %985, %1044 : vector<1x128xf32>
    %1081 = arith.mulf %990, %1050 : vector<1x128xf32>
    %1082 = arith.addf %1080, %1081 : vector<1x128xf32>
    %1083 = arith.mulf %995, %1058 : vector<1x128xf32>
    %1084 = arith.addf %1082, %1083 : vector<1x128xf32>
    %1085 = arith.mulf %985, %1046 : vector<1x128xf32>
    %1086 = arith.mulf %990, %1054 : vector<1x128xf32>
    %1087 = arith.addf %1085, %1086 : vector<1x128xf32>
    %1088 = arith.mulf %995, %1060 : vector<1x128xf32>
    %1089 = arith.addf %1087, %1088 : vector<1x128xf32>
    %1090 = arith.mulf %985, %1048 : vector<1x128xf32>
    %1091 = arith.mulf %990, %1056 : vector<1x128xf32>
    %1092 = arith.addf %1090, %1091 : vector<1x128xf32>
    %1093 = arith.mulf %995, %1064 : vector<1x128xf32>
    %1094 = arith.addf %1092, %1093 : vector<1x128xf32>
    %1095 = arith.mulf %1000, %1044 : vector<1x128xf32>
    %1096 = arith.mulf %1005, %1050 : vector<1x128xf32>
    %1097 = arith.addf %1095, %1096 : vector<1x128xf32>
    %1098 = arith.mulf %1010, %1058 : vector<1x128xf32>
    %1099 = arith.addf %1097, %1098 : vector<1x128xf32>
    %1100 = arith.mulf %1000, %1046 : vector<1x128xf32>
    %1101 = arith.mulf %1005, %1054 : vector<1x128xf32>
    %1102 = arith.addf %1100, %1101 : vector<1x128xf32>
    %1103 = arith.mulf %1010, %1060 : vector<1x128xf32>
    %1104 = arith.addf %1102, %1103 : vector<1x128xf32>
    %1105 = arith.mulf %1000, %1048 : vector<1x128xf32>
    %1106 = arith.mulf %1005, %1056 : vector<1x128xf32>
    %1107 = arith.addf %1105, %1106 : vector<1x128xf32>
    %1108 = arith.mulf %1010, %1064 : vector<1x128xf32>
    %1109 = arith.addf %1107, %1108 : vector<1x128xf32>
    %1110 = arith.mulf %1069, %1069 : vector<1x128xf32>
    %1111 = arith.mulf %1084, %1084 : vector<1x128xf32>
    %1112 = arith.addf %1110, %1111 : vector<1x128xf32>
    %1113 = arith.mulf %1099, %1099 : vector<1x128xf32>
    %1114 = arith.addf %1112, %1113 : vector<1x128xf32>
    %1115 = arith.mulf %1069, %1074 : vector<1x128xf32>
    %1116 = arith.mulf %1084, %1089 : vector<1x128xf32>
    %1117 = arith.addf %1115, %1116 : vector<1x128xf32>
    %1118 = arith.mulf %1099, %1104 : vector<1x128xf32>
    %1119 = arith.addf %1117, %1118 : vector<1x128xf32>
    %1120 = arith.mulf %1069, %1079 : vector<1x128xf32>
    %1121 = arith.mulf %1084, %1094 : vector<1x128xf32>
    %1122 = arith.addf %1120, %1121 : vector<1x128xf32>
    %1123 = arith.mulf %1099, %1109 : vector<1x128xf32>
    %1124 = arith.addf %1122, %1123 : vector<1x128xf32>
    %1125 = arith.mulf %1074, %1074 : vector<1x128xf32>
    %1126 = arith.mulf %1089, %1089 : vector<1x128xf32>
    %1127 = arith.addf %1125, %1126 : vector<1x128xf32>
    %1128 = arith.mulf %1104, %1104 : vector<1x128xf32>
    %1129 = arith.addf %1127, %1128 : vector<1x128xf32>
    %1130 = arith.mulf %1074, %1079 : vector<1x128xf32>
    %1131 = arith.mulf %1089, %1094 : vector<1x128xf32>
    %1132 = arith.addf %1130, %1131 : vector<1x128xf32>
    %1133 = arith.mulf %1104, %1109 : vector<1x128xf32>
    %1134 = arith.addf %1132, %1133 : vector<1x128xf32>
    %1135 = arith.mulf %1079, %1079 : vector<1x128xf32>
    %1136 = arith.mulf %1094, %1094 : vector<1x128xf32>
    %1137 = arith.addf %1135, %1136 : vector<1x128xf32>
    %1138 = arith.mulf %1109, %1109 : vector<1x128xf32>
    %1139 = arith.addf %1137, %1138 : vector<1x128xf32>
    %cst_147 = arith.constant 5.000000e-01 : f32
    %1140 = vector.broadcast %cst_147 : f32 to vector<1x128xf32>
    %1141 = arith.mulf %1140, %1114 : vector<1x128xf32>
    %cst_148 = arith.constant 1.500000e+00 : f32
    %1142 = vector.broadcast %cst_148 : f32 to vector<1x128xf32>
    %1143 = arith.subf %1142, %1141 : vector<1x128xf32>
    %cst_149 = arith.constant -5.000000e-01 : f32
    %1144 = vector.broadcast %cst_149 : f32 to vector<1x128xf32>
    %1145 = arith.mulf %1144, %1119 : vector<1x128xf32>
    %cst_150 = arith.constant -5.000000e-01 : f32
    %1146 = vector.broadcast %cst_150 : f32 to vector<1x128xf32>
    %1147 = arith.mulf %1146, %1124 : vector<1x128xf32>
    %cst_151 = arith.constant -5.000000e-01 : f32
    %1148 = vector.broadcast %cst_151 : f32 to vector<1x128xf32>
    %1149 = arith.mulf %1148, %1119 : vector<1x128xf32>
    %cst_152 = arith.constant 5.000000e-01 : f32
    %1150 = vector.broadcast %cst_152 : f32 to vector<1x128xf32>
    %1151 = arith.mulf %1150, %1129 : vector<1x128xf32>
    %cst_153 = arith.constant 1.500000e+00 : f32
    %1152 = vector.broadcast %cst_153 : f32 to vector<1x128xf32>
    %1153 = arith.subf %1152, %1151 : vector<1x128xf32>
    %cst_154 = arith.constant -5.000000e-01 : f32
    %1154 = vector.broadcast %cst_154 : f32 to vector<1x128xf32>
    %1155 = arith.mulf %1154, %1134 : vector<1x128xf32>
    %cst_155 = arith.constant -5.000000e-01 : f32
    %1156 = vector.broadcast %cst_155 : f32 to vector<1x128xf32>
    %1157 = arith.mulf %1156, %1124 : vector<1x128xf32>
    %cst_156 = arith.constant -5.000000e-01 : f32
    %1158 = vector.broadcast %cst_156 : f32 to vector<1x128xf32>
    %1159 = arith.mulf %1158, %1134 : vector<1x128xf32>
    %cst_157 = arith.constant 5.000000e-01 : f32
    %1160 = vector.broadcast %cst_157 : f32 to vector<1x128xf32>
    %1161 = arith.mulf %1160, %1139 : vector<1x128xf32>
    %cst_158 = arith.constant 1.500000e+00 : f32
    %1162 = vector.broadcast %cst_158 : f32 to vector<1x128xf32>
    %1163 = arith.subf %1162, %1161 : vector<1x128xf32>
    %1164 = arith.mulf %1069, %1143 : vector<1x128xf32>
    %1165 = arith.mulf %1074, %1149 : vector<1x128xf32>
    %1166 = arith.addf %1164, %1165 : vector<1x128xf32>
    %1167 = arith.mulf %1079, %1157 : vector<1x128xf32>
    %1168 = arith.addf %1166, %1167 : vector<1x128xf32>
    %1169 = arith.mulf %1069, %1145 : vector<1x128xf32>
    %1170 = arith.mulf %1074, %1153 : vector<1x128xf32>
    %1171 = arith.addf %1169, %1170 : vector<1x128xf32>
    %1172 = arith.mulf %1079, %1159 : vector<1x128xf32>
    %1173 = arith.addf %1171, %1172 : vector<1x128xf32>
    %1174 = arith.mulf %1069, %1147 : vector<1x128xf32>
    %1175 = arith.mulf %1074, %1155 : vector<1x128xf32>
    %1176 = arith.addf %1174, %1175 : vector<1x128xf32>
    %1177 = arith.mulf %1079, %1163 : vector<1x128xf32>
    %1178 = arith.addf %1176, %1177 : vector<1x128xf32>
    %1179 = arith.mulf %1084, %1143 : vector<1x128xf32>
    %1180 = arith.mulf %1089, %1149 : vector<1x128xf32>
    %1181 = arith.addf %1179, %1180 : vector<1x128xf32>
    %1182 = arith.mulf %1094, %1157 : vector<1x128xf32>
    %1183 = arith.addf %1181, %1182 : vector<1x128xf32>
    %1184 = arith.mulf %1084, %1145 : vector<1x128xf32>
    %1185 = arith.mulf %1089, %1153 : vector<1x128xf32>
    %1186 = arith.addf %1184, %1185 : vector<1x128xf32>
    %1187 = arith.mulf %1094, %1159 : vector<1x128xf32>
    %1188 = arith.addf %1186, %1187 : vector<1x128xf32>
    %1189 = arith.mulf %1084, %1147 : vector<1x128xf32>
    %1190 = arith.mulf %1089, %1155 : vector<1x128xf32>
    %1191 = arith.addf %1189, %1190 : vector<1x128xf32>
    %1192 = arith.mulf %1094, %1163 : vector<1x128xf32>
    %1193 = arith.addf %1191, %1192 : vector<1x128xf32>
    %1194 = arith.mulf %1099, %1143 : vector<1x128xf32>
    %1195 = arith.mulf %1104, %1149 : vector<1x128xf32>
    %1196 = arith.addf %1194, %1195 : vector<1x128xf32>
    %1197 = arith.mulf %1109, %1157 : vector<1x128xf32>
    %1198 = arith.addf %1196, %1197 : vector<1x128xf32>
    %1199 = arith.mulf %1099, %1145 : vector<1x128xf32>
    %1200 = arith.mulf %1104, %1153 : vector<1x128xf32>
    %1201 = arith.addf %1199, %1200 : vector<1x128xf32>
    %1202 = arith.mulf %1109, %1159 : vector<1x128xf32>
    %1203 = arith.addf %1201, %1202 : vector<1x128xf32>
    %1204 = arith.mulf %1099, %1147 : vector<1x128xf32>
    %1205 = arith.mulf %1104, %1155 : vector<1x128xf32>
    %1206 = arith.addf %1204, %1205 : vector<1x128xf32>
    %1207 = arith.mulf %1109, %1163 : vector<1x128xf32>
    %1208 = arith.addf %1206, %1207 : vector<1x128xf32>
    %1209 = arith.mulf %1168, %1168 : vector<1x128xf32>
    %1210 = arith.mulf %1183, %1183 : vector<1x128xf32>
    %1211 = arith.addf %1209, %1210 : vector<1x128xf32>
    %1212 = arith.mulf %1198, %1198 : vector<1x128xf32>
    %1213 = arith.addf %1211, %1212 : vector<1x128xf32>
    %1214 = arith.mulf %1168, %1173 : vector<1x128xf32>
    %1215 = arith.mulf %1183, %1188 : vector<1x128xf32>
    %1216 = arith.addf %1214, %1215 : vector<1x128xf32>
    %1217 = arith.mulf %1198, %1203 : vector<1x128xf32>
    %1218 = arith.addf %1216, %1217 : vector<1x128xf32>
    %1219 = arith.mulf %1168, %1178 : vector<1x128xf32>
    %1220 = arith.mulf %1183, %1193 : vector<1x128xf32>
    %1221 = arith.addf %1219, %1220 : vector<1x128xf32>
    %1222 = arith.mulf %1198, %1208 : vector<1x128xf32>
    %1223 = arith.addf %1221, %1222 : vector<1x128xf32>
    %1224 = arith.mulf %1173, %1173 : vector<1x128xf32>
    %1225 = arith.mulf %1188, %1188 : vector<1x128xf32>
    %1226 = arith.addf %1224, %1225 : vector<1x128xf32>
    %1227 = arith.mulf %1203, %1203 : vector<1x128xf32>
    %1228 = arith.addf %1226, %1227 : vector<1x128xf32>
    %1229 = arith.mulf %1173, %1178 : vector<1x128xf32>
    %1230 = arith.mulf %1188, %1193 : vector<1x128xf32>
    %1231 = arith.addf %1229, %1230 : vector<1x128xf32>
    %1232 = arith.mulf %1203, %1208 : vector<1x128xf32>
    %1233 = arith.addf %1231, %1232 : vector<1x128xf32>
    %1234 = arith.mulf %1178, %1178 : vector<1x128xf32>
    %1235 = arith.mulf %1193, %1193 : vector<1x128xf32>
    %1236 = arith.addf %1234, %1235 : vector<1x128xf32>
    %1237 = arith.mulf %1208, %1208 : vector<1x128xf32>
    %1238 = arith.addf %1236, %1237 : vector<1x128xf32>
    %cst_159 = arith.constant 5.000000e-01 : f32
    %1239 = vector.broadcast %cst_159 : f32 to vector<1x128xf32>
    %1240 = arith.mulf %1239, %1213 : vector<1x128xf32>
    %cst_160 = arith.constant 1.500000e+00 : f32
    %1241 = vector.broadcast %cst_160 : f32 to vector<1x128xf32>
    %1242 = arith.subf %1241, %1240 : vector<1x128xf32>
    %cst_161 = arith.constant -5.000000e-01 : f32
    %1243 = vector.broadcast %cst_161 : f32 to vector<1x128xf32>
    %1244 = arith.mulf %1243, %1218 : vector<1x128xf32>
    %cst_162 = arith.constant -5.000000e-01 : f32
    %1245 = vector.broadcast %cst_162 : f32 to vector<1x128xf32>
    %1246 = arith.mulf %1245, %1223 : vector<1x128xf32>
    %cst_163 = arith.constant -5.000000e-01 : f32
    %1247 = vector.broadcast %cst_163 : f32 to vector<1x128xf32>
    %1248 = arith.mulf %1247, %1218 : vector<1x128xf32>
    %cst_164 = arith.constant 5.000000e-01 : f32
    %1249 = vector.broadcast %cst_164 : f32 to vector<1x128xf32>
    %1250 = arith.mulf %1249, %1228 : vector<1x128xf32>
    %cst_165 = arith.constant 1.500000e+00 : f32
    %1251 = vector.broadcast %cst_165 : f32 to vector<1x128xf32>
    %1252 = arith.subf %1251, %1250 : vector<1x128xf32>
    %cst_166 = arith.constant -5.000000e-01 : f32
    %1253 = vector.broadcast %cst_166 : f32 to vector<1x128xf32>
    %1254 = arith.mulf %1253, %1233 : vector<1x128xf32>
    %cst_167 = arith.constant -5.000000e-01 : f32
    %1255 = vector.broadcast %cst_167 : f32 to vector<1x128xf32>
    %1256 = arith.mulf %1255, %1223 : vector<1x128xf32>
    %cst_168 = arith.constant -5.000000e-01 : f32
    %1257 = vector.broadcast %cst_168 : f32 to vector<1x128xf32>
    %1258 = arith.mulf %1257, %1233 : vector<1x128xf32>
    %cst_169 = arith.constant 5.000000e-01 : f32
    %1259 = vector.broadcast %cst_169 : f32 to vector<1x128xf32>
    %1260 = arith.mulf %1259, %1238 : vector<1x128xf32>
    %cst_170 = arith.constant 1.500000e+00 : f32
    %1261 = vector.broadcast %cst_170 : f32 to vector<1x128xf32>
    %1262 = arith.subf %1261, %1260 : vector<1x128xf32>
    %1263 = arith.mulf %1168, %1242 : vector<1x128xf32>
    %1264 = arith.mulf %1173, %1248 : vector<1x128xf32>
    %1265 = arith.addf %1263, %1264 : vector<1x128xf32>
    %1266 = arith.mulf %1178, %1256 : vector<1x128xf32>
    %1267 = arith.addf %1265, %1266 : vector<1x128xf32>
    %1268 = arith.mulf %1168, %1244 : vector<1x128xf32>
    %1269 = arith.mulf %1173, %1252 : vector<1x128xf32>
    %1270 = arith.addf %1268, %1269 : vector<1x128xf32>
    %1271 = arith.mulf %1178, %1258 : vector<1x128xf32>
    %1272 = arith.addf %1270, %1271 : vector<1x128xf32>
    %1273 = arith.mulf %1168, %1246 : vector<1x128xf32>
    %1274 = arith.mulf %1173, %1254 : vector<1x128xf32>
    %1275 = arith.addf %1273, %1274 : vector<1x128xf32>
    %1276 = arith.mulf %1178, %1262 : vector<1x128xf32>
    %1277 = arith.addf %1275, %1276 : vector<1x128xf32>
    %1278 = arith.mulf %1183, %1242 : vector<1x128xf32>
    %1279 = arith.mulf %1188, %1248 : vector<1x128xf32>
    %1280 = arith.addf %1278, %1279 : vector<1x128xf32>
    %1281 = arith.mulf %1193, %1256 : vector<1x128xf32>
    %1282 = arith.addf %1280, %1281 : vector<1x128xf32>
    %1283 = arith.mulf %1183, %1244 : vector<1x128xf32>
    %1284 = arith.mulf %1188, %1252 : vector<1x128xf32>
    %1285 = arith.addf %1283, %1284 : vector<1x128xf32>
    %1286 = arith.mulf %1193, %1258 : vector<1x128xf32>
    %1287 = arith.addf %1285, %1286 : vector<1x128xf32>
    %1288 = arith.mulf %1183, %1246 : vector<1x128xf32>
    %1289 = arith.mulf %1188, %1254 : vector<1x128xf32>
    %1290 = arith.addf %1288, %1289 : vector<1x128xf32>
    %1291 = arith.mulf %1193, %1262 : vector<1x128xf32>
    %1292 = arith.addf %1290, %1291 : vector<1x128xf32>
    %1293 = arith.mulf %1198, %1242 : vector<1x128xf32>
    %1294 = arith.mulf %1203, %1248 : vector<1x128xf32>
    %1295 = arith.addf %1293, %1294 : vector<1x128xf32>
    %1296 = arith.mulf %1208, %1256 : vector<1x128xf32>
    %1297 = arith.addf %1295, %1296 : vector<1x128xf32>
    %1298 = arith.mulf %1198, %1244 : vector<1x128xf32>
    %1299 = arith.mulf %1203, %1252 : vector<1x128xf32>
    %1300 = arith.addf %1298, %1299 : vector<1x128xf32>
    %1301 = arith.mulf %1208, %1258 : vector<1x128xf32>
    %1302 = arith.addf %1300, %1301 : vector<1x128xf32>
    %1303 = arith.mulf %1198, %1246 : vector<1x128xf32>
    %1304 = arith.mulf %1203, %1254 : vector<1x128xf32>
    %1305 = arith.addf %1303, %1304 : vector<1x128xf32>
    %1306 = arith.mulf %1208, %1262 : vector<1x128xf32>
    %1307 = arith.addf %1305, %1306 : vector<1x128xf32>
    %1308 = arith.mulf %1267, %1267 : vector<1x128xf32>
    %1309 = arith.mulf %1282, %1282 : vector<1x128xf32>
    %1310 = arith.addf %1308, %1309 : vector<1x128xf32>
    %1311 = arith.mulf %1297, %1297 : vector<1x128xf32>
    %1312 = arith.addf %1310, %1311 : vector<1x128xf32>
    %1313 = arith.mulf %1267, %1272 : vector<1x128xf32>
    %1314 = arith.mulf %1282, %1287 : vector<1x128xf32>
    %1315 = arith.addf %1313, %1314 : vector<1x128xf32>
    %1316 = arith.mulf %1297, %1302 : vector<1x128xf32>
    %1317 = arith.addf %1315, %1316 : vector<1x128xf32>
    %1318 = arith.mulf %1267, %1277 : vector<1x128xf32>
    %1319 = arith.mulf %1282, %1292 : vector<1x128xf32>
    %1320 = arith.addf %1318, %1319 : vector<1x128xf32>
    %1321 = arith.mulf %1297, %1307 : vector<1x128xf32>
    %1322 = arith.addf %1320, %1321 : vector<1x128xf32>
    %1323 = arith.mulf %1272, %1272 : vector<1x128xf32>
    %1324 = arith.mulf %1287, %1287 : vector<1x128xf32>
    %1325 = arith.addf %1323, %1324 : vector<1x128xf32>
    %1326 = arith.mulf %1302, %1302 : vector<1x128xf32>
    %1327 = arith.addf %1325, %1326 : vector<1x128xf32>
    %1328 = arith.mulf %1272, %1277 : vector<1x128xf32>
    %1329 = arith.mulf %1287, %1292 : vector<1x128xf32>
    %1330 = arith.addf %1328, %1329 : vector<1x128xf32>
    %1331 = arith.mulf %1302, %1307 : vector<1x128xf32>
    %1332 = arith.addf %1330, %1331 : vector<1x128xf32>
    %1333 = arith.mulf %1277, %1277 : vector<1x128xf32>
    %1334 = arith.mulf %1292, %1292 : vector<1x128xf32>
    %1335 = arith.addf %1333, %1334 : vector<1x128xf32>
    %1336 = arith.mulf %1307, %1307 : vector<1x128xf32>
    %1337 = arith.addf %1335, %1336 : vector<1x128xf32>
    %cst_171 = arith.constant 5.000000e-01 : f32
    %1338 = vector.broadcast %cst_171 : f32 to vector<1x128xf32>
    %1339 = arith.mulf %1338, %1312 : vector<1x128xf32>
    %cst_172 = arith.constant 1.500000e+00 : f32
    %1340 = vector.broadcast %cst_172 : f32 to vector<1x128xf32>
    %1341 = arith.subf %1340, %1339 : vector<1x128xf32>
    %cst_173 = arith.constant -5.000000e-01 : f32
    %1342 = vector.broadcast %cst_173 : f32 to vector<1x128xf32>
    %1343 = arith.mulf %1342, %1317 : vector<1x128xf32>
    %cst_174 = arith.constant -5.000000e-01 : f32
    %1344 = vector.broadcast %cst_174 : f32 to vector<1x128xf32>
    %1345 = arith.mulf %1344, %1322 : vector<1x128xf32>
    %cst_175 = arith.constant -5.000000e-01 : f32
    %1346 = vector.broadcast %cst_175 : f32 to vector<1x128xf32>
    %1347 = arith.mulf %1346, %1317 : vector<1x128xf32>
    %cst_176 = arith.constant 5.000000e-01 : f32
    %1348 = vector.broadcast %cst_176 : f32 to vector<1x128xf32>
    %1349 = arith.mulf %1348, %1327 : vector<1x128xf32>
    %cst_177 = arith.constant 1.500000e+00 : f32
    %1350 = vector.broadcast %cst_177 : f32 to vector<1x128xf32>
    %1351 = arith.subf %1350, %1349 : vector<1x128xf32>
    %cst_178 = arith.constant -5.000000e-01 : f32
    %1352 = vector.broadcast %cst_178 : f32 to vector<1x128xf32>
    %1353 = arith.mulf %1352, %1332 : vector<1x128xf32>
    %cst_179 = arith.constant -5.000000e-01 : f32
    %1354 = vector.broadcast %cst_179 : f32 to vector<1x128xf32>
    %1355 = arith.mulf %1354, %1322 : vector<1x128xf32>
    %cst_180 = arith.constant -5.000000e-01 : f32
    %1356 = vector.broadcast %cst_180 : f32 to vector<1x128xf32>
    %1357 = arith.mulf %1356, %1332 : vector<1x128xf32>
    %cst_181 = arith.constant 5.000000e-01 : f32
    %1358 = vector.broadcast %cst_181 : f32 to vector<1x128xf32>
    %1359 = arith.mulf %1358, %1337 : vector<1x128xf32>
    %cst_182 = arith.constant 1.500000e+00 : f32
    %1360 = vector.broadcast %cst_182 : f32 to vector<1x128xf32>
    %1361 = arith.subf %1360, %1359 : vector<1x128xf32>
    %1362 = arith.mulf %1267, %1341 : vector<1x128xf32>
    %1363 = arith.mulf %1272, %1347 : vector<1x128xf32>
    %1364 = arith.addf %1362, %1363 : vector<1x128xf32>
    %1365 = arith.mulf %1277, %1355 : vector<1x128xf32>
    %1366 = arith.addf %1364, %1365 : vector<1x128xf32>
    %1367 = arith.mulf %1267, %1343 : vector<1x128xf32>
    %1368 = arith.mulf %1272, %1351 : vector<1x128xf32>
    %1369 = arith.addf %1367, %1368 : vector<1x128xf32>
    %1370 = arith.mulf %1277, %1357 : vector<1x128xf32>
    %1371 = arith.addf %1369, %1370 : vector<1x128xf32>
    %1372 = arith.mulf %1267, %1345 : vector<1x128xf32>
    %1373 = arith.mulf %1272, %1353 : vector<1x128xf32>
    %1374 = arith.addf %1372, %1373 : vector<1x128xf32>
    %1375 = arith.mulf %1277, %1361 : vector<1x128xf32>
    %1376 = arith.addf %1374, %1375 : vector<1x128xf32>
    %1377 = arith.mulf %1282, %1341 : vector<1x128xf32>
    %1378 = arith.mulf %1287, %1347 : vector<1x128xf32>
    %1379 = arith.addf %1377, %1378 : vector<1x128xf32>
    %1380 = arith.mulf %1292, %1355 : vector<1x128xf32>
    %1381 = arith.addf %1379, %1380 : vector<1x128xf32>
    %1382 = arith.mulf %1282, %1343 : vector<1x128xf32>
    %1383 = arith.mulf %1287, %1351 : vector<1x128xf32>
    %1384 = arith.addf %1382, %1383 : vector<1x128xf32>
    %1385 = arith.mulf %1292, %1357 : vector<1x128xf32>
    %1386 = arith.addf %1384, %1385 : vector<1x128xf32>
    %1387 = arith.mulf %1282, %1345 : vector<1x128xf32>
    %1388 = arith.mulf %1287, %1353 : vector<1x128xf32>
    %1389 = arith.addf %1387, %1388 : vector<1x128xf32>
    %1390 = arith.mulf %1292, %1361 : vector<1x128xf32>
    %1391 = arith.addf %1389, %1390 : vector<1x128xf32>
    %1392 = arith.mulf %1297, %1341 : vector<1x128xf32>
    %1393 = arith.mulf %1302, %1347 : vector<1x128xf32>
    %1394 = arith.addf %1392, %1393 : vector<1x128xf32>
    %1395 = arith.mulf %1307, %1355 : vector<1x128xf32>
    %1396 = arith.addf %1394, %1395 : vector<1x128xf32>
    %1397 = arith.mulf %1297, %1343 : vector<1x128xf32>
    %1398 = arith.mulf %1302, %1351 : vector<1x128xf32>
    %1399 = arith.addf %1397, %1398 : vector<1x128xf32>
    %1400 = arith.mulf %1307, %1357 : vector<1x128xf32>
    %1401 = arith.addf %1399, %1400 : vector<1x128xf32>
    %1402 = arith.mulf %1297, %1345 : vector<1x128xf32>
    %1403 = arith.mulf %1302, %1353 : vector<1x128xf32>
    %1404 = arith.addf %1402, %1403 : vector<1x128xf32>
    %1405 = arith.mulf %1307, %1361 : vector<1x128xf32>
    %1406 = arith.addf %1404, %1405 : vector<1x128xf32>
    %1407 = arith.mulf %1366, %1366 : vector<1x128xf32>
    %1408 = arith.mulf %1381, %1381 : vector<1x128xf32>
    %1409 = arith.addf %1407, %1408 : vector<1x128xf32>
    %1410 = arith.mulf %1396, %1396 : vector<1x128xf32>
    %1411 = arith.addf %1409, %1410 : vector<1x128xf32>
    %1412 = arith.mulf %1366, %1371 : vector<1x128xf32>
    %1413 = arith.mulf %1381, %1386 : vector<1x128xf32>
    %1414 = arith.addf %1412, %1413 : vector<1x128xf32>
    %1415 = arith.mulf %1396, %1401 : vector<1x128xf32>
    %1416 = arith.addf %1414, %1415 : vector<1x128xf32>
    %1417 = arith.mulf %1366, %1376 : vector<1x128xf32>
    %1418 = arith.mulf %1381, %1391 : vector<1x128xf32>
    %1419 = arith.addf %1417, %1418 : vector<1x128xf32>
    %1420 = arith.mulf %1396, %1406 : vector<1x128xf32>
    %1421 = arith.addf %1419, %1420 : vector<1x128xf32>
    %1422 = arith.mulf %1371, %1371 : vector<1x128xf32>
    %1423 = arith.mulf %1386, %1386 : vector<1x128xf32>
    %1424 = arith.addf %1422, %1423 : vector<1x128xf32>
    %1425 = arith.mulf %1401, %1401 : vector<1x128xf32>
    %1426 = arith.addf %1424, %1425 : vector<1x128xf32>
    %1427 = arith.mulf %1371, %1376 : vector<1x128xf32>
    %1428 = arith.mulf %1386, %1391 : vector<1x128xf32>
    %1429 = arith.addf %1427, %1428 : vector<1x128xf32>
    %1430 = arith.mulf %1401, %1406 : vector<1x128xf32>
    %1431 = arith.addf %1429, %1430 : vector<1x128xf32>
    %1432 = arith.mulf %1376, %1376 : vector<1x128xf32>
    %1433 = arith.mulf %1391, %1391 : vector<1x128xf32>
    %1434 = arith.addf %1432, %1433 : vector<1x128xf32>
    %1435 = arith.mulf %1406, %1406 : vector<1x128xf32>
    %1436 = arith.addf %1434, %1435 : vector<1x128xf32>
    %cst_183 = arith.constant 5.000000e-01 : f32
    %1437 = vector.broadcast %cst_183 : f32 to vector<1x128xf32>
    %1438 = arith.mulf %1437, %1411 : vector<1x128xf32>
    %cst_184 = arith.constant 1.500000e+00 : f32
    %1439 = vector.broadcast %cst_184 : f32 to vector<1x128xf32>
    %1440 = arith.subf %1439, %1438 : vector<1x128xf32>
    %cst_185 = arith.constant -5.000000e-01 : f32
    %1441 = vector.broadcast %cst_185 : f32 to vector<1x128xf32>
    %1442 = arith.mulf %1441, %1416 : vector<1x128xf32>
    %cst_186 = arith.constant -5.000000e-01 : f32
    %1443 = vector.broadcast %cst_186 : f32 to vector<1x128xf32>
    %1444 = arith.mulf %1443, %1421 : vector<1x128xf32>
    %cst_187 = arith.constant -5.000000e-01 : f32
    %1445 = vector.broadcast %cst_187 : f32 to vector<1x128xf32>
    %1446 = arith.mulf %1445, %1416 : vector<1x128xf32>
    %cst_188 = arith.constant 5.000000e-01 : f32
    %1447 = vector.broadcast %cst_188 : f32 to vector<1x128xf32>
    %1448 = arith.mulf %1447, %1426 : vector<1x128xf32>
    %cst_189 = arith.constant 1.500000e+00 : f32
    %1449 = vector.broadcast %cst_189 : f32 to vector<1x128xf32>
    %1450 = arith.subf %1449, %1448 : vector<1x128xf32>
    %cst_190 = arith.constant -5.000000e-01 : f32
    %1451 = vector.broadcast %cst_190 : f32 to vector<1x128xf32>
    %1452 = arith.mulf %1451, %1431 : vector<1x128xf32>
    %cst_191 = arith.constant -5.000000e-01 : f32
    %1453 = vector.broadcast %cst_191 : f32 to vector<1x128xf32>
    %1454 = arith.mulf %1453, %1421 : vector<1x128xf32>
    %cst_192 = arith.constant -5.000000e-01 : f32
    %1455 = vector.broadcast %cst_192 : f32 to vector<1x128xf32>
    %1456 = arith.mulf %1455, %1431 : vector<1x128xf32>
    %cst_193 = arith.constant 5.000000e-01 : f32
    %1457 = vector.broadcast %cst_193 : f32 to vector<1x128xf32>
    %1458 = arith.mulf %1457, %1436 : vector<1x128xf32>
    %cst_194 = arith.constant 1.500000e+00 : f32
    %1459 = vector.broadcast %cst_194 : f32 to vector<1x128xf32>
    %1460 = arith.subf %1459, %1458 : vector<1x128xf32>
    %1461 = arith.mulf %1366, %1440 : vector<1x128xf32>
    %1462 = arith.mulf %1371, %1446 : vector<1x128xf32>
    %1463 = arith.addf %1461, %1462 : vector<1x128xf32>
    %1464 = arith.mulf %1376, %1454 : vector<1x128xf32>
    %1465 = arith.addf %1463, %1464 : vector<1x128xf32>
    %1466 = arith.mulf %1366, %1442 : vector<1x128xf32>
    %1467 = arith.mulf %1371, %1450 : vector<1x128xf32>
    %1468 = arith.addf %1466, %1467 : vector<1x128xf32>
    %1469 = arith.mulf %1376, %1456 : vector<1x128xf32>
    %1470 = arith.addf %1468, %1469 : vector<1x128xf32>
    %1471 = arith.mulf %1366, %1444 : vector<1x128xf32>
    %1472 = arith.mulf %1371, %1452 : vector<1x128xf32>
    %1473 = arith.addf %1471, %1472 : vector<1x128xf32>
    %1474 = arith.mulf %1376, %1460 : vector<1x128xf32>
    %1475 = arith.addf %1473, %1474 : vector<1x128xf32>
    %1476 = arith.mulf %1381, %1440 : vector<1x128xf32>
    %1477 = arith.mulf %1386, %1446 : vector<1x128xf32>
    %1478 = arith.addf %1476, %1477 : vector<1x128xf32>
    %1479 = arith.mulf %1391, %1454 : vector<1x128xf32>
    %1480 = arith.addf %1478, %1479 : vector<1x128xf32>
    %1481 = arith.mulf %1381, %1442 : vector<1x128xf32>
    %1482 = arith.mulf %1386, %1450 : vector<1x128xf32>
    %1483 = arith.addf %1481, %1482 : vector<1x128xf32>
    %1484 = arith.mulf %1391, %1456 : vector<1x128xf32>
    %1485 = arith.addf %1483, %1484 : vector<1x128xf32>
    %1486 = arith.mulf %1381, %1444 : vector<1x128xf32>
    %1487 = arith.mulf %1386, %1452 : vector<1x128xf32>
    %1488 = arith.addf %1486, %1487 : vector<1x128xf32>
    %1489 = arith.mulf %1391, %1460 : vector<1x128xf32>
    %1490 = arith.addf %1488, %1489 : vector<1x128xf32>
    %1491 = arith.mulf %1396, %1440 : vector<1x128xf32>
    %1492 = arith.mulf %1401, %1446 : vector<1x128xf32>
    %1493 = arith.addf %1491, %1492 : vector<1x128xf32>
    %1494 = arith.mulf %1406, %1454 : vector<1x128xf32>
    %1495 = arith.addf %1493, %1494 : vector<1x128xf32>
    %1496 = arith.mulf %1396, %1442 : vector<1x128xf32>
    %1497 = arith.mulf %1401, %1450 : vector<1x128xf32>
    %1498 = arith.addf %1496, %1497 : vector<1x128xf32>
    %1499 = arith.mulf %1406, %1456 : vector<1x128xf32>
    %1500 = arith.addf %1498, %1499 : vector<1x128xf32>
    %1501 = arith.mulf %1396, %1444 : vector<1x128xf32>
    %1502 = arith.mulf %1401, %1452 : vector<1x128xf32>
    %1503 = arith.addf %1501, %1502 : vector<1x128xf32>
    %1504 = arith.mulf %1406, %1460 : vector<1x128xf32>
    %1505 = arith.addf %1503, %1504 : vector<1x128xf32>
    %1506 = arith.mulf %1465, %1465 : vector<1x128xf32>
    %1507 = arith.mulf %1480, %1480 : vector<1x128xf32>
    %1508 = arith.addf %1506, %1507 : vector<1x128xf32>
    %1509 = arith.mulf %1495, %1495 : vector<1x128xf32>
    %1510 = arith.addf %1508, %1509 : vector<1x128xf32>
    %1511 = arith.mulf %1465, %1470 : vector<1x128xf32>
    %1512 = arith.mulf %1480, %1485 : vector<1x128xf32>
    %1513 = arith.addf %1511, %1512 : vector<1x128xf32>
    %1514 = arith.mulf %1495, %1500 : vector<1x128xf32>
    %1515 = arith.addf %1513, %1514 : vector<1x128xf32>
    %1516 = arith.mulf %1465, %1475 : vector<1x128xf32>
    %1517 = arith.mulf %1480, %1490 : vector<1x128xf32>
    %1518 = arith.addf %1516, %1517 : vector<1x128xf32>
    %1519 = arith.mulf %1495, %1505 : vector<1x128xf32>
    %1520 = arith.addf %1518, %1519 : vector<1x128xf32>
    %1521 = arith.mulf %1470, %1470 : vector<1x128xf32>
    %1522 = arith.mulf %1485, %1485 : vector<1x128xf32>
    %1523 = arith.addf %1521, %1522 : vector<1x128xf32>
    %1524 = arith.mulf %1500, %1500 : vector<1x128xf32>
    %1525 = arith.addf %1523, %1524 : vector<1x128xf32>
    %1526 = arith.mulf %1470, %1475 : vector<1x128xf32>
    %1527 = arith.mulf %1485, %1490 : vector<1x128xf32>
    %1528 = arith.addf %1526, %1527 : vector<1x128xf32>
    %1529 = arith.mulf %1500, %1505 : vector<1x128xf32>
    %1530 = arith.addf %1528, %1529 : vector<1x128xf32>
    %1531 = arith.mulf %1475, %1475 : vector<1x128xf32>
    %1532 = arith.mulf %1490, %1490 : vector<1x128xf32>
    %1533 = arith.addf %1531, %1532 : vector<1x128xf32>
    %1534 = arith.mulf %1505, %1505 : vector<1x128xf32>
    %1535 = arith.addf %1533, %1534 : vector<1x128xf32>
    %cst_195 = arith.constant 5.000000e-01 : f32
    %1536 = vector.broadcast %cst_195 : f32 to vector<1x128xf32>
    %1537 = arith.mulf %1536, %1510 : vector<1x128xf32>
    %cst_196 = arith.constant 1.500000e+00 : f32
    %1538 = vector.broadcast %cst_196 : f32 to vector<1x128xf32>
    %1539 = arith.subf %1538, %1537 : vector<1x128xf32>
    %cst_197 = arith.constant -5.000000e-01 : f32
    %1540 = vector.broadcast %cst_197 : f32 to vector<1x128xf32>
    %1541 = arith.mulf %1540, %1515 : vector<1x128xf32>
    %cst_198 = arith.constant -5.000000e-01 : f32
    %1542 = vector.broadcast %cst_198 : f32 to vector<1x128xf32>
    %1543 = arith.mulf %1542, %1520 : vector<1x128xf32>
    %cst_199 = arith.constant -5.000000e-01 : f32
    %1544 = vector.broadcast %cst_199 : f32 to vector<1x128xf32>
    %1545 = arith.mulf %1544, %1515 : vector<1x128xf32>
    %cst_200 = arith.constant 5.000000e-01 : f32
    %1546 = vector.broadcast %cst_200 : f32 to vector<1x128xf32>
    %1547 = arith.mulf %1546, %1525 : vector<1x128xf32>
    %cst_201 = arith.constant 1.500000e+00 : f32
    %1548 = vector.broadcast %cst_201 : f32 to vector<1x128xf32>
    %1549 = arith.subf %1548, %1547 : vector<1x128xf32>
    %cst_202 = arith.constant -5.000000e-01 : f32
    %1550 = vector.broadcast %cst_202 : f32 to vector<1x128xf32>
    %1551 = arith.mulf %1550, %1530 : vector<1x128xf32>
    %cst_203 = arith.constant -5.000000e-01 : f32
    %1552 = vector.broadcast %cst_203 : f32 to vector<1x128xf32>
    %1553 = arith.mulf %1552, %1520 : vector<1x128xf32>
    %cst_204 = arith.constant -5.000000e-01 : f32
    %1554 = vector.broadcast %cst_204 : f32 to vector<1x128xf32>
    %1555 = arith.mulf %1554, %1530 : vector<1x128xf32>
    %cst_205 = arith.constant 5.000000e-01 : f32
    %1556 = vector.broadcast %cst_205 : f32 to vector<1x128xf32>
    %1557 = arith.mulf %1556, %1535 : vector<1x128xf32>
    %cst_206 = arith.constant 1.500000e+00 : f32
    %1558 = vector.broadcast %cst_206 : f32 to vector<1x128xf32>
    %1559 = arith.subf %1558, %1557 : vector<1x128xf32>
    %1560 = arith.mulf %1465, %1539 : vector<1x128xf32>
    %1561 = arith.mulf %1470, %1545 : vector<1x128xf32>
    %1562 = arith.addf %1560, %1561 : vector<1x128xf32>
    %1563 = arith.mulf %1475, %1553 : vector<1x128xf32>
    %1564 = arith.addf %1562, %1563 : vector<1x128xf32>
    %1565 = arith.mulf %1465, %1541 : vector<1x128xf32>
    %1566 = arith.mulf %1470, %1549 : vector<1x128xf32>
    %1567 = arith.addf %1565, %1566 : vector<1x128xf32>
    %1568 = arith.mulf %1475, %1555 : vector<1x128xf32>
    %1569 = arith.addf %1567, %1568 : vector<1x128xf32>
    %1570 = arith.mulf %1465, %1543 : vector<1x128xf32>
    %1571 = arith.mulf %1470, %1551 : vector<1x128xf32>
    %1572 = arith.addf %1570, %1571 : vector<1x128xf32>
    %1573 = arith.mulf %1475, %1559 : vector<1x128xf32>
    %1574 = arith.addf %1572, %1573 : vector<1x128xf32>
    %1575 = arith.mulf %1480, %1539 : vector<1x128xf32>
    %1576 = arith.mulf %1485, %1545 : vector<1x128xf32>
    %1577 = arith.addf %1575, %1576 : vector<1x128xf32>
    %1578 = arith.mulf %1490, %1553 : vector<1x128xf32>
    %1579 = arith.addf %1577, %1578 : vector<1x128xf32>
    %1580 = arith.mulf %1480, %1541 : vector<1x128xf32>
    %1581 = arith.mulf %1485, %1549 : vector<1x128xf32>
    %1582 = arith.addf %1580, %1581 : vector<1x128xf32>
    %1583 = arith.mulf %1490, %1555 : vector<1x128xf32>
    %1584 = arith.addf %1582, %1583 : vector<1x128xf32>
    %1585 = arith.mulf %1480, %1543 : vector<1x128xf32>
    %1586 = arith.mulf %1485, %1551 : vector<1x128xf32>
    %1587 = arith.addf %1585, %1586 : vector<1x128xf32>
    %1588 = arith.mulf %1490, %1559 : vector<1x128xf32>
    %1589 = arith.addf %1587, %1588 : vector<1x128xf32>
    %1590 = arith.mulf %1495, %1539 : vector<1x128xf32>
    %1591 = arith.mulf %1500, %1545 : vector<1x128xf32>
    %1592 = arith.addf %1590, %1591 : vector<1x128xf32>
    %1593 = arith.mulf %1505, %1553 : vector<1x128xf32>
    %1594 = arith.addf %1592, %1593 : vector<1x128xf32>
    %1595 = arith.mulf %1495, %1541 : vector<1x128xf32>
    %1596 = arith.mulf %1500, %1549 : vector<1x128xf32>
    %1597 = arith.addf %1595, %1596 : vector<1x128xf32>
    %1598 = arith.mulf %1505, %1555 : vector<1x128xf32>
    %1599 = arith.addf %1597, %1598 : vector<1x128xf32>
    %1600 = arith.mulf %1495, %1543 : vector<1x128xf32>
    %1601 = arith.mulf %1500, %1551 : vector<1x128xf32>
    %1602 = arith.addf %1600, %1601 : vector<1x128xf32>
    %1603 = arith.mulf %1505, %1559 : vector<1x128xf32>
    %1604 = arith.addf %1602, %1603 : vector<1x128xf32>
    %1605 = arith.mulf %1564, %1564 : vector<1x128xf32>
    %1606 = arith.mulf %1579, %1579 : vector<1x128xf32>
    %1607 = arith.addf %1605, %1606 : vector<1x128xf32>
    %1608 = arith.mulf %1594, %1594 : vector<1x128xf32>
    %1609 = arith.addf %1607, %1608 : vector<1x128xf32>
    %1610 = arith.mulf %1564, %1569 : vector<1x128xf32>
    %1611 = arith.mulf %1579, %1584 : vector<1x128xf32>
    %1612 = arith.addf %1610, %1611 : vector<1x128xf32>
    %1613 = arith.mulf %1594, %1599 : vector<1x128xf32>
    %1614 = arith.addf %1612, %1613 : vector<1x128xf32>
    %1615 = arith.mulf %1564, %1574 : vector<1x128xf32>
    %1616 = arith.mulf %1579, %1589 : vector<1x128xf32>
    %1617 = arith.addf %1615, %1616 : vector<1x128xf32>
    %1618 = arith.mulf %1594, %1604 : vector<1x128xf32>
    %1619 = arith.addf %1617, %1618 : vector<1x128xf32>
    %1620 = arith.mulf %1569, %1569 : vector<1x128xf32>
    %1621 = arith.mulf %1584, %1584 : vector<1x128xf32>
    %1622 = arith.addf %1620, %1621 : vector<1x128xf32>
    %1623 = arith.mulf %1599, %1599 : vector<1x128xf32>
    %1624 = arith.addf %1622, %1623 : vector<1x128xf32>
    %1625 = arith.mulf %1569, %1574 : vector<1x128xf32>
    %1626 = arith.mulf %1584, %1589 : vector<1x128xf32>
    %1627 = arith.addf %1625, %1626 : vector<1x128xf32>
    %1628 = arith.mulf %1599, %1604 : vector<1x128xf32>
    %1629 = arith.addf %1627, %1628 : vector<1x128xf32>
    %1630 = arith.mulf %1574, %1574 : vector<1x128xf32>
    %1631 = arith.mulf %1589, %1589 : vector<1x128xf32>
    %1632 = arith.addf %1630, %1631 : vector<1x128xf32>
    %1633 = arith.mulf %1604, %1604 : vector<1x128xf32>
    %1634 = arith.addf %1632, %1633 : vector<1x128xf32>
    %cst_207 = arith.constant 5.000000e-01 : f32
    %1635 = vector.broadcast %cst_207 : f32 to vector<1x128xf32>
    %1636 = arith.mulf %1635, %1609 : vector<1x128xf32>
    %cst_208 = arith.constant 1.500000e+00 : f32
    %1637 = vector.broadcast %cst_208 : f32 to vector<1x128xf32>
    %1638 = arith.subf %1637, %1636 : vector<1x128xf32>
    %cst_209 = arith.constant -5.000000e-01 : f32
    %1639 = vector.broadcast %cst_209 : f32 to vector<1x128xf32>
    %1640 = arith.mulf %1639, %1614 : vector<1x128xf32>
    %cst_210 = arith.constant -5.000000e-01 : f32
    %1641 = vector.broadcast %cst_210 : f32 to vector<1x128xf32>
    %1642 = arith.mulf %1641, %1619 : vector<1x128xf32>
    %cst_211 = arith.constant -5.000000e-01 : f32
    %1643 = vector.broadcast %cst_211 : f32 to vector<1x128xf32>
    %1644 = arith.mulf %1643, %1614 : vector<1x128xf32>
    %cst_212 = arith.constant 5.000000e-01 : f32
    %1645 = vector.broadcast %cst_212 : f32 to vector<1x128xf32>
    %1646 = arith.mulf %1645, %1624 : vector<1x128xf32>
    %cst_213 = arith.constant 1.500000e+00 : f32
    %1647 = vector.broadcast %cst_213 : f32 to vector<1x128xf32>
    %1648 = arith.subf %1647, %1646 : vector<1x128xf32>
    %cst_214 = arith.constant -5.000000e-01 : f32
    %1649 = vector.broadcast %cst_214 : f32 to vector<1x128xf32>
    %1650 = arith.mulf %1649, %1629 : vector<1x128xf32>
    %cst_215 = arith.constant -5.000000e-01 : f32
    %1651 = vector.broadcast %cst_215 : f32 to vector<1x128xf32>
    %1652 = arith.mulf %1651, %1619 : vector<1x128xf32>
    %cst_216 = arith.constant -5.000000e-01 : f32
    %1653 = vector.broadcast %cst_216 : f32 to vector<1x128xf32>
    %1654 = arith.mulf %1653, %1629 : vector<1x128xf32>
    %cst_217 = arith.constant 5.000000e-01 : f32
    %1655 = vector.broadcast %cst_217 : f32 to vector<1x128xf32>
    %1656 = arith.mulf %1655, %1634 : vector<1x128xf32>
    %cst_218 = arith.constant 1.500000e+00 : f32
    %1657 = vector.broadcast %cst_218 : f32 to vector<1x128xf32>
    %1658 = arith.subf %1657, %1656 : vector<1x128xf32>
    %1659 = arith.mulf %1564, %1638 : vector<1x128xf32>
    %1660 = arith.mulf %1569, %1644 : vector<1x128xf32>
    %1661 = arith.addf %1659, %1660 : vector<1x128xf32>
    %1662 = arith.mulf %1574, %1652 : vector<1x128xf32>
    %1663 = arith.addf %1661, %1662 : vector<1x128xf32>
    %1664 = arith.mulf %1564, %1640 : vector<1x128xf32>
    %1665 = arith.mulf %1569, %1648 : vector<1x128xf32>
    %1666 = arith.addf %1664, %1665 : vector<1x128xf32>
    %1667 = arith.mulf %1574, %1654 : vector<1x128xf32>
    %1668 = arith.addf %1666, %1667 : vector<1x128xf32>
    %1669 = arith.mulf %1564, %1642 : vector<1x128xf32>
    %1670 = arith.mulf %1569, %1650 : vector<1x128xf32>
    %1671 = arith.addf %1669, %1670 : vector<1x128xf32>
    %1672 = arith.mulf %1574, %1658 : vector<1x128xf32>
    %1673 = arith.addf %1671, %1672 : vector<1x128xf32>
    %1674 = arith.mulf %1579, %1638 : vector<1x128xf32>
    %1675 = arith.mulf %1584, %1644 : vector<1x128xf32>
    %1676 = arith.addf %1674, %1675 : vector<1x128xf32>
    %1677 = arith.mulf %1589, %1652 : vector<1x128xf32>
    %1678 = arith.addf %1676, %1677 : vector<1x128xf32>
    %1679 = arith.mulf %1579, %1640 : vector<1x128xf32>
    %1680 = arith.mulf %1584, %1648 : vector<1x128xf32>
    %1681 = arith.addf %1679, %1680 : vector<1x128xf32>
    %1682 = arith.mulf %1589, %1654 : vector<1x128xf32>
    %1683 = arith.addf %1681, %1682 : vector<1x128xf32>
    %1684 = arith.mulf %1579, %1642 : vector<1x128xf32>
    %1685 = arith.mulf %1584, %1650 : vector<1x128xf32>
    %1686 = arith.addf %1684, %1685 : vector<1x128xf32>
    %1687 = arith.mulf %1589, %1658 : vector<1x128xf32>
    %1688 = arith.addf %1686, %1687 : vector<1x128xf32>
    %1689 = arith.mulf %1594, %1638 : vector<1x128xf32>
    %1690 = arith.mulf %1599, %1644 : vector<1x128xf32>
    %1691 = arith.addf %1689, %1690 : vector<1x128xf32>
    %1692 = arith.mulf %1604, %1652 : vector<1x128xf32>
    %1693 = arith.addf %1691, %1692 : vector<1x128xf32>
    %1694 = arith.mulf %1594, %1640 : vector<1x128xf32>
    %1695 = arith.mulf %1599, %1648 : vector<1x128xf32>
    %1696 = arith.addf %1694, %1695 : vector<1x128xf32>
    %1697 = arith.mulf %1604, %1654 : vector<1x128xf32>
    %1698 = arith.addf %1696, %1697 : vector<1x128xf32>
    %1699 = arith.mulf %1594, %1642 : vector<1x128xf32>
    %1700 = arith.mulf %1599, %1650 : vector<1x128xf32>
    %1701 = arith.addf %1699, %1700 : vector<1x128xf32>
    %1702 = arith.mulf %1604, %1658 : vector<1x128xf32>
    %1703 = arith.addf %1701, %1702 : vector<1x128xf32>
    %1704 = arith.mulf %1663, %1663 : vector<1x128xf32>
    %1705 = arith.mulf %1678, %1678 : vector<1x128xf32>
    %1706 = arith.addf %1704, %1705 : vector<1x128xf32>
    %1707 = arith.mulf %1693, %1693 : vector<1x128xf32>
    %1708 = arith.addf %1706, %1707 : vector<1x128xf32>
    %1709 = arith.mulf %1663, %1668 : vector<1x128xf32>
    %1710 = arith.mulf %1678, %1683 : vector<1x128xf32>
    %1711 = arith.addf %1709, %1710 : vector<1x128xf32>
    %1712 = arith.mulf %1693, %1698 : vector<1x128xf32>
    %1713 = arith.addf %1711, %1712 : vector<1x128xf32>
    %1714 = arith.mulf %1663, %1673 : vector<1x128xf32>
    %1715 = arith.mulf %1678, %1688 : vector<1x128xf32>
    %1716 = arith.addf %1714, %1715 : vector<1x128xf32>
    %1717 = arith.mulf %1693, %1703 : vector<1x128xf32>
    %1718 = arith.addf %1716, %1717 : vector<1x128xf32>
    %1719 = arith.mulf %1668, %1668 : vector<1x128xf32>
    %1720 = arith.mulf %1683, %1683 : vector<1x128xf32>
    %1721 = arith.addf %1719, %1720 : vector<1x128xf32>
    %1722 = arith.mulf %1698, %1698 : vector<1x128xf32>
    %1723 = arith.addf %1721, %1722 : vector<1x128xf32>
    %1724 = arith.mulf %1668, %1673 : vector<1x128xf32>
    %1725 = arith.mulf %1683, %1688 : vector<1x128xf32>
    %1726 = arith.addf %1724, %1725 : vector<1x128xf32>
    %1727 = arith.mulf %1698, %1703 : vector<1x128xf32>
    %1728 = arith.addf %1726, %1727 : vector<1x128xf32>
    %1729 = arith.mulf %1673, %1673 : vector<1x128xf32>
    %1730 = arith.mulf %1688, %1688 : vector<1x128xf32>
    %1731 = arith.addf %1729, %1730 : vector<1x128xf32>
    %1732 = arith.mulf %1703, %1703 : vector<1x128xf32>
    %1733 = arith.addf %1731, %1732 : vector<1x128xf32>
    %cst_219 = arith.constant 5.000000e-01 : f32
    %1734 = vector.broadcast %cst_219 : f32 to vector<1x128xf32>
    %1735 = arith.mulf %1734, %1708 : vector<1x128xf32>
    %cst_220 = arith.constant 1.500000e+00 : f32
    %1736 = vector.broadcast %cst_220 : f32 to vector<1x128xf32>
    %1737 = arith.subf %1736, %1735 : vector<1x128xf32>
    %cst_221 = arith.constant -5.000000e-01 : f32
    %1738 = vector.broadcast %cst_221 : f32 to vector<1x128xf32>
    %1739 = arith.mulf %1738, %1713 : vector<1x128xf32>
    %cst_222 = arith.constant -5.000000e-01 : f32
    %1740 = vector.broadcast %cst_222 : f32 to vector<1x128xf32>
    %1741 = arith.mulf %1740, %1718 : vector<1x128xf32>
    %cst_223 = arith.constant -5.000000e-01 : f32
    %1742 = vector.broadcast %cst_223 : f32 to vector<1x128xf32>
    %1743 = arith.mulf %1742, %1713 : vector<1x128xf32>
    %cst_224 = arith.constant 5.000000e-01 : f32
    %1744 = vector.broadcast %cst_224 : f32 to vector<1x128xf32>
    %1745 = arith.mulf %1744, %1723 : vector<1x128xf32>
    %cst_225 = arith.constant 1.500000e+00 : f32
    %1746 = vector.broadcast %cst_225 : f32 to vector<1x128xf32>
    %1747 = arith.subf %1746, %1745 : vector<1x128xf32>
    %cst_226 = arith.constant -5.000000e-01 : f32
    %1748 = vector.broadcast %cst_226 : f32 to vector<1x128xf32>
    %1749 = arith.mulf %1748, %1728 : vector<1x128xf32>
    %cst_227 = arith.constant -5.000000e-01 : f32
    %1750 = vector.broadcast %cst_227 : f32 to vector<1x128xf32>
    %1751 = arith.mulf %1750, %1718 : vector<1x128xf32>
    %cst_228 = arith.constant -5.000000e-01 : f32
    %1752 = vector.broadcast %cst_228 : f32 to vector<1x128xf32>
    %1753 = arith.mulf %1752, %1728 : vector<1x128xf32>
    %cst_229 = arith.constant 5.000000e-01 : f32
    %1754 = vector.broadcast %cst_229 : f32 to vector<1x128xf32>
    %1755 = arith.mulf %1754, %1733 : vector<1x128xf32>
    %cst_230 = arith.constant 1.500000e+00 : f32
    %1756 = vector.broadcast %cst_230 : f32 to vector<1x128xf32>
    %1757 = arith.subf %1756, %1755 : vector<1x128xf32>
    %1758 = arith.mulf %1663, %1737 : vector<1x128xf32>
    %1759 = arith.mulf %1668, %1743 : vector<1x128xf32>
    %1760 = arith.addf %1758, %1759 : vector<1x128xf32>
    %1761 = arith.mulf %1673, %1751 : vector<1x128xf32>
    %1762 = arith.addf %1760, %1761 : vector<1x128xf32>
    %1763 = arith.mulf %1663, %1739 : vector<1x128xf32>
    %1764 = arith.mulf %1668, %1747 : vector<1x128xf32>
    %1765 = arith.addf %1763, %1764 : vector<1x128xf32>
    %1766 = arith.mulf %1673, %1753 : vector<1x128xf32>
    %1767 = arith.addf %1765, %1766 : vector<1x128xf32>
    %1768 = arith.mulf %1663, %1741 : vector<1x128xf32>
    %1769 = arith.mulf %1668, %1749 : vector<1x128xf32>
    %1770 = arith.addf %1768, %1769 : vector<1x128xf32>
    %1771 = arith.mulf %1673, %1757 : vector<1x128xf32>
    %1772 = arith.addf %1770, %1771 : vector<1x128xf32>
    %1773 = arith.mulf %1678, %1737 : vector<1x128xf32>
    %1774 = arith.mulf %1683, %1743 : vector<1x128xf32>
    %1775 = arith.addf %1773, %1774 : vector<1x128xf32>
    %1776 = arith.mulf %1688, %1751 : vector<1x128xf32>
    %1777 = arith.addf %1775, %1776 : vector<1x128xf32>
    %1778 = arith.mulf %1678, %1739 : vector<1x128xf32>
    %1779 = arith.mulf %1683, %1747 : vector<1x128xf32>
    %1780 = arith.addf %1778, %1779 : vector<1x128xf32>
    %1781 = arith.mulf %1688, %1753 : vector<1x128xf32>
    %1782 = arith.addf %1780, %1781 : vector<1x128xf32>
    %1783 = arith.mulf %1678, %1741 : vector<1x128xf32>
    %1784 = arith.mulf %1683, %1749 : vector<1x128xf32>
    %1785 = arith.addf %1783, %1784 : vector<1x128xf32>
    %1786 = arith.mulf %1688, %1757 : vector<1x128xf32>
    %1787 = arith.addf %1785, %1786 : vector<1x128xf32>
    %1788 = arith.mulf %1693, %1737 : vector<1x128xf32>
    %1789 = arith.mulf %1698, %1743 : vector<1x128xf32>
    %1790 = arith.addf %1788, %1789 : vector<1x128xf32>
    %1791 = arith.mulf %1703, %1751 : vector<1x128xf32>
    %1792 = arith.addf %1790, %1791 : vector<1x128xf32>
    %1793 = arith.mulf %1693, %1739 : vector<1x128xf32>
    %1794 = arith.mulf %1698, %1747 : vector<1x128xf32>
    %1795 = arith.addf %1793, %1794 : vector<1x128xf32>
    %1796 = arith.mulf %1703, %1753 : vector<1x128xf32>
    %1797 = arith.addf %1795, %1796 : vector<1x128xf32>
    %1798 = arith.mulf %1693, %1741 : vector<1x128xf32>
    %1799 = arith.mulf %1698, %1749 : vector<1x128xf32>
    %1800 = arith.addf %1798, %1799 : vector<1x128xf32>
    %1801 = arith.mulf %1703, %1757 : vector<1x128xf32>
    %1802 = arith.addf %1800, %1801 : vector<1x128xf32>
    %1803 = arith.mulf %1762, %1762 : vector<1x128xf32>
    %1804 = arith.mulf %1777, %1777 : vector<1x128xf32>
    %1805 = arith.addf %1803, %1804 : vector<1x128xf32>
    %1806 = arith.mulf %1792, %1792 : vector<1x128xf32>
    %1807 = arith.addf %1805, %1806 : vector<1x128xf32>
    %1808 = arith.mulf %1762, %1767 : vector<1x128xf32>
    %1809 = arith.mulf %1777, %1782 : vector<1x128xf32>
    %1810 = arith.addf %1808, %1809 : vector<1x128xf32>
    %1811 = arith.mulf %1792, %1797 : vector<1x128xf32>
    %1812 = arith.addf %1810, %1811 : vector<1x128xf32>
    %1813 = arith.mulf %1762, %1772 : vector<1x128xf32>
    %1814 = arith.mulf %1777, %1787 : vector<1x128xf32>
    %1815 = arith.addf %1813, %1814 : vector<1x128xf32>
    %1816 = arith.mulf %1792, %1802 : vector<1x128xf32>
    %1817 = arith.addf %1815, %1816 : vector<1x128xf32>
    %1818 = arith.mulf %1767, %1767 : vector<1x128xf32>
    %1819 = arith.mulf %1782, %1782 : vector<1x128xf32>
    %1820 = arith.addf %1818, %1819 : vector<1x128xf32>
    %1821 = arith.mulf %1797, %1797 : vector<1x128xf32>
    %1822 = arith.addf %1820, %1821 : vector<1x128xf32>
    %1823 = arith.mulf %1767, %1772 : vector<1x128xf32>
    %1824 = arith.mulf %1782, %1787 : vector<1x128xf32>
    %1825 = arith.addf %1823, %1824 : vector<1x128xf32>
    %1826 = arith.mulf %1797, %1802 : vector<1x128xf32>
    %1827 = arith.addf %1825, %1826 : vector<1x128xf32>
    %1828 = arith.mulf %1772, %1772 : vector<1x128xf32>
    %1829 = arith.mulf %1787, %1787 : vector<1x128xf32>
    %1830 = arith.addf %1828, %1829 : vector<1x128xf32>
    %1831 = arith.mulf %1802, %1802 : vector<1x128xf32>
    %1832 = arith.addf %1830, %1831 : vector<1x128xf32>
    %cst_231 = arith.constant 5.000000e-01 : f32
    %1833 = vector.broadcast %cst_231 : f32 to vector<1x128xf32>
    %1834 = arith.mulf %1833, %1807 : vector<1x128xf32>
    %cst_232 = arith.constant 1.500000e+00 : f32
    %1835 = vector.broadcast %cst_232 : f32 to vector<1x128xf32>
    %1836 = arith.subf %1835, %1834 : vector<1x128xf32>
    %cst_233 = arith.constant -5.000000e-01 : f32
    %1837 = vector.broadcast %cst_233 : f32 to vector<1x128xf32>
    %1838 = arith.mulf %1837, %1812 : vector<1x128xf32>
    %cst_234 = arith.constant -5.000000e-01 : f32
    %1839 = vector.broadcast %cst_234 : f32 to vector<1x128xf32>
    %1840 = arith.mulf %1839, %1817 : vector<1x128xf32>
    %cst_235 = arith.constant -5.000000e-01 : f32
    %1841 = vector.broadcast %cst_235 : f32 to vector<1x128xf32>
    %1842 = arith.mulf %1841, %1812 : vector<1x128xf32>
    %cst_236 = arith.constant 5.000000e-01 : f32
    %1843 = vector.broadcast %cst_236 : f32 to vector<1x128xf32>
    %1844 = arith.mulf %1843, %1822 : vector<1x128xf32>
    %cst_237 = arith.constant 1.500000e+00 : f32
    %1845 = vector.broadcast %cst_237 : f32 to vector<1x128xf32>
    %1846 = arith.subf %1845, %1844 : vector<1x128xf32>
    %cst_238 = arith.constant -5.000000e-01 : f32
    %1847 = vector.broadcast %cst_238 : f32 to vector<1x128xf32>
    %1848 = arith.mulf %1847, %1827 : vector<1x128xf32>
    %cst_239 = arith.constant -5.000000e-01 : f32
    %1849 = vector.broadcast %cst_239 : f32 to vector<1x128xf32>
    %1850 = arith.mulf %1849, %1817 : vector<1x128xf32>
    %cst_240 = arith.constant -5.000000e-01 : f32
    %1851 = vector.broadcast %cst_240 : f32 to vector<1x128xf32>
    %1852 = arith.mulf %1851, %1827 : vector<1x128xf32>
    %cst_241 = arith.constant 5.000000e-01 : f32
    %1853 = vector.broadcast %cst_241 : f32 to vector<1x128xf32>
    %1854 = arith.mulf %1853, %1832 : vector<1x128xf32>
    %cst_242 = arith.constant 1.500000e+00 : f32
    %1855 = vector.broadcast %cst_242 : f32 to vector<1x128xf32>
    %1856 = arith.subf %1855, %1854 : vector<1x128xf32>
    %1857 = arith.mulf %1762, %1836 : vector<1x128xf32>
    %1858 = arith.mulf %1767, %1842 : vector<1x128xf32>
    %1859 = arith.addf %1857, %1858 : vector<1x128xf32>
    %1860 = arith.mulf %1772, %1850 : vector<1x128xf32>
    %1861 = arith.addf %1859, %1860 : vector<1x128xf32>
    %1862 = arith.mulf %1762, %1838 : vector<1x128xf32>
    %1863 = arith.mulf %1767, %1846 : vector<1x128xf32>
    %1864 = arith.addf %1862, %1863 : vector<1x128xf32>
    %1865 = arith.mulf %1772, %1852 : vector<1x128xf32>
    %1866 = arith.addf %1864, %1865 : vector<1x128xf32>
    %1867 = arith.mulf %1762, %1840 : vector<1x128xf32>
    %1868 = arith.mulf %1767, %1848 : vector<1x128xf32>
    %1869 = arith.addf %1867, %1868 : vector<1x128xf32>
    %1870 = arith.mulf %1772, %1856 : vector<1x128xf32>
    %1871 = arith.addf %1869, %1870 : vector<1x128xf32>
    %1872 = arith.mulf %1777, %1836 : vector<1x128xf32>
    %1873 = arith.mulf %1782, %1842 : vector<1x128xf32>
    %1874 = arith.addf %1872, %1873 : vector<1x128xf32>
    %1875 = arith.mulf %1787, %1850 : vector<1x128xf32>
    %1876 = arith.addf %1874, %1875 : vector<1x128xf32>
    %1877 = arith.mulf %1777, %1838 : vector<1x128xf32>
    %1878 = arith.mulf %1782, %1846 : vector<1x128xf32>
    %1879 = arith.addf %1877, %1878 : vector<1x128xf32>
    %1880 = arith.mulf %1787, %1852 : vector<1x128xf32>
    %1881 = arith.addf %1879, %1880 : vector<1x128xf32>
    %1882 = arith.mulf %1777, %1840 : vector<1x128xf32>
    %1883 = arith.mulf %1782, %1848 : vector<1x128xf32>
    %1884 = arith.addf %1882, %1883 : vector<1x128xf32>
    %1885 = arith.mulf %1787, %1856 : vector<1x128xf32>
    %1886 = arith.addf %1884, %1885 : vector<1x128xf32>
    %1887 = arith.mulf %1792, %1836 : vector<1x128xf32>
    %1888 = arith.mulf %1797, %1842 : vector<1x128xf32>
    %1889 = arith.addf %1887, %1888 : vector<1x128xf32>
    %1890 = arith.mulf %1802, %1850 : vector<1x128xf32>
    %1891 = arith.addf %1889, %1890 : vector<1x128xf32>
    %1892 = arith.mulf %1792, %1838 : vector<1x128xf32>
    %1893 = arith.mulf %1797, %1846 : vector<1x128xf32>
    %1894 = arith.addf %1892, %1893 : vector<1x128xf32>
    %1895 = arith.mulf %1802, %1852 : vector<1x128xf32>
    %1896 = arith.addf %1894, %1895 : vector<1x128xf32>
    %1897 = arith.mulf %1792, %1840 : vector<1x128xf32>
    %1898 = arith.mulf %1797, %1848 : vector<1x128xf32>
    %1899 = arith.addf %1897, %1898 : vector<1x128xf32>
    %1900 = arith.mulf %1802, %1856 : vector<1x128xf32>
    %1901 = arith.addf %1899, %1900 : vector<1x128xf32>
    %c0_243 = arith.constant 0 : index
    %c0_244 = arith.constant 0 : index
    %1902 = vector.load %arg5[%c0_243, %c0_244] : memref<8x128xf32, #tpu.memory_space<vmem>>, vector<8x128xf32>
    %1903 = vector.extract_strided_slice %6 {offsets = [0, 0, 0], sizes = [1, 8, 128], strides = [1, 1, 1]} : vector<3x8x128xf32> to vector<1x8x128xf32>
    %1904 = vector.shape_cast %1903 : vector<1x8x128xf32> to vector<8x128xf32>
    %1905 = vector.broadcast %1861 : vector<1x128xf32> to vector<8x128xf32>
    %1906 = arith.mulf %1904, %1905 : vector<8x128xf32>
    %1907 = vector.extract_strided_slice %6 {offsets = [1, 0, 0], sizes = [1, 8, 128], strides = [1, 1, 1]} : vector<3x8x128xf32> to vector<1x8x128xf32>
    %1908 = vector.shape_cast %1907 : vector<1x8x128xf32> to vector<8x128xf32>
    %1909 = vector.broadcast %1866 : vector<1x128xf32> to vector<8x128xf32>
    %1910 = arith.mulf %1908, %1909 : vector<8x128xf32>
    %1911 = arith.addf %1906, %1910 : vector<8x128xf32>
    %1912 = vector.extract_strided_slice %6 {offsets = [2, 0, 0], sizes = [1, 8, 128], strides = [1, 1, 1]} : vector<3x8x128xf32> to vector<1x8x128xf32>
    %1913 = vector.shape_cast %1912 : vector<1x8x128xf32> to vector<8x128xf32>
    %1914 = vector.broadcast %1871 : vector<1x128xf32> to vector<8x128xf32>
    %1915 = arith.mulf %1913, %1914 : vector<8x128xf32>
    %1916 = arith.addf %1911, %1915 : vector<8x128xf32>
    %1917 = vector.extract_strided_slice %9 {offsets = [0, 0, 0], sizes = [1, 8, 128], strides = [1, 1, 1]} : vector<3x8x128xf32> to vector<1x8x128xf32>
    %1918 = vector.shape_cast %1917 : vector<1x8x128xf32> to vector<8x128xf32>
    %1919 = arith.subf %1916, %1918 : vector<8x128xf32>
    %1920 = arith.mulf %1919, %1919 : vector<8x128xf32>
    %1921 = vector.extract_strided_slice %6 {offsets = [0, 0, 0], sizes = [1, 8, 128], strides = [1, 1, 1]} : vector<3x8x128xf32> to vector<1x8x128xf32>
    %1922 = vector.shape_cast %1921 : vector<1x8x128xf32> to vector<8x128xf32>
    %1923 = vector.broadcast %1876 : vector<1x128xf32> to vector<8x128xf32>
    %1924 = arith.mulf %1922, %1923 : vector<8x128xf32>
    %1925 = vector.extract_strided_slice %6 {offsets = [1, 0, 0], sizes = [1, 8, 128], strides = [1, 1, 1]} : vector<3x8x128xf32> to vector<1x8x128xf32>
    %1926 = vector.shape_cast %1925 : vector<1x8x128xf32> to vector<8x128xf32>
    %1927 = vector.broadcast %1881 : vector<1x128xf32> to vector<8x128xf32>
    %1928 = arith.mulf %1926, %1927 : vector<8x128xf32>
    %1929 = arith.addf %1924, %1928 : vector<8x128xf32>
    %1930 = vector.extract_strided_slice %6 {offsets = [2, 0, 0], sizes = [1, 8, 128], strides = [1, 1, 1]} : vector<3x8x128xf32> to vector<1x8x128xf32>
    %1931 = vector.shape_cast %1930 : vector<1x8x128xf32> to vector<8x128xf32>
    %1932 = vector.broadcast %1886 : vector<1x128xf32> to vector<8x128xf32>
    %1933 = arith.mulf %1931, %1932 : vector<8x128xf32>
    %1934 = arith.addf %1929, %1933 : vector<8x128xf32>
    %1935 = vector.extract_strided_slice %9 {offsets = [1, 0, 0], sizes = [1, 8, 128], strides = [1, 1, 1]} : vector<3x8x128xf32> to vector<1x8x128xf32>
    %1936 = vector.shape_cast %1935 : vector<1x8x128xf32> to vector<8x128xf32>
    %1937 = arith.subf %1934, %1936 : vector<8x128xf32>
    %1938 = arith.mulf %1937, %1937 : vector<8x128xf32>
    %1939 = arith.addf %1920, %1938 : vector<8x128xf32>
    %1940 = vector.extract_strided_slice %6 {offsets = [0, 0, 0], sizes = [1, 8, 128], strides = [1, 1, 1]} : vector<3x8x128xf32> to vector<1x8x128xf32>
    %1941 = vector.shape_cast %1940 : vector<1x8x128xf32> to vector<8x128xf32>
    %1942 = vector.broadcast %1891 : vector<1x128xf32> to vector<8x128xf32>
    %1943 = arith.mulf %1941, %1942 : vector<8x128xf32>
    %1944 = vector.extract_strided_slice %6 {offsets = [1, 0, 0], sizes = [1, 8, 128], strides = [1, 1, 1]} : vector<3x8x128xf32> to vector<1x8x128xf32>
    %1945 = vector.shape_cast %1944 : vector<1x8x128xf32> to vector<8x128xf32>
    %1946 = vector.broadcast %1896 : vector<1x128xf32> to vector<8x128xf32>
    %1947 = arith.mulf %1945, %1946 : vector<8x128xf32>
    %1948 = arith.addf %1943, %1947 : vector<8x128xf32>
    %1949 = vector.extract_strided_slice %6 {offsets = [2, 0, 0], sizes = [1, 8, 128], strides = [1, 1, 1]} : vector<3x8x128xf32> to vector<1x8x128xf32>
    %1950 = vector.shape_cast %1949 : vector<1x8x128xf32> to vector<8x128xf32>
    %1951 = vector.broadcast %1901 : vector<1x128xf32> to vector<8x128xf32>
    %1952 = arith.mulf %1950, %1951 : vector<8x128xf32>
    %1953 = arith.addf %1948, %1952 : vector<8x128xf32>
    %1954 = vector.extract_strided_slice %9 {offsets = [2, 0, 0], sizes = [1, 8, 128], strides = [1, 1, 1]} : vector<3x8x128xf32> to vector<1x8x128xf32>
    %1955 = vector.shape_cast %1954 : vector<1x8x128xf32> to vector<8x128xf32>
    %1956 = arith.subf %1953, %1955 : vector<8x128xf32>
    %1957 = arith.mulf %1956, %1956 : vector<8x128xf32>
    %1958 = arith.addf %1939, %1957 : vector<8x128xf32>
    %1959 = math.sqrt %1958 : vector<8x128xf32>
    %1960 = arith.mulf %1959, %1902 : vector<8x128xf32>
    %cst_245 = arith.constant dense<0.000000e+00> : vector<128xf32>
    %1961 = vector.multi_reduction <add>, %1960, %cst_245 [0] : vector<8x128xf32> to vector<128xf32>
    %1962 = vector.shape_cast %1961 : vector<128xf32> to vector<1x128xf32>
    %cst_246 = arith.constant dense<0.000000e+00> : vector<128xf32>
    %1963 = vector.multi_reduction <add>, %1902, %cst_246 [0] : vector<8x128xf32> to vector<128xf32>
    %1964 = vector.shape_cast %1963 : vector<128xf32> to vector<1x128xf32>
    %c0_247 = arith.constant 0 : index
    %c0_248 = arith.constant 0 : index
    %1965 = vector.load %arg6[%c0_247, %c0_248] : memref<1x128xf32, #tpu.memory_space<vmem>>, vector<1x128xf32>
    tpu.vector_store %arg6[%c0_247, %c0_248], %1962 {strides = array<i32>} : memref<1x128xf32, #tpu.memory_space<vmem>>, vector<1x128xf32>,
    %c0_249 = arith.constant 0 : index
    %c0_250 = arith.constant 0 : index
    %1966 = vector.load %arg7[%c0_249, %c0_250] : memref<1x128xf32, #tpu.memory_space<vmem>>, vector<1x128xf32>
    tpu.vector_store %arg7[%c0_249, %c0_250], %1964 {strides = array<i32>} : memref<1x128xf32, #tpu.memory_space<vmem>>, vector<1x128xf32>,
    return
  }
  func.func @transform_0(%arg0: i32) -> (i32, i32, i32) {
    %c0_i32 = arith.constant 0 : i32
    %c0_i32_0 = arith.constant 0 : i32
    %c0_i32_1 = arith.constant 0 : i32
    return %c0_i32, %c0_i32_0, %arg0 : i32, i32, i32
  }
  func.func @transform_1(%arg0: i32) -> (i32, i32) {
    %c0_i32 = arith.constant 0 : i32
    %c0_i32_0 = arith.constant 0 : i32
    return %c0_i32, %arg0 : i32, i32
  }
  func.func @transform_2(%arg0: i32) -> (i32, i32, i32) {
    %c0_i32 = arith.constant 0 : i32
    %c0_i32_0 = arith.constant 0 : i32
    %c0_i32_1 = arith.constant 0 : i32
    return %c0_i32, %c0_i32_0, %arg0 : i32, i32, i32
  }
  func.func @transform_3(%arg0: i32) -> (i32, i32) {
    %c0_i32 = arith.constant 0 : i32
    %c0_i32_0 = arith.constant 0 : i32
    return %c0_i32, %arg0 : i32, i32
  }
  func.func @transform_4(%arg0: i32) -> (i32, i32) {
    %c0_i32 = arith.constant 0 : i32
    %c0_i32_0 = arith.constant 0 : i32
    return %c0_i32, %arg0 : i32, i32
  }
  func.func @transform_5(%arg0: i32) -> (i32, i32) {
    %c0_i32 = arith.constant 0 : i32
    %c0_i32_0 = arith.constant 0 : i32
    return %c0_i32, %arg0 : i32, i32
  }
  func.func @transform_6(%arg0: i32) -> (i32, i32) {
    %c0_i32 = arith.constant 0 : i32
    %c0_i32_0 = arith.constant 0 : i32
    return %c0_i32, %arg0 : i32, i32
  }
}

</mosaic_0001>

<llo_original>
// kernel: tpu_custom_call.1
$region0: #{tpu_custom_call.1}
  #allocation0 [shape = 'u32[]', space=smem, size = 0x4, offset = 0x4, fixed_abs, tag = 'smem constant byte address 0x4 - core index']
  #allocation1 [shape = 'u32[144,128]{1,0:T(1,128)}', space=vmem, size = 0x12000, scoped, tag = 'internal scratch']
  %s0 = inlined_call_operand.hbm [shape: f32[3,8,256], index: 0, kind: input, shape index: {}]
  %s1 = inlined_call_operand.hbm [shape: f32[3,256], index: 1, kind: input, shape index: {}]
  %s2 = inlined_call_operand.hbm [shape: f32[3,8,256], index: 2, kind: input, shape index: {}]
  %s3 = inlined_call_operand.hbm [shape: f32[3,256], index: 3, kind: input, shape index: {}]
  %s4 = inlined_call_operand.hbm [shape: f32[8,256], index: 4, kind: input, shape index: {}]
  %s5 = inlined_call_operand.hbm [shape: f32[1,256], index: 5, kind: output, shape index: {0}]
  %s6 = inlined_call_operand.hbm [shape: f32[1,256], index: 6, kind: output, shape index: {1}]
  %7 = xla_tuple %s5, %s6
  %s8 = sld [smem:[#allocation0]]
  $region81: #{tpu_custom_call.1} parent=0
    _
  %s10 = ssub.s32 1, %s8
  %s11 = scalar_select 0, %s10, %s8
  $region1: #{tpu_custom_call.1} parent=0
    #allocation2 [shape = 'u8[24576]{0}', space=vmem, size = 0x6000, scoped, tag = 'input window, operand 0']
    #allocation3 [shape = 's32[2]{0}', space=sflag, size = 0x8, scoped, tag = 'scoped memory for tpu_custom_call.1']
    #allocation4 [shape = 's32[2]{0}', space=sflag, size = 0x8, scoped, tag = 'scoped memory for tpu_custom_call.1']
    #allocation5 [shape = 'u8[4096]{0}', space=vmem, size = 0x1000, scoped, tag = 'input window, operand 1']
    #allocation6 [shape = 's32[2]{0}', space=sflag, size = 0x8, scoped, tag = 'scoped memory for tpu_custom_call.1']
    #allocation7 [shape = 'u8[24576]{0}', space=vmem, size = 0x6000, scoped, tag = 'input window, operand 2']
    #allocation8 [shape = 'u8[4096]{0}', space=vmem, size = 0x1000, scoped, tag = 'input window, operand 3']
    #allocation9 [shape = 's32[2]{0}', space=sflag, size = 0x8, scoped, tag = 'scoped memory for tpu_custom_call.1']
    #allocation10 [shape = 'u8[8192]{0}', space=vmem, size = 0x2000, scoped, tag = 'input window, operand 4']
    #allocation11 [shape = 'u8[1024]{0}', space=vmem, size = 0x400, scoped, tag = 'output window, operand 0']
    #allocation12 [shape = 'u8[1024]{0}', space=vmem, size = 0x400, scoped, tag = 'output window, operand 1']
    #allocation13 [shape = 's32[2]{0}', space=sflag, size = 0x8, scoped, tag = 'scoped memory for tpu_custom_call.1']
    %12 = vsyncpa [#allocation3], 0
    %s13 = scalar_lea.sflag [#allocation3], 1
    %14 = vsyncpa %s13, 0
    %15 = vsyncpa [#allocation6], 0
    %s16 = scalar_lea.sflag [#allocation6], 1
    %17 = vsyncpa %s16, 0
    %18 = vsyncpa [#allocation9], 0
    %s19 = scalar_lea.sflag [#allocation9], 1
    %20 = vsyncpa %s19, 0
    %21 = vsyncpa [#allocation4], 0
    %s22 = scalar_lea.sflag [#allocation4], 1
    %23 = vsyncpa %s22, 0
    %24 = vsyncpa [#allocation13], 0
    %s25 = scalar_lea.sflag [#allocation13], 1
    %26 = vsyncpa %s25, 0
    loop: start=0, step=1, limit=4
    $region2: #{tpu_custom_call.1} parent=1 // loop_pre_header
      _
    $region3: #{tpu_custom_call.1} parent=1 // loop_header
      %s28 = sphi 0, %s32
      %p29 = scmp.ge.s32.totalorder %s28, 4
      %s38 = sphi 0, %s40
      %s41 = sphi 0, %s38
      %s42 = sphi 0, %s41
      %s58 = sphi 0, %s42
      %s64 = sphi 0, %s66
      %s67 = sphi 0, %s64
      %s68 = sphi 0, %s67
      %s84 = sphi 0, %s68
      %s90 = sphi 0, %s92
      %s93 = sphi 0, %s90
      %s94 = sphi 0, %s93
      %s110 = sphi 0, %s94
      %s116 = sphi 0, %s118
      %s119 = sphi 0, %s116
      %s120 = sphi 0, %s119
      %s136 = sphi 0, %s120
      %s142 = sphi 0, %s144
      %s145 = sphi 0, %s142
      %s146 = sphi 0, %s145
      %s162 = sphi 0, %s146
      %s168 = sphi 0, %s170
      %s171 = sphi 0, %s168
      %s172 = sphi 0, %s171
      %s188 = sphi 0, %s172
      %s194 = sphi 0, %s196
      %s197 = sphi 0, %s194
      %s198 = sphi 0, %s197
      %s214 = sphi 0, %s198
    $region4: #{tpu_custom_call.1} parent=1 // loop_header_branch
      %31 = sbr.rel (%p29) target = $region8
    $region5: #{tpu_custom_call.1} parent=1 // loop_body
      %s33 = ssub.s32 %s28, 1
      %s34 = ssub.s32 %s28, 2
      %s35 = sadd.s32 %s28, 1
      %s36 = ssub.s32 %s28, %s35
      %p37 = scmp.eq.s32.totalorder %s36, 0
      %s39 = sadd.s32 %s38, 1
      %s40 = scalar_select %p37, %s38, %s39
      %p43 = pneg %p37
      %p44 = scmp.eq.s32.totalorder %s28, 1
      %p45 = por %p43, %p44
      %p46 = scmp.ne.s32.totalorder %s38, %s41
      %p47 = scmp.eq.s32.totalorder %s28, 0
      %p48 = por %p46, %p47
      %p49 = scmp.ne.s32.totalorder %s38, %s41
      %p50 = scmp.eq.s32.totalorder %s33, 1
      %p51 = por %p49, %p50
      %p52 = scmp.ne.s32.totalorder %s41, %s42
      %p53 = scmp.eq.s32.totalorder %s33, 0
      %p54 = por %p52, %p53
      %p55 = scmp.ne.s32.totalorder %s41, %s42
      %p56 = scmp.eq.s32.totalorder %s34, 1
      %p57 = por %p55, %p56
      %p59 = scmp.ne.s32.totalorder %s42, %s58
      %p60 = scmp.eq.s32.totalorder %s34, 0
      %p61 = por %p59, %p60
      %s62 = ssub.s32 %s28, %s35
      %p63 = scmp.eq.s32.totalorder %s62, 0
      %s65 = sadd.s32 %s64, 1
      %s66 = scalar_select %p63, %s64, %s65
      %p69 = pneg %p63
      %p70 = scmp.eq.s32.totalorder %s28, 1
      %p71 = por %p69, %p70
      %p72 = scmp.ne.s32.totalorder %s64, %s67
      %p73 = scmp.eq.s32.totalorder %s28, 0
      %p74 = por %p72, %p73
      %p75 = scmp.ne.s32.totalorder %s64, %s67
      %p76 = scmp.eq.s32.totalorder %s33, 1
      %p77 = por %p75, %p76
      %p78 = scmp.ne.s32.totalorder %s67, %s68
      %p79 = scmp.eq.s32.totalorder %s33, 0
      %p80 = por %p78, %p79
      %p81 = scmp.ne.s32.totalorder %s67, %s68
      %p82 = scmp.eq.s32.totalorder %s34, 1
      %p83 = por %p81, %p82
      %p85 = scmp.ne.s32.totalorder %s68, %s84
      %p86 = scmp.eq.s32.totalorder %s34, 0
      %p87 = por %p85, %p86
      %s88 = ssub.s32 %s28, %s35
      %p89 = scmp.eq.s32.totalorder %s88, 0
      %s91 = sadd.s32 %s90, 1
      %s92 = scalar_select %p89, %s90, %s91
      %p95 = pneg %p89
      %p96 = scmp.eq.s32.totalorder %s28, 1
      %p97 = por %p95, %p96
      %p98 = scmp.ne.s32.totalorder %s90, %s93
      %p99 = scmp.eq.s32.totalorder %s28, 0
      %p100 = por %p98, %p99
      %p101 = scmp.ne.s32.totalorder %s90, %s93
      %p102 = scmp.eq.s32.totalorder %s33, 1
      %p103 = por %p101, %p102
      %p104 = scmp.ne.s32.totalorder %s93, %s94
      %p105 = scmp.eq.s32.totalorder %s33, 0
      %p106 = por %p104, %p105
      %p107 = scmp.ne.s32.totalorder %s93, %s94
      %p108 = scmp.eq.s32.totalorder %s34, 1
      %p109 = por %p107, %p108
      %p111 = scmp.ne.s32.totalorder %s94, %s110
      %p112 = scmp.eq.s32.totalorder %s34, 0
      %p113 = por %p111, %p112
      %s114 = ssub.s32 %s28, %s35
      %p115 = scmp.eq.s32.totalorder %s114, 0
      %s117 = sadd.s32 %s116, 1
      %s118 = scalar_select %p115, %s116, %s117
      %p121 = pneg %p115
      %p122 = scmp.eq.s32.totalorder %s28, 1
      %p123 = por %p121, %p122
      %p124 = scmp.ne.s32.totalorder %s116, %s119
      %p125 = scmp.eq.s32.totalorder %s28, 0
      %p126 = por %p124, %p125
      %p127 = scmp.ne.s32.totalorder %s116, %s119
      %p128 = scmp.eq.s32.totalorder %s33, 1
      %p129 = por %p127, %p128
      %p130 = scmp.ne.s32.totalorder %s119, %s120
      %p131 = scmp.eq.s32.totalorder %s33, 0
      %p132 = por %p130, %p131
      %p133 = scmp.ne.s32.totalorder %s119, %s120
      %p134 = scmp.eq.s32.totalorder %s34, 1
      %p135 = por %p133, %p134
      %p137 = scmp.ne.s32.totalorder %s120, %s136
      %p138 = scmp.eq.s32.totalorder %s34, 0
      %p139 = por %p137, %p138
      %s140 = ssub.s32 %s28, %s35
      %p141 = scmp.eq.s32.totalorder %s140, 0
      %s143 = sadd.s32 %s142, 1
      %s144 = scalar_select %p141, %s142, %s143
      %p147 = pneg %p141
      %p148 = scmp.eq.s32.totalorder %s28, 1
      %p149 = por %p147, %p148
      %p150 = scmp.ne.s32.totalorder %s142, %s145
      %p151 = scmp.eq.s32.totalorder %s28, 0
      %p152 = por %p150, %p151
      %p153 = scmp.ne.s32.totalorder %s142, %s145
      %p154 = scmp.eq.s32.totalorder %s33, 1
      %p155 = por %p153, %p154
      %p156 = scmp.ne.s32.totalorder %s145, %s146
      %p157 = scmp.eq.s32.totalorder %s33, 0
      %p158 = por %p156, %p157
      %p159 = scmp.ne.s32.totalorder %s145, %s146
      %p160 = scmp.eq.s32.totalorder %s34, 1
      %p161 = por %p159, %p160
      %p163 = scmp.ne.s32.totalorder %s146, %s162
      %p164 = scmp.eq.s32.totalorder %s34, 0
      %p165 = por %p163, %p164
      %s166 = ssub.s32 %s28, %s35
      %p167 = scmp.eq.s32.totalorder %s166, 0
      %s169 = sadd.s32 %s168, 1
      %s170 = scalar_select %p167, %s168, %s169
      %p173 = pneg %p167
      %p174 = scmp.eq.s32.totalorder %s28, 1
      %p175 = por %p173, %p174
      %p176 = scmp.ne.s32.totalorder %s168, %s171
      %p177 = scmp.eq.s32.totalorder %s28, 0
      %p178 = por %p176, %p177
      %p179 = scmp.ne.s32.totalorder %s168, %s171
      %p180 = scmp.eq.s32.totalorder %s33, 1
      %p181 = por %p179, %p180
      %p182 = scmp.ne.s32.totalorder %s171, %s172
      %p183 = scmp.eq.s32.totalorder %s33, 0
      %p184 = por %p182, %p183
      %p185 = scmp.ne.s32.totalorder %s171, %s172
      %p186 = scmp.eq.s32.totalorder %s34, 1
      %p187 = por %p185, %p186
      %p189 = scmp.ne.s32.totalorder %s172, %s188
      %p190 = scmp.eq.s32.totalorder %s34, 0
      %p191 = por %p189, %p190
      %s192 = ssub.s32 %s28, %s35
      %p193 = scmp.eq.s32.totalorder %s192, 0
      %s195 = sadd.s32 %s194, 1
      %s196 = scalar_select %p193, %s194, %s195
      %p199 = pneg %p193
      %p200 = scmp.eq.s32.totalorder %s28, 1
      %p201 = por %p199, %p200
      %p202 = scmp.ne.s32.totalorder %s194, %s197
      %p203 = scmp.eq.s32.totalorder %s28, 0
      %p204 = por %p202, %p203
      %p205 = scmp.ne.s32.totalorder %s194, %s197
      %p206 = scmp.eq.s32.totalorder %s33, 1
      %p207 = por %p205, %p206
      %p208 = scmp.ne.s32.totalorder %s197, %s198
      %p209 = scmp.eq.s32.totalorder %s33, 0
      %p210 = por %p208, %p209
      %p211 = scmp.ne.s32.totalorder %s197, %s198
      %p212 = scmp.eq.s32.totalorder %s34, 1
      %p213 = por %p211, %p212
      %p215 = scmp.ne.s32.totalorder %s198, %s214
      %p216 = scmp.eq.s32.totalorder %s34, 0
      %p217 = por %p215, %p216
      %p218 = scmp.le.s32.totalorder 1, %s28
      %p219 = scmp.lt.s32.totalorder %s28, 3
      %p220 = pnand %p218, %p219
      %p221 = pneg %p220
      // Predicated region
      $region9: #{tpu_custom_call.1} parent=5 // pred_check
        _
      $region10: #{tpu_custom_call.1} parent=5 // pred_check_branch
        %223 = sbr.rel (%p220) target = $region12
      $region11: #{tpu_custom_call.1} parent=5 // pred_region
        %s224 = ssub.s32 %s28, 1
      $region12: #{tpu_custom_call.1} parent=5 // pred_fallthru
        _
      %p225 = scmp.lt.s32.totalorder %s28, 2
      // Predicated region
      $region13: #{tpu_custom_call.1} parent=5 // pred_check
        %p226 = pneg %p225
      $region14: #{tpu_custom_call.1} parent=5 // pred_check_branch
        %228 = sbr.rel (%p226) target = $region16
      $region15: #{tpu_custom_call.1} parent=5 // pred_region
        // Predicated region
        $region17: #{tpu_custom_call.1} parent=15 // pred_check
          %p229 = pneg %p48
        $region18: #{tpu_custom_call.1} parent=15 // pred_check_branch
          %231 = sbr.rel (%p229) target = $region20
        $region19: #{tpu_custom_call.1} parent=15 // pred_region
          %s232 = sand.u32 %s38, 1
          %s233 = scalar_lea.sflag [#allocation3], %s232
          %s234 = sand.u32 %s38, 1
          %s235 = smul.addr %s234, 24
          %s236 = scalar_lea.vmem [#allocation2], %s235
          %s238 = ssub.s32 384, 384
          %239 = vsyncadd %s233, %s238
          %s240 = smul.addr %s28, 128
          %s241 = scalar_lea.hbm %s0, %s240
          %s242 = sshll.u32 %s236, 4
          %s243 = int_to_ptr.vmem [resolvable:$true] %s242
          %248 = dma.hbm_to_vmem [thread:$0]  %s241, 384, %s243, %s233, 256, 128, 8
        $region20: #{tpu_custom_call.1} parent=15 // pred_fallthru
          _
        // Predicated region
        $region21: #{tpu_custom_call.1} parent=15 // pred_check
          %p249 = pneg %p74
        $region22: #{tpu_custom_call.1} parent=15 // pred_check_branch
          %251 = sbr.rel (%p249) target = $region24
        $region23: #{tpu_custom_call.1} parent=15 // pred_region
          %s252 = sand.u32 %s28, 1
          %s253 = scalar_lea.sflag [#allocation6], %s252
          %s254 = sand.u32 %s64, 1
          %s255 = smul.addr %s254, 4
          %s256 = scalar_lea.vmem [#allocation5], %s255
          %s258 = ssub.s32 64, 64
          %259 = vsyncadd %s253, %s258
          %s260 = smul.addr %s28, 64
          %s261 = scalar_lea.hbm %s1, %s260
          %s263 = sshll.u32 %s256, 4
          %s264 = int_to_ptr.vmem [resolvable:$true] %s263
          %266 = dma.hbm_to_vmem [thread:$0]  %s261, 64, %s264, %s253
        $region24: #{tpu_custom_call.1} parent=15 // pred_fallthru
          _
        // Predicated region
        $region25: #{tpu_custom_call.1} parent=15 // pred_check
          %p267 = pneg %p100
        $region26: #{tpu_custom_call.1} parent=15 // pred_check_branch
          %269 = sbr.rel (%p267) target = $region28
        $region27: #{tpu_custom_call.1} parent=15 // pred_region
          %s270 = sand.u32 %s28, 1
          %s271 = scalar_lea.sflag [#allocation6], %s270
          %s272 = sand.u32 %s90, 1
          %s273 = smul.addr %s272, 24
          %s274 = scalar_lea.vmem [#allocation7], %s273
          %s276 = ssub.s32 384, 384
          %277 = vsyncadd %s271, %s276
          %s278 = smul.addr %s28, 128
          %s279 = scalar_lea.hbm %s2, %s278
          %s280 = sshll.u32 %s274, 4
          %s281 = int_to_ptr.vmem [resolvable:$true] %s280
          %286 = dma.hbm_to_vmem [thread:$0]  %s279, 384, %s281, %s271, 256, 128, 8
        $region28: #{tpu_custom_call.1} parent=15 // pred_fallthru
          _
        // Predicated region
        $region29: #{tpu_custom_call.1} parent=15 // pred_check
          %p287 = pneg %p126
        $region30: #{tpu_custom_call.1} parent=15 // pred_check_branch
          %289 = sbr.rel (%p287) target = $region32
        $region31: #{tpu_custom_call.1} parent=15 // pred_region
          %s290 = sand.u32 %s28, 1
          %s291 = scalar_lea.sflag [#allocation9], %s290
          %s292 = sand.u32 %s116, 1
          %s293 = smul.addr %s292, 4
          %s294 = scalar_lea.vmem [#allocation8], %s293
          %s296 = ssub.s32 64, 64
          %297 = vsyncadd %s291, %s296
          %s298 = smul.addr %s28, 64
          %s299 = scalar_lea.hbm %s3, %s298
          %s301 = sshll.u32 %s294, 4
          %s302 = int_to_ptr.vmem [resolvable:$true] %s301
          %304 = dma.hbm_to_vmem [thread:$0]  %s299, 64, %s302, %s291
        $region32: #{tpu_custom_call.1} parent=15 // pred_fallthru
          _
        // Predicated region
        $region33: #{tpu_custom_call.1} parent=15 // pred_check
          %p305 = pneg %p152
        $region34: #{tpu_custom_call.1} parent=15 // pred_check_branch
          %307 = sbr.rel (%p305) target = $region36
        $region35: #{tpu_custom_call.1} parent=15 // pred_region
          %s308 = sand.u32 %s28, 1
          %s309 = scalar_lea.sflag [#allocation9], %s308
          %s310 = sand.u32 %s142, 1
          %s311 = smul.addr %s310, 8
          %s312 = scalar_lea.vmem [#allocation10], %s311
          %s314 = ssub.s32 128, 128
          %315 = vsyncadd %s309, %s314
          %s316 = smul.addr %s28, 128
          %s317 = scalar_lea.hbm %s4, %s316
          %s319 = sshll.u32 %s312, 4
          %s320 = int_to_ptr.vmem [resolvable:$true] %s319
          %322 = dma.hbm_to_vmem [thread:$0]  %s317, 128, %s320, %s309
        $region36: #{tpu_custom_call.1} parent=15 // pred_fallthru
          _
      $region16: #{tpu_custom_call.1} parent=5 // pred_fallthru
        _
      %p323 = scmp.le.s32.totalorder 1, %s28
      %p324 = scmp.lt.s32.totalorder %s28, 3
      %p325 = pnand %p323, %p324
      %p326 = pneg %p325
      // Predicated region
      $region37: #{tpu_custom_call.1} parent=5 // pred_check
        _
      $region38: #{tpu_custom_call.1} parent=5 // pred_check_branch
        %328 = sbr.rel (%p325) target = $region40
      $region39: #{tpu_custom_call.1} parent=5 // pred_region
        %s329 = ssub.s32 %s28, 1
        %s330 = sand.u32 %s41, 1
        %s331 = scalar_lea.sflag [#allocation3], %s330
        %s332 = sand.u32 %s41, 1
        %s333 = smul.addr %s332, 24
        %s334 = scalar_lea.vmem [#allocation2], %s333
        // Predicated region
        $region41: #{tpu_custom_call.1} parent=39 // pred_check
          %p335 = pneg %p54
        $region42: #{tpu_custom_call.1} parent=39 // pred_check_branch
          %337 = sbr.rel (%p335) target = $region44
        $region43: #{tpu_custom_call.1} parent=39 // pred_region
          %338 = dma.done %s331, 384
        $region44: #{tpu_custom_call.1} parent=39 // pred_fallthru
          _
        %s339 = sand.u32 %s33, 1
        %s340 = scalar_lea.sflag [#allocation6], %s339
        %s341 = sand.u32 %s67, 1
        %s342 = smul.addr %s341, 4
        %s343 = scalar_lea.vmem [#allocation5], %s342
        // Predicated region
        $region45: #{tpu_custom_call.1} parent=39 // pred_check
          %p344 = pneg %p80
        $region46: #{tpu_custom_call.1} parent=39 // pred_check_branch
          %346 = sbr.rel (%p344) target = $region48
        $region47: #{tpu_custom_call.1} parent=39 // pred_region
          %347 = dma.done %s340, 64
        $region48: #{tpu_custom_call.1} parent=39 // pred_fallthru
          _
        %s348 = sand.u32 %s33, 1
        %s349 = scalar_lea.sflag [#allocation6], %s348
        %s350 = sand.u32 %s93, 1
        %s351 = smul.addr %s350, 24
        %s352 = scalar_lea.vmem [#allocation7], %s351
        // Predicated region
        $region49: #{tpu_custom_call.1} parent=39 // pred_check
          %p353 = pneg %p106
        $region50: #{tpu_custom_call.1} parent=39 // pred_check_branch
          %355 = sbr.rel (%p353) target = $region52
        $region51: #{tpu_custom_call.1} parent=39 // pred_region
          %356 = dma.done %s349, 384
        $region52: #{tpu_custom_call.1} parent=39 // pred_fallthru
          _
        %s357 = sand.u32 %s33, 1
        %s358 = scalar_lea.sflag [#allocation9], %s357
        %s359 = sand.u32 %s119, 1
        %s360 = smul.addr %s359, 4
        %s361 = scalar_lea.vmem [#allocation8], %s360
        // Predicated region
        $region53: #{tpu_custom_call.1} parent=39 // pred_check
          %p362 = pneg %p132
        $region54: #{tpu_custom_call.1} parent=39 // pred_check_branch
          %364 = sbr.rel (%p362) target = $region56
        $region55: #{tpu_custom_call.1} parent=39 // pred_region
          %365 = dma.done %s358, 64
        $region56: #{tpu_custom_call.1} parent=39 // pred_fallthru
          _
        %s366 = sand.u32 %s33, 1
        %s367 = scalar_lea.sflag [#allocation9], %s366
        %s368 = sand.u32 %s145, 1
        %s369 = smul.addr %s368, 8
        %s370 = scalar_lea.vmem [#allocation10], %s369
        // Predicated region
        $region57: #{tpu_custom_call.1} parent=39 // pred_check
          %p371 = pneg %p158
        $region58: #{tpu_custom_call.1} parent=39 // pred_check_branch
          %373 = sbr.rel (%p371) target = $region60
        $region59: #{tpu_custom_call.1} parent=39 // pred_region
          %374 = dma.done %s367, 128
        $region60: #{tpu_custom_call.1} parent=39 // pred_fallthru
          _
        %s375 = sand.u32 %s41, 1
        %s376 = scalar_lea.sflag [#allocation3], %s375
        %s377 = sand.u32 %s41, 1
        %s378 = smul.addr %s377, 24
        %s379 = scalar_lea.vmem [#allocation2], %s378
        %p380 = pneg %p54
        %p381 = pneg %p51
        %s382 = sand.u32 %s33, 1
        %s383 = scalar_lea.sflag [#allocation6], %s382
        %s384 = sand.u32 %s67, 1
        %s385 = smul.addr %s384, 4
        %s386 = scalar_lea.vmem [#allocation5], %s385
        %p387 = pneg %p80
        %p388 = pneg %p77
        %s389 = sand.u32 %s33, 1
        %s390 = scalar_lea.sflag [#allocation6], %s389
        %s391 = sand.u32 %s93, 1
        %s392 = smul.addr %s391, 24
        %s393 = scalar_lea.vmem [#allocation7], %s392
        %p394 = pneg %p106
        %p395 = pneg %p103
        %s396 = sand.u32 %s33, 1
        %s397 = scalar_lea.sflag [#allocation9], %s396
        %s398 = sand.u32 %s119, 1
        %s399 = smul.addr %s398, 4
        %s400 = scalar_lea.vmem [#allocation8], %s399
        %p401 = pneg %p132
        %p402 = pneg %p129
        %s403 = sand.u32 %s33, 1
        %s404 = scalar_lea.sflag [#allocation9], %s403
        %s405 = sand.u32 %s145, 1
        %s406 = smul.addr %s405, 8
        %s407 = scalar_lea.vmem [#allocation10], %s406
        %p408 = pneg %p158
        %p409 = pneg %p155
        %p410 = pneg %p184
        %p411 = pneg %p181
        %s412 = sand.u32 %s171, 1
        %s413 = scalar_lea.sflag [#allocation4], %s412
        %s414 = sand.u32 %s171, 1
        %s415 = scalar_lea.vmem [#allocation11], %s414
        %p416 = pneg %p210
        %p417 = pneg %p207
        %s418 = sand.u32 %s197, 1
        %s419 = scalar_lea.sflag [#allocation13], %s418
        %s420 = sand.u32 %s197, 1
        %s421 = scalar_lea.vmem [#allocation12], %s420
        %v422 = vld [vmem:[%s334] sm:$0xff]
        %v423 = vld [vmem:[%s334 + $0x8] sm:$0xff]
        %v424 = vld [vmem:[%s334 + $0x10] sm:$0xff]
        %v425 = vld [vmem:[%s343] sm:$0x7]
        %v426 = vld [vmem:[%s352] sm:$0xff]
        %v427 = vld [vmem:[%s352 + $0x8] sm:$0xff]
        %v428 = vld [vmem:[%s352 + $0x10] sm:$0xff]
        %v429 = vld [vmem:[%s361] sm:$0x7]
        %v432 = vunpack.c.l.s4 1966171168
        %v433 = vunpack.c.0.s8 %v432
        %v434 = vlaneseq
        %v435 = vshrl.u32 %v434, 7
        %v436 = vsub.s32 %v433, %v435
        %v437 = vrot.slane %v425, %v436
        %v438 = vcombine.high %v437, %v437
        %v440 = vunpack.c.l.s4 1966171168
        %v441 = vunpack.c.0.s8 %v440
        %v442 = vlaneseq
        %v443 = vshrl.u32 %v442, 7
        %v444 = vsub.s32 %v441, %v443
        %v445 = vrot.slane %v437, %v444
        %v447 = vunpack.c.l.s4 1966171168
        %v448 = vunpack.c.0.s8 %v447
        %v449 = vlaneseq
        %v450 = vshrl.u32 %v449, 7
        %v451 = vsub.s32 %v448, %v450
        %v452 = vrot.slane %v438, %v451
        %v453 = vcombine.high %v445, %v445
        %v454 = vlaneseq
        %v455 = vshrl.u32 %v454, 7
        %v456 = vsub.s32 0, %v455
        %v457 = vrot.slane %v445, %v456
        %v458 = vlaneseq
        %v459 = vshrl.u32 %v458, 7
        %v460 = vsub.s32 0, %v459
        %v461 = vrot.slane %v452, %v460
        %v462 = vlaneseq
        %v463 = vshrl.u32 %v462, 7
        %v464 = vsub.s32 0, %v463
        %v465 = vrot.slane %v453, %v464
        %v469 = vsub.f32 %v422, %v457
        %v470 = vsub.f32 %v423, %v461
        %v471 = vsub.f32 %v424, %v465
        %v474 = vunpack.c.l.s4 1966171168
        %v475 = vunpack.c.0.s8 %v474
        %v476 = vlaneseq
        %v477 = vshrl.u32 %v476, 7
        %v478 = vsub.s32 %v475, %v477
        %v479 = vrot.slane %v429, %v478
        %v480 = vcombine.high %v479, %v479
        %v482 = vunpack.c.l.s4 1966171168
        %v483 = vunpack.c.0.s8 %v482
        %v484 = vlaneseq
        %v485 = vshrl.u32 %v484, 7
        %v486 = vsub.s32 %v483, %v485
        %v487 = vrot.slane %v479, %v486
        %v489 = vunpack.c.l.s4 1966171168
        %v490 = vunpack.c.0.s8 %v489
        %v491 = vlaneseq
        %v492 = vshrl.u32 %v491, 7
        %v493 = vsub.s32 %v490, %v492
        %v494 = vrot.slane %v480, %v493
        %v495 = vcombine.high %v487, %v487
        %v496 = vlaneseq
        %v497 = vshrl.u32 %v496, 7
        %v498 = vsub.s32 0, %v497
        %v499 = vrot.slane %v487, %v498
        %v500 = vlaneseq
        %v501 = vshrl.u32 %v500, 7
        %v502 = vsub.s32 0, %v501
        %v503 = vrot.slane %v494, %v502
        %v504 = vlaneseq
        %v505 = vshrl.u32 %v504, 7
        %v506 = vsub.s32 0, %v505
        %v507 = vrot.slane %v495, %v506
        %v511 = vsub.f32 %v426, %v499
        %v512 = vsub.f32 %v427, %v503
        %v513 = vsub.f32 %v428, %v507
        %v514 = vmul.f32 %v469, %v511
        %v515 = vrot.slane %v514, 4
        %v516 = vadd.f32 %v514, %v515
        %v517 = vrot.slane %v516, 2
        %v518 = vadd.f32 %v516, %v517
        %v519 = vrot.slane %v518, 1
        %v520 = vadd.f32 %v518, %v519
        %v521 = vadd.f32 %v520, 1e-06
        %v522 = vmul.f32 %v469, %v512
        %v523 = vrot.slane %v522, 4
        %v524 = vadd.f32 %v522, %v523
        %v525 = vrot.slane %v524, 2
        %v526 = vadd.f32 %v524, %v525
        %v527 = vrot.slane %v526, 1
        %v528 = vadd.f32 %v526, %v527
        %v529 = vadd.f32 %v528, 0.0
        %v530 = vmul.f32 %v469, %v513
        %v531 = vrot.slane %v530, 4
        %v532 = vadd.f32 %v530, %v531
        %v533 = vrot.slane %v532, 2
        %v534 = vadd.f32 %v532, %v533
        %v535 = vrot.slane %v534, 1
        %v536 = vadd.f32 %v534, %v535
        %v537 = vadd.f32 %v536, 0.0
        %v538 = vmul.f32 %v470, %v511
        %v539 = vrot.slane %v538, 4
        %v540 = vadd.f32 %v538, %v539
        %v541 = vrot.slane %v540, 2
        %v542 = vadd.f32 %v540, %v541
        %v543 = vrot.slane %v542, 1
        %v544 = vadd.f32 %v542, %v543
        %v545 = vadd.f32 %v544, 0.0
        %v546 = vmul.f32 %v470, %v512
        %v547 = vrot.slane %v546, 4
        %v548 = vadd.f32 %v546, %v547
        %v549 = vrot.slane %v548, 2
        %v550 = vadd.f32 %v548, %v549
        %v551 = vrot.slane %v550, 1
        %v552 = vadd.f32 %v550, %v551
        %v553 = vadd.f32 %v552, 1e-06
        %v554 = vmul.f32 %v470, %v513
        %v555 = vrot.slane %v554, 4
        %v556 = vadd.f32 %v554, %v555
        %v557 = vrot.slane %v556, 2
        %v558 = vadd.f32 %v556, %v557
        %v559 = vrot.slane %v558, 1
        %v560 = vadd.f32 %v558, %v559
        %v561 = vadd.f32 %v560, 0.0
        %v562 = vmul.f32 %v471, %v511
        %v563 = vrot.slane %v562, 4
        %v564 = vadd.f32 %v562, %v563
        %v565 = vrot.slane %v564, 2
        %v566 = vadd.f32 %v564, %v565
        %v567 = vrot.slane %v566, 1
        %v568 = vadd.f32 %v566, %v567
        %v569 = vadd.f32 %v568, 0.0
        %v570 = vmul.f32 %v471, %v512
        %v571 = vrot.slane %v570, 4
        %v572 = vadd.f32 %v570, %v571
        %v573 = vrot.slane %v572, 2
        %v574 = vadd.f32 %v572, %v573
        %v575 = vrot.slane %v574, 1
        %v576 = vadd.f32 %v574, %v575
        %v577 = vadd.f32 %v576, 0.0
        %v578 = vmul.f32 %v471, %v513
        %v579 = vrot.slane %v578, 4
        %v580 = vadd.f32 %v578, %v579
        %v581 = vrot.slane %v580, 2
        %v582 = vadd.f32 %v580, %v581
        %v583 = vrot.slane %v582, 1
        %v584 = vadd.f32 %v582, %v583
        %v585 = vadd.f32 %v584, 1e-06
        %v586 = vmul.f32 %v521, %v521
        %v587 = vmul.f32 %v529, %v529
        %v588 = vadd.f32 %v586, %v587
        %v589 = vmul.f32 %v537, %v537
        %v590 = vadd.f32 %v588, %v589
        %v591 = vmul.f32 %v545, %v545
        %v592 = vadd.f32 %v590, %v591
        %v593 = vmul.f32 %v553, %v553
        %v594 = vadd.f32 %v592, %v593
        %v595 = vmul.f32 %v561, %v561
        %v596 = vadd.f32 %v594, %v595
        %v597 = vmul.f32 %v569, %v569
        %v598 = vadd.f32 %v596, %v597
        %v599 = vmul.f32 %v577, %v577
        %v600 = vadd.f32 %v598, %v599
        %v601 = vmul.f32 %v585, %v585
        %v602 = vadd.f32 %v600, %v601
        %v603 = vadd.f32 %v602, 1e-30
        %v604 = vrsqrt.pop %v603
        %v605 = vmul.f32 %v521, %v604
        %v606 = vmul.f32 %v529, %v604
        %v607 = vmul.f32 %v537, %v604
        %v608 = vmul.f32 %v545, %v604
        %v609 = vmul.f32 %v553, %v604
        %v610 = vmul.f32 %v561, %v604
        %v611 = vmul.f32 %v569, %v604
        %v612 = vmul.f32 %v577, %v604
        %v613 = vmul.f32 %v585, %v604
        %v614 = vmul.f32 %v605, %v605
        %v615 = vmul.f32 %v608, %v608
        %v616 = vadd.f32 %v614, %v615
        %v617 = vmul.f32 %v611, %v611
        %v618 = vadd.f32 %v616, %v617
        %v619 = vmul.f32 %v605, %v606
        %v620 = vmul.f32 %v608, %v609
        %v621 = vadd.f32 %v619, %v620
        %v622 = vmul.f32 %v611, %v612
        %v623 = vadd.f32 %v621, %v622
        %v624 = vmul.f32 %v605, %v607
        %v625 = vmul.f32 %v608, %v610
        %v626 = vadd.f32 %v624, %v625
        %v627 = vmul.f32 %v611, %v613
        %v628 = vadd.f32 %v626, %v627
        %v629 = vmul.f32 %v606, %v606
        %v630 = vmul.f32 %v609, %v609
        %v631 = vadd.f32 %v629, %v630
        %v632 = vmul.f32 %v612, %v612
        %v633 = vadd.f32 %v631, %v632
        %v634 = vmul.f32 %v606, %v607
        %v635 = vmul.f32 %v609, %v610
        %v636 = vadd.f32 %v634, %v635
        %v637 = vmul.f32 %v612, %v613
        %v638 = vadd.f32 %v636, %v637
        %v639 = vmul.f32 %v607, %v607
        %v640 = vmul.f32 %v610, %v610
        %v641 = vadd.f32 %v639, %v640
        %v642 = vmul.f32 %v613, %v613
        %v643 = vadd.f32 %v641, %v642
        %v644 = vmul.f32 %v618, 0.5
        %v645 = vsub.f32 1.5, %v644
        %v646 = vmul.f32 %v623, -0.5
        %v647 = vmul.f32 %v628, -0.5
        %v648 = vmul.f32 %v633, 0.5
        %v649 = vsub.f32 1.5, %v648
        %v650 = vmul.f32 %v638, -0.5
        %v651 = vmul.f32 %v643, 0.5
        %v652 = vsub.f32 1.5, %v651
        %v653 = vmul.f32 %v605, %v645
        %v654 = vmul.f32 %v606, %v646
        %v655 = vadd.f32 %v653, %v654
        %v656 = vmul.f32 %v607, %v647
        %v657 = vadd.f32 %v655, %v656
        %v658 = vmul.f32 %v605, %v646
        %v659 = vmul.f32 %v606, %v649
        %v660 = vadd.f32 %v658, %v659
        %v661 = vmul.f32 %v607, %v650
        %v662 = vadd.f32 %v660, %v661
        %v663 = vmul.f32 %v605, %v647
        %v664 = vmul.f32 %v606, %v650
        %v665 = vadd.f32 %v663, %v664
        %v666 = vmul.f32 %v607, %v652
        %v667 = vadd.f32 %v665, %v666
        %v668 = vmul.f32 %v608, %v645
        %v669 = vmul.f32 %v609, %v646
        %v670 = vadd.f32 %v668, %v669
        %v671 = vmul.f32 %v610, %v647
        %v672 = vadd.f32 %v670, %v671
        %v673 = vmul.f32 %v608, %v646
        %v674 = vmul.f32 %v609, %v649
        %v675 = vadd.f32 %v673, %v674
        %v676 = vmul.f32 %v610, %v650
        %v677 = vadd.f32 %v675, %v676
        %v678 = vmul.f32 %v608, %v647
        %v679 = vmul.f32 %v609, %v650
        %v680 = vadd.f32 %v678, %v679
        %v681 = vmul.f32 %v610, %v652
        %v682 = vadd.f32 %v680, %v681
        %v683 = vmul.f32 %v611, %v645
        %v684 = vmul.f32 %v612, %v646
        %v685 = vadd.f32 %v683, %v684
        %v686 = vmul.f32 %v613, %v647
        %v687 = vadd.f32 %v685, %v686
        %v688 = vmul.f32 %v611, %v646
        %v689 = vmul.f32 %v612, %v649
        %v690 = vadd.f32 %v688, %v689
        %v691 = vmul.f32 %v613, %v650
        %v692 = vadd.f32 %v690, %v691
        %v693 = vmul.f32 %v611, %v647
        %v694 = vmul.f32 %v612, %v650
        %v695 = vadd.f32 %v693, %v694
        %v696 = vmul.f32 %v613, %v652
        %v697 = vadd.f32 %v695, %v696
        %v698 = vmul.f32 %v657, %v657
        %v699 = vmul.f32 %v672, %v672
        %v700 = vadd.f32 %v698, %v699
        %v701 = vmul.f32 %v687, %v687
        %v702 = vadd.f32 %v700, %v701
        %v703 = vmul.f32 %v657, %v662
        %v704 = vmul.f32 %v672, %v677
        %v705 = vadd.f32 %v703, %v704
        %v706 = vmul.f32 %v687, %v692
        %v707 = vadd.f32 %v705, %v706
        %v708 = vmul.f32 %v657, %v667
        %v709 = vmul.f32 %v672, %v682
        %v710 = vadd.f32 %v708, %v709
        %v711 = vmul.f32 %v687, %v697
        %v712 = vadd.f32 %v710, %v711
        %v713 = vmul.f32 %v662, %v662
        %v714 = vmul.f32 %v677, %v677
        %v715 = vadd.f32 %v713, %v714
        %v716 = vmul.f32 %v692, %v692
        %v717 = vadd.f32 %v715, %v716
        %v718 = vmul.f32 %v662, %v667
        %v719 = vmul.f32 %v677, %v682
        %v720 = vadd.f32 %v718, %v719
        %v721 = vmul.f32 %v692, %v697
        %v722 = vadd.f32 %v720, %v721
        %v723 = vmul.f32 %v667, %v667
        %v724 = vmul.f32 %v682, %v682
        %v725 = vadd.f32 %v723, %v724
        %v726 = vmul.f32 %v697, %v697
        %v727 = vadd.f32 %v725, %v726
        %v728 = vmul.f32 %v702, 0.5
        %v729 = vsub.f32 1.5, %v728
        %v730 = vmul.f32 %v707, -0.5
        %v731 = vmul.f32 %v712, -0.5
        %v732 = vmul.f32 %v717, 0.5
        %v733 = vsub.f32 1.5, %v732
        %v734 = vmul.f32 %v722, -0.5
        %v735 = vmul.f32 %v727, 0.5
        %v736 = vsub.f32 1.5, %v735
        %v737 = vmul.f32 %v657, %v729
        %v738 = vmul.f32 %v662, %v730
        %v739 = vadd.f32 %v737, %v738
        %v740 = vmul.f32 %v667, %v731
        %v741 = vadd.f32 %v739, %v740
        %v742 = vmul.f32 %v657, %v730
        %v743 = vmul.f32 %v662, %v733
        %v744 = vadd.f32 %v742, %v743
        %v745 = vmul.f32 %v667, %v734
        %v746 = vadd.f32 %v744, %v745
        %v747 = vmul.f32 %v657, %v731
        %v748 = vmul.f32 %v662, %v734
        %v749 = vadd.f32 %v747, %v748
        %v750 = vmul.f32 %v667, %v736
        %v751 = vadd.f32 %v749, %v750
        %v752 = vmul.f32 %v672, %v729
        %v753 = vmul.f32 %v677, %v730
        %v754 = vadd.f32 %v752, %v753
        %v755 = vmul.f32 %v682, %v731
        %v756 = vadd.f32 %v754, %v755
        %v757 = vmul.f32 %v672, %v730
        %v758 = vmul.f32 %v677, %v733
        %v759 = vadd.f32 %v757, %v758
        %v760 = vmul.f32 %v682, %v734
        %v761 = vadd.f32 %v759, %v760
        %v762 = vmul.f32 %v672, %v731
        %v763 = vmul.f32 %v677, %v734
        %v764 = vadd.f32 %v762, %v763
        %v765 = vmul.f32 %v682, %v736
        %v766 = vadd.f32 %v764, %v765
        %v767 = vmul.f32 %v687, %v729
        %v768 = vmul.f32 %v692, %v730
        %v769 = vadd.f32 %v767, %v768
        %v770 = vmul.f32 %v697, %v731
        %v771 = vadd.f32 %v769, %v770
        %v772 = vmul.f32 %v687, %v730
        %v773 = vmul.f32 %v692, %v733
        %v774 = vadd.f32 %v772, %v773
        %v775 = vmul.f32 %v697, %v734
        %v776 = vadd.f32 %v774, %v775
        %v777 = vmul.f32 %v687, %v731
        %v778 = vmul.f32 %v692, %v734
        %v779 = vadd.f32 %v777, %v778
        %v780 = vmul.f32 %v697, %v736
        %v781 = vadd.f32 %v779, %v780
        %v782 = vmul.f32 %v741, %v741
        %v783 = vmul.f32 %v756, %v756
        %v784 = vadd.f32 %v782, %v783
        %v785 = vmul.f32 %v771, %v771
        %v786 = vadd.f32 %v784, %v785
        %v787 = vmul.f32 %v741, %v746
        %v788 = vmul.f32 %v756, %v761
        %v789 = vadd.f32 %v787, %v788
        %v790 = vmul.f32 %v771, %v776
        %v791 = vadd.f32 %v789, %v790
        %v792 = vmul.f32 %v741, %v751
        %v793 = vmul.f32 %v756, %v766
        %v794 = vadd.f32 %v792, %v793
        %v795 = vmul.f32 %v771, %v781
        %v796 = vadd.f32 %v794, %v795
        %v797 = vmul.f32 %v746, %v746
        %v798 = vmul.f32 %v761, %v761
        %v799 = vadd.f32 %v797, %v798
        %v800 = vmul.f32 %v776, %v776
        %v801 = vadd.f32 %v799, %v800
        %v802 = vmul.f32 %v746, %v751
        %v803 = vmul.f32 %v761, %v766
        %v804 = vadd.f32 %v802, %v803
        %v805 = vmul.f32 %v776, %v781
        %v806 = vadd.f32 %v804, %v805
        %v807 = vmul.f32 %v751, %v751
        %v808 = vmul.f32 %v766, %v766
        %v809 = vadd.f32 %v807, %v808
        %v810 = vmul.f32 %v781, %v781
        %v811 = vadd.f32 %v809, %v810
        %v812 = vmul.f32 %v786, 0.5
        %v813 = vsub.f32 1.5, %v812
        %v814 = vmul.f32 %v791, -0.5
        %v815 = vmul.f32 %v796, -0.5
        %v816 = vmul.f32 %v801, 0.5
        %v817 = vsub.f32 1.5, %v816
        %v818 = vmul.f32 %v806, -0.5
        %v819 = vmul.f32 %v811, 0.5
        %v820 = vsub.f32 1.5, %v819
        %v821 = vmul.f32 %v741, %v813
        %v822 = vmul.f32 %v746, %v814
        %v823 = vadd.f32 %v821, %v822
        %v824 = vmul.f32 %v751, %v815
        %v825 = vadd.f32 %v823, %v824
        %v826 = vmul.f32 %v741, %v814
        %v827 = vmul.f32 %v746, %v817
        %v828 = vadd.f32 %v826, %v827
        %v829 = vmul.f32 %v751, %v818
        %v830 = vadd.f32 %v828, %v829
        %v831 = vmul.f32 %v741, %v815
        %v832 = vmul.f32 %v746, %v818
        %v833 = vadd.f32 %v831, %v832
        %v834 = vmul.f32 %v751, %v820
        %v835 = vadd.f32 %v833, %v834
        %v836 = vmul.f32 %v756, %v813
        %v837 = vmul.f32 %v761, %v814
        %v838 = vadd.f32 %v836, %v837
        %v839 = vmul.f32 %v766, %v815
        %v840 = vadd.f32 %v838, %v839
        %v841 = vmul.f32 %v756, %v814
        %v842 = vmul.f32 %v761, %v817
        %v843 = vadd.f32 %v841, %v842
        %v844 = vmul.f32 %v766, %v818
        %v845 = vadd.f32 %v843, %v844
        %v846 = vmul.f32 %v756, %v815
        %v847 = vmul.f32 %v761, %v818
        %v848 = vadd.f32 %v846, %v847
        %v849 = vmul.f32 %v766, %v820
        %v850 = vadd.f32 %v848, %v849
        %v851 = vmul.f32 %v771, %v813
        %v852 = vmul.f32 %v776, %v814
        %v853 = vadd.f32 %v851, %v852
        %v854 = vmul.f32 %v781, %v815
        %v855 = vadd.f32 %v853, %v854
        %v856 = vmul.f32 %v771, %v814
        %v857 = vmul.f32 %v776, %v817
        %v858 = vadd.f32 %v856, %v857
        %v859 = vmul.f32 %v781, %v818
        %v860 = vadd.f32 %v858, %v859
        %v861 = vmul.f32 %v771, %v815
        %v862 = vmul.f32 %v776, %v818
        %v863 = vadd.f32 %v861, %v862
        %v864 = vmul.f32 %v781, %v820
        %v865 = vadd.f32 %v863, %v864
        %v866 = vmul.f32 %v825, %v825
        %v867 = vmul.f32 %v840, %v840
        %v868 = vadd.f32 %v866, %v867
        %v869 = vmul.f32 %v855, %v855
        %v870 = vadd.f32 %v868, %v869
        %v871 = vmul.f32 %v825, %v830
        %v872 = vmul.f32 %v840, %v845
        %v873 = vadd.f32 %v871, %v872
        %v874 = vmul.f32 %v855, %v860
        %v875 = vadd.f32 %v873, %v874
        %v876 = vmul.f32 %v825, %v835
        %v877 = vmul.f32 %v840, %v850
        %v878 = vadd.f32 %v876, %v877
        %v879 = vmul.f32 %v855, %v865
        %v880 = vadd.f32 %v878, %v879
        %v881 = vmul.f32 %v830, %v830
        %v882 = vmul.f32 %v845, %v845
        %v883 = vadd.f32 %v881, %v882
        %v884 = vmul.f32 %v860, %v860
        %v885 = vadd.f32 %v883, %v884
        %v886 = vmul.f32 %v830, %v835
        %v887 = vmul.f32 %v845, %v850
        %v888 = vadd.f32 %v886, %v887
        %v889 = vmul.f32 %v860, %v865
        %v890 = vadd.f32 %v888, %v889
        %v891 = vmul.f32 %v835, %v835
        %v892 = vmul.f32 %v850, %v850
        %v893 = vadd.f32 %v891, %v892
        %v894 = vmul.f32 %v865, %v865
        %v895 = vadd.f32 %v893, %v894
        %v896 = vmul.f32 %v870, 0.5
        %v897 = vsub.f32 1.5, %v896
        %v898 = vmul.f32 %v875, -0.5
        %v899 = vmul.f32 %v880, -0.5
        %v900 = vmul.f32 %v885, 0.5
        %v901 = vsub.f32 1.5, %v900
        %v902 = vmul.f32 %v890, -0.5
        %v903 = vmul.f32 %v895, 0.5
        %v904 = vsub.f32 1.5, %v903
        %v905 = vmul.f32 %v825, %v897
        %v906 = vmul.f32 %v830, %v898
        %v907 = vadd.f32 %v905, %v906
        %v908 = vmul.f32 %v835, %v899
        %v909 = vadd.f32 %v907, %v908
        %v910 = vmul.f32 %v825, %v898
        %v911 = vmul.f32 %v830, %v901
        %v912 = vadd.f32 %v910, %v911
        %v913 = vmul.f32 %v835, %v902
        %v914 = vadd.f32 %v912, %v913
        %v915 = vmul.f32 %v825, %v899
        %v916 = vmul.f32 %v830, %v902
        %v917 = vadd.f32 %v915, %v916
        %v918 = vmul.f32 %v835, %v904
        %v919 = vadd.f32 %v917, %v918
        %v920 = vmul.f32 %v840, %v897
        %v921 = vmul.f32 %v845, %v898
        %v922 = vadd.f32 %v920, %v921
        %v923 = vmul.f32 %v850, %v899
        %v924 = vadd.f32 %v922, %v923
        %v925 = vmul.f32 %v840, %v898
        %v926 = vmul.f32 %v845, %v901
        %v927 = vadd.f32 %v925, %v926
        %v928 = vmul.f32 %v850, %v902
        %v929 = vadd.f32 %v927, %v928
        %v930 = vmul.f32 %v840, %v899
        %v931 = vmul.f32 %v845, %v902
        %v932 = vadd.f32 %v930, %v931
        %v933 = vmul.f32 %v850, %v904
        %v934 = vadd.f32 %v932, %v933
        %v935 = vmul.f32 %v855, %v897
        %v936 = vmul.f32 %v860, %v898
        %v937 = vadd.f32 %v935, %v936
        %v938 = vmul.f32 %v865, %v899
        %v939 = vadd.f32 %v937, %v938
        %v940 = vmul.f32 %v855, %v898
        %v941 = vmul.f32 %v860, %v901
        %v942 = vadd.f32 %v940, %v941
        %v943 = vmul.f32 %v865, %v902
        %v944 = vadd.f32 %v942, %v943
        %v945 = vmul.f32 %v855, %v899
        %v946 = vmul.f32 %v860, %v902
        %v947 = vadd.f32 %v945, %v946
        %v948 = vmul.f32 %v865, %v904
        %v949 = vadd.f32 %v947, %v948
        %v950 = vmul.f32 %v909, %v909
        %v951 = vmul.f32 %v924, %v924
        %v952 = vadd.f32 %v950, %v951
        %v953 = vmul.f32 %v939, %v939
        %v954 = vadd.f32 %v952, %v953
        %v955 = vmul.f32 %v909, %v914
        %v956 = vmul.f32 %v924, %v929
        %v957 = vadd.f32 %v955, %v956
        %v958 = vmul.f32 %v939, %v944
        %v959 = vadd.f32 %v957, %v958
        %v960 = vmul.f32 %v909, %v919
        %v961 = vmul.f32 %v924, %v934
        %v962 = vadd.f32 %v960, %v961
        %v963 = vmul.f32 %v939, %v949
        %v964 = vadd.f32 %v962, %v963
        %v965 = vmul.f32 %v914, %v914
        %v966 = vmul.f32 %v929, %v929
        %v967 = vadd.f32 %v965, %v966
        %v968 = vmul.f32 %v944, %v944
        %v969 = vadd.f32 %v967, %v968
        %v970 = vmul.f32 %v914, %v919
        %v971 = vmul.f32 %v929, %v934
        %v972 = vadd.f32 %v970, %v971
        %v973 = vmul.f32 %v944, %v949
        %v974 = vadd.f32 %v972, %v973
        %v975 = vmul.f32 %v919, %v919
        %v976 = vmul.f32 %v934, %v934
        %v977 = vadd.f32 %v975, %v976
        %v978 = vmul.f32 %v949, %v949
        %v979 = vadd.f32 %v977, %v978
        %v980 = vmul.f32 %v954, 0.5
        %v981 = vsub.f32 1.5, %v980
        %v982 = vmul.f32 %v959, -0.5
        %v983 = vmul.f32 %v964, -0.5
        %v984 = vmul.f32 %v969, 0.5
        %v985 = vsub.f32 1.5, %v984
        %v986 = vmul.f32 %v974, -0.5
        %v987 = vmul.f32 %v979, 0.5
        %v988 = vsub.f32 1.5, %v987
        %v989 = vmul.f32 %v909, %v981
        %v990 = vmul.f32 %v914, %v982
        %v991 = vadd.f32 %v989, %v990
        %v992 = vmul.f32 %v919, %v983
        %v993 = vadd.f32 %v991, %v992
        %v994 = vmul.f32 %v909, %v982
        %v995 = vmul.f32 %v914, %v985
        %v996 = vadd.f32 %v994, %v995
        %v997 = vmul.f32 %v919, %v986
        %v998 = vadd.f32 %v996, %v997
        %v999 = vmul.f32 %v909, %v983
        %v1000 = vmul.f32 %v914, %v986
        %v1001 = vadd.f32 %v999, %v1000
        %v1002 = vmul.f32 %v919, %v988
        %v1003 = vadd.f32 %v1001, %v1002
        %v1004 = vmul.f32 %v924, %v981
        %v1005 = vmul.f32 %v929, %v982
        %v1006 = vadd.f32 %v1004, %v1005
        %v1007 = vmul.f32 %v934, %v983
        %v1008 = vadd.f32 %v1006, %v1007
        %v1009 = vmul.f32 %v924, %v982
        %v1010 = vmul.f32 %v929, %v985
        %v1011 = vadd.f32 %v1009, %v1010
        %v1012 = vmul.f32 %v934, %v986
        %v1013 = vadd.f32 %v1011, %v1012
        %v1014 = vmul.f32 %v924, %v983
        %v1015 = vmul.f32 %v929, %v986
        %v1016 = vadd.f32 %v1014, %v1015
        %v1017 = vmul.f32 %v934, %v988
        %v1018 = vadd.f32 %v1016, %v1017
        %v1019 = vmul.f32 %v939, %v981
        %v1020 = vmul.f32 %v944, %v982
        %v1021 = vadd.f32 %v1019, %v1020
        %v1022 = vmul.f32 %v949, %v983
        %v1023 = vadd.f32 %v1021, %v1022
        %v1024 = vmul.f32 %v939, %v982
        %v1025 = vmul.f32 %v944, %v985
        %v1026 = vadd.f32 %v1024, %v1025
        %v1027 = vmul.f32 %v949, %v986
        %v1028 = vadd.f32 %v1026, %v1027
        %v1029 = vmul.f32 %v939, %v983
        %v1030 = vmul.f32 %v944, %v986
        %v1031 = vadd.f32 %v1029, %v1030
        %v1032 = vmul.f32 %v949, %v988
        %v1033 = vadd.f32 %v1031, %v1032
        %v1034 = vmul.f32 %v993, %v993
        %v1035 = vmul.f32 %v1008, %v1008
        %v1036 = vadd.f32 %v1034, %v1035
        %v1037 = vmul.f32 %v1023, %v1023
        %v1038 = vadd.f32 %v1036, %v1037
        %v1039 = vmul.f32 %v993, %v998
        %v1040 = vmul.f32 %v1008, %v1013
        %v1041 = vadd.f32 %v1039, %v1040
        %v1042 = vmul.f32 %v1023, %v1028
        %v1043 = vadd.f32 %v1041, %v1042
        %v1044 = vmul.f32 %v993, %v1003
        %v1045 = vmul.f32 %v1008, %v1018
        %v1046 = vadd.f32 %v1044, %v1045
        %v1047 = vmul.f32 %v1023, %v1033
        %v1048 = vadd.f32 %v1046, %v1047
        %v1049 = vmul.f32 %v998, %v998
        %v1050 = vmul.f32 %v1013, %v1013
        %v1051 = vadd.f32 %v1049, %v1050
        %v1052 = vmul.f32 %v1028, %v1028
        %v1053 = vadd.f32 %v1051, %v1052
        %v1054 = vmul.f32 %v998, %v1003
        %v1055 = vmul.f32 %v1013, %v1018
        %v1056 = vadd.f32 %v1054, %v1055
        %v1057 = vmul.f32 %v1028, %v1033
        %v1058 = vadd.f32 %v1056, %v1057
        %v1059 = vmul.f32 %v1003, %v1003
        %v1060 = vmul.f32 %v1018, %v1018
        %v1061 = vadd.f32 %v1059, %v1060
        %v1062 = vmul.f32 %v1033, %v1033
        %v1063 = vadd.f32 %v1061, %v1062
        %v1064 = vmul.f32 %v1038, 0.5
        %v1065 = vsub.f32 1.5, %v1064
        %v1066 = vmul.f32 %v1043, -0.5
        %v1067 = vmul.f32 %v1048, -0.5
        %v1068 = vmul.f32 %v1053, 0.5
        %v1069 = vsub.f32 1.5, %v1068
        %v1070 = vmul.f32 %v1058, -0.5
        %v1071 = vmul.f32 %v1063, 0.5
        %v1072 = vsub.f32 1.5, %v1071
        %v1073 = vmul.f32 %v993, %v1065
        %v1074 = vmul.f32 %v998, %v1066
        %v1075 = vadd.f32 %v1073, %v1074
        %v1076 = vmul.f32 %v1003, %v1067
        %v1077 = vadd.f32 %v1075, %v1076
        %v1078 = vmul.f32 %v993, %v1066
        %v1079 = vmul.f32 %v998, %v1069
        %v1080 = vadd.f32 %v1078, %v1079
        %v1081 = vmul.f32 %v1003, %v1070
        %v1082 = vadd.f32 %v1080, %v1081
        %v1083 = vmul.f32 %v993, %v1067
        %v1084 = vmul.f32 %v998, %v1070
        %v1085 = vadd.f32 %v1083, %v1084
        %v1086 = vmul.f32 %v1003, %v1072
        %v1087 = vadd.f32 %v1085, %v1086
        %v1088 = vmul.f32 %v1008, %v1065
        %v1089 = vmul.f32 %v1013, %v1066
        %v1090 = vadd.f32 %v1088, %v1089
        %v1091 = vmul.f32 %v1018, %v1067
        %v1092 = vadd.f32 %v1090, %v1091
        %v1093 = vmul.f32 %v1008, %v1066
        %v1094 = vmul.f32 %v1013, %v1069
        %v1095 = vadd.f32 %v1093, %v1094
        %v1096 = vmul.f32 %v1018, %v1070
        %v1097 = vadd.f32 %v1095, %v1096
        %v1098 = vmul.f32 %v1008, %v1067
        %v1099 = vmul.f32 %v1013, %v1070
        %v1100 = vadd.f32 %v1098, %v1099
        %v1101 = vmul.f32 %v1018, %v1072
        %v1102 = vadd.f32 %v1100, %v1101
        %v1103 = vmul.f32 %v1023, %v1065
        %v1104 = vmul.f32 %v1028, %v1066
        %v1105 = vadd.f32 %v1103, %v1104
        %v1106 = vmul.f32 %v1033, %v1067
        %v1107 = vadd.f32 %v1105, %v1106
        %v1108 = vmul.f32 %v1023, %v1066
        %v1109 = vmul.f32 %v1028, %v1069
        %v1110 = vadd.f32 %v1108, %v1109
        %v1111 = vmul.f32 %v1033, %v1070
        %v1112 = vadd.f32 %v1110, %v1111
        %v1113 = vmul.f32 %v1023, %v1067
        %v1114 = vmul.f32 %v1028, %v1070
        %v1115 = vadd.f32 %v1113, %v1114
        %v1116 = vmul.f32 %v1033, %v1072
        %v1117 = vadd.f32 %v1115, %v1116
        %v1118 = vmul.f32 %v1077, %v1077
        %v1119 = vmul.f32 %v1092, %v1092
        %v1120 = vadd.f32 %v1118, %v1119
        %v1121 = vmul.f32 %v1107, %v1107
        %v1122 = vadd.f32 %v1120, %v1121
        %v1123 = vmul.f32 %v1077, %v1082
        %v1124 = vmul.f32 %v1092, %v1097
        %v1125 = vadd.f32 %v1123, %v1124
        %v1126 = vmul.f32 %v1107, %v1112
        %v1127 = vadd.f32 %v1125, %v1126
        %v1128 = vmul.f32 %v1077, %v1087
        %v1129 = vmul.f32 %v1092, %v1102
        %v1130 = vadd.f32 %v1128, %v1129
        %v1131 = vmul.f32 %v1107, %v1117
        %v1132 = vadd.f32 %v1130, %v1131
        %v1133 = vmul.f32 %v1082, %v1082
        %v1134 = vmul.f32 %v1097, %v1097
        %v1135 = vadd.f32 %v1133, %v1134
        %v1136 = vmul.f32 %v1112, %v1112
        %v1137 = vadd.f32 %v1135, %v1136
        %v1138 = vmul.f32 %v1082, %v1087
        %v1139 = vmul.f32 %v1097, %v1102
        %v1140 = vadd.f32 %v1138, %v1139
        %v1141 = vmul.f32 %v1112, %v1117
        %v1142 = vadd.f32 %v1140, %v1141
        %v1143 = vmul.f32 %v1087, %v1087
        %v1144 = vmul.f32 %v1102, %v1102
        %v1145 = vadd.f32 %v1143, %v1144
        %v1146 = vmul.f32 %v1117, %v1117
        %v1147 = vadd.f32 %v1145, %v1146
        %v1148 = vmul.f32 %v1122, 0.5
        %v1149 = vsub.f32 1.5, %v1148
        %v1150 = vmul.f32 %v1127, -0.5
        %v1151 = vmul.f32 %v1132, -0.5
        %v1152 = vmul.f32 %v1137, 0.5
        %v1153 = vsub.f32 1.5, %v1152
        %v1154 = vmul.f32 %v1142, -0.5
        %v1155 = vmul.f32 %v1147, 0.5
        %v1156 = vsub.f32 1.5, %v1155
        %v1157 = vmul.f32 %v1077, %v1149
        %v1158 = vmul.f32 %v1082, %v1150
        %v1159 = vadd.f32 %v1157, %v1158
        %v1160 = vmul.f32 %v1087, %v1151
        %v1161 = vadd.f32 %v1159, %v1160
        %v1162 = vmul.f32 %v1077, %v1150
        %v1163 = vmul.f32 %v1082, %v1153
        %v1164 = vadd.f32 %v1162, %v1163
        %v1165 = vmul.f32 %v1087, %v1154
        %v1166 = vadd.f32 %v1164, %v1165
        %v1167 = vmul.f32 %v1077, %v1151
        %v1168 = vmul.f32 %v1082, %v1154
        %v1169 = vadd.f32 %v1167, %v1168
        %v1170 = vmul.f32 %v1087, %v1156
        %v1171 = vadd.f32 %v1169, %v1170
        %v1172 = vmul.f32 %v1092, %v1149
        %v1173 = vmul.f32 %v1097, %v1150
        %v1174 = vadd.f32 %v1172, %v1173
        %v1175 = vmul.f32 %v1102, %v1151
        %v1176 = vadd.f32 %v1174, %v1175
        %v1177 = vmul.f32 %v1092, %v1150
        %v1178 = vmul.f32 %v1097, %v1153
        %v1179 = vadd.f32 %v1177, %v1178
        %v1180 = vmul.f32 %v1102, %v1154
        %v1181 = vadd.f32 %v1179, %v1180
        %v1182 = vmul.f32 %v1092, %v1151
        %v1183 = vmul.f32 %v1097, %v1154
        %v1184 = vadd.f32 %v1182, %v1183
        %v1185 = vmul.f32 %v1102, %v1156
        %v1186 = vadd.f32 %v1184, %v1185
        %v1187 = vmul.f32 %v1107, %v1149
        %v1188 = vmul.f32 %v1112, %v1150
        %v1189 = vadd.f32 %v1187, %v1188
        %v1190 = vmul.f32 %v1117, %v1151
        %v1191 = vadd.f32 %v1189, %v1190
        %v1192 = vmul.f32 %v1107, %v1150
        %v1193 = vmul.f32 %v1112, %v1153
        %v1194 = vadd.f32 %v1192, %v1193
        %v1195 = vmul.f32 %v1117, %v1154
        %v1196 = vadd.f32 %v1194, %v1195
        %v1197 = vmul.f32 %v1107, %v1151
        %v1198 = vmul.f32 %v1112, %v1154
        %v1199 = vadd.f32 %v1197, %v1198
        %v1200 = vmul.f32 %v1117, %v1156
        %v1201 = vadd.f32 %v1199, %v1200
        %v1202 = vmul.f32 %v1161, %v1161
        %v1203 = vmul.f32 %v1176, %v1176
        %v1204 = vadd.f32 %v1202, %v1203
        %v1205 = vmul.f32 %v1191, %v1191
        %v1206 = vadd.f32 %v1204, %v1205
        %v1207 = vmul.f32 %v1161, %v1166
        %v1208 = vmul.f32 %v1176, %v1181
        %v1209 = vadd.f32 %v1207, %v1208
        %v1210 = vmul.f32 %v1191, %v1196
        %v1211 = vadd.f32 %v1209, %v1210
        %v1212 = vmul.f32 %v1161, %v1171
        %v1213 = vmul.f32 %v1176, %v1186
        %v1214 = vadd.f32 %v1212, %v1213
        %v1215 = vmul.f32 %v1191, %v1201
        %v1216 = vadd.f32 %v1214, %v1215
        %v1217 = vmul.f32 %v1166, %v1166
        %v1218 = vmul.f32 %v1181, %v1181
        %v1219 = vadd.f32 %v1217, %v1218
        %v1220 = vmul.f32 %v1196, %v1196
        %v1221 = vadd.f32 %v1219, %v1220
        %v1222 = vmul.f32 %v1166, %v1171
        %v1223 = vmul.f32 %v1181, %v1186
        %v1224 = vadd.f32 %v1222, %v1223
        %v1225 = vmul.f32 %v1196, %v1201
        %v1226 = vadd.f32 %v1224, %v1225
        %v1227 = vmul.f32 %v1171, %v1171
        %v1228 = vmul.f32 %v1186, %v1186
        %v1229 = vadd.f32 %v1227, %v1228
        %v1230 = vmul.f32 %v1201, %v1201
        %v1231 = vadd.f32 %v1229, %v1230
        %v1232 = vmul.f32 %v1206, 0.5
        %v1233 = vsub.f32 1.5, %v1232
        %v1234 = vmul.f32 %v1211, -0.5
        %v1235 = vmul.f32 %v1216, -0.5
        %v1236 = vmul.f32 %v1221, 0.5
        %v1237 = vsub.f32 1.5, %v1236
        %v1238 = vmul.f32 %v1226, -0.5
        %v1239 = vmul.f32 %v1231, 0.5
        %v1240 = vsub.f32 1.5, %v1239
        %v1241 = vmul.f32 %v1161, %v1233
        %v1242 = vmul.f32 %v1166, %v1234
        %v1243 = vadd.f32 %v1241, %v1242
        %v1244 = vmul.f32 %v1171, %v1235
        %v1245 = vadd.f32 %v1243, %v1244
        %v1246 = vmul.f32 %v1161, %v1234
        %v1247 = vmul.f32 %v1166, %v1237
        %v1248 = vadd.f32 %v1246, %v1247
        %v1249 = vmul.f32 %v1171, %v1238
        %v1250 = vadd.f32 %v1248, %v1249
        %v1251 = vmul.f32 %v1161, %v1235
        %v1252 = vmul.f32 %v1166, %v1238
        %v1253 = vadd.f32 %v1251, %v1252
        %v1254 = vmul.f32 %v1171, %v1240
        %v1255 = vadd.f32 %v1253, %v1254
        %v1256 = vmul.f32 %v1176, %v1233
        %v1257 = vmul.f32 %v1181, %v1234
        %v1258 = vadd.f32 %v1256, %v1257
        %v1259 = vmul.f32 %v1186, %v1235
        %v1260 = vadd.f32 %v1258, %v1259
        %v1261 = vmul.f32 %v1176, %v1234
        %v1262 = vmul.f32 %v1181, %v1237
        %v1263 = vadd.f32 %v1261, %v1262
        %v1264 = vmul.f32 %v1186, %v1238
        %v1265 = vadd.f32 %v1263, %v1264
        %v1266 = vmul.f32 %v1176, %v1235
        %v1267 = vmul.f32 %v1181, %v1238
        %v1268 = vadd.f32 %v1266, %v1267
        %v1269 = vmul.f32 %v1186, %v1240
        %v1270 = vadd.f32 %v1268, %v1269
        %v1271 = vmul.f32 %v1191, %v1233
        %v1272 = vmul.f32 %v1196, %v1234
        %v1273 = vadd.f32 %v1271, %v1272
        %v1274 = vmul.f32 %v1201, %v1235
        %v1275 = vadd.f32 %v1273, %v1274
        %v1276 = vmul.f32 %v1191, %v1234
        %v1277 = vmul.f32 %v1196, %v1237
        %v1278 = vadd.f32 %v1276, %v1277
        %v1279 = vmul.f32 %v1201, %v1238
        %v1280 = vadd.f32 %v1278, %v1279
        %v1281 = vmul.f32 %v1191, %v1235
        %v1282 = vmul.f32 %v1196, %v1238
        %v1283 = vadd.f32 %v1281, %v1282
        %v1284 = vmul.f32 %v1201, %v1240
        %v1285 = vadd.f32 %v1283, %v1284
        %v1286 = vmul.f32 %v1245, %v1245
        %v1287 = vmul.f32 %v1260, %v1260
        %v1288 = vadd.f32 %v1286, %v1287
        %v1289 = vmul.f32 %v1275, %v1275
        %v1290 = vadd.f32 %v1288, %v1289
        %v1291 = vmul.f32 %v1245, %v1250
        %v1292 = vmul.f32 %v1260, %v1265
        %v1293 = vadd.f32 %v1291, %v1292
        %v1294 = vmul.f32 %v1275, %v1280
        %v1295 = vadd.f32 %v1293, %v1294
        %v1296 = vmul.f32 %v1245, %v1255
        %v1297 = vmul.f32 %v1260, %v1270
        %v1298 = vadd.f32 %v1296, %v1297
        %v1299 = vmul.f32 %v1275, %v1285
        %v1300 = vadd.f32 %v1298, %v1299
        %v1301 = vmul.f32 %v1250, %v1250
        %v1302 = vmul.f32 %v1265, %v1265
        %v1303 = vadd.f32 %v1301, %v1302
        %v1304 = vmul.f32 %v1280, %v1280
        %v1305 = vadd.f32 %v1303, %v1304
        %v1306 = vmul.f32 %v1250, %v1255
        %v1307 = vmul.f32 %v1265, %v1270
        %v1308 = vadd.f32 %v1306, %v1307
        %v1309 = vmul.f32 %v1280, %v1285
        %v1310 = vadd.f32 %v1308, %v1309
        %v1311 = vmul.f32 %v1255, %v1255
        %v1312 = vmul.f32 %v1270, %v1270
        %v1313 = vadd.f32 %v1311, %v1312
        %v1314 = vmul.f32 %v1285, %v1285
        %v1315 = vadd.f32 %v1313, %v1314
        %v1316 = vmul.f32 %v1290, 0.5
        %v1317 = vsub.f32 1.5, %v1316
        %v1318 = vmul.f32 %v1295, -0.5
        %v1319 = vmul.f32 %v1300, -0.5
        %v1320 = vmul.f32 %v1305, 0.5
        %v1321 = vsub.f32 1.5, %v1320
        %v1322 = vmul.f32 %v1310, -0.5
        %v1323 = vmul.f32 %v1315, 0.5
        %v1324 = vsub.f32 1.5, %v1323
        %v1325 = vmul.f32 %v1245, %v1317
        %v1326 = vmul.f32 %v1250, %v1318
        %v1327 = vadd.f32 %v1325, %v1326
        %v1328 = vmul.f32 %v1255, %v1319
        %v1329 = vadd.f32 %v1327, %v1328
        %v1330 = vmul.f32 %v1245, %v1318
        %v1331 = vmul.f32 %v1250, %v1321
        %v1332 = vadd.f32 %v1330, %v1331
        %v1333 = vmul.f32 %v1255, %v1322
        %v1334 = vadd.f32 %v1332, %v1333
        %v1335 = vmul.f32 %v1245, %v1319
        %v1336 = vmul.f32 %v1250, %v1322
        %v1337 = vadd.f32 %v1335, %v1336
        %v1338 = vmul.f32 %v1255, %v1324
        %v1339 = vadd.f32 %v1337, %v1338
        %v1340 = vmul.f32 %v1260, %v1317
        %v1341 = vmul.f32 %v1265, %v1318
        %v1342 = vadd.f32 %v1340, %v1341
        %v1343 = vmul.f32 %v1270, %v1319
        %v1344 = vadd.f32 %v1342, %v1343
        %v1345 = vmul.f32 %v1260, %v1318
        %v1346 = vmul.f32 %v1265, %v1321
        %v1347 = vadd.f32 %v1345, %v1346
        %v1348 = vmul.f32 %v1270, %v1322
        %v1349 = vadd.f32 %v1347, %v1348
        %v1350 = vmul.f32 %v1260, %v1319
        %v1351 = vmul.f32 %v1265, %v1322
        %v1352 = vadd.f32 %v1350, %v1351
        %v1353 = vmul.f32 %v1270, %v1324
        %v1354 = vadd.f32 %v1352, %v1353
        %v1355 = vmul.f32 %v1275, %v1317
        %v1356 = vmul.f32 %v1280, %v1318
        %v1357 = vadd.f32 %v1355, %v1356
        %v1358 = vmul.f32 %v1285, %v1319
        %v1359 = vadd.f32 %v1357, %v1358
        %v1360 = vmul.f32 %v1275, %v1318
        %v1361 = vmul.f32 %v1280, %v1321
        %v1362 = vadd.f32 %v1360, %v1361
        %v1363 = vmul.f32 %v1285, %v1322
        %v1364 = vadd.f32 %v1362, %v1363
        %v1365 = vmul.f32 %v1275, %v1319
        %v1366 = vmul.f32 %v1280, %v1322
        %v1367 = vadd.f32 %v1365, %v1366
        %v1368 = vmul.f32 %v1285, %v1324
        %v1369 = vadd.f32 %v1367, %v1368
        %v1370 = vmul.f32 %v1329, %v1329
        %v1371 = vmul.f32 %v1344, %v1344
        %v1372 = vadd.f32 %v1370, %v1371
        %v1373 = vmul.f32 %v1359, %v1359
        %v1374 = vadd.f32 %v1372, %v1373
        %v1375 = vmul.f32 %v1329, %v1334
        %v1376 = vmul.f32 %v1344, %v1349
        %v1377 = vadd.f32 %v1375, %v1376
        %v1378 = vmul.f32 %v1359, %v1364
        %v1379 = vadd.f32 %v1377, %v1378
        %v1380 = vmul.f32 %v1329, %v1339
        %v1381 = vmul.f32 %v1344, %v1354
        %v1382 = vadd.f32 %v1380, %v1381
        %v1383 = vmul.f32 %v1359, %v1369
        %v1384 = vadd.f32 %v1382, %v1383
        %v1385 = vmul.f32 %v1334, %v1334
        %v1386 = vmul.f32 %v1349, %v1349
        %v1387 = vadd.f32 %v1385, %v1386
        %v1388 = vmul.f32 %v1364, %v1364
        %v1389 = vadd.f32 %v1387, %v1388
        %v1390 = vmul.f32 %v1334, %v1339
        %v1391 = vmul.f32 %v1349, %v1354
        %v1392 = vadd.f32 %v1390, %v1391
        %v1393 = vmul.f32 %v1364, %v1369
        %v1394 = vadd.f32 %v1392, %v1393
        %v1395 = vmul.f32 %v1339, %v1339
        %v1396 = vmul.f32 %v1354, %v1354
        %v1397 = vadd.f32 %v1395, %v1396
        %v1398 = vmul.f32 %v1369, %v1369
        %v1399 = vadd.f32 %v1397, %v1398
        %v1400 = vmul.f32 %v1374, 0.5
        %v1401 = vsub.f32 1.5, %v1400
        %v1402 = vmul.f32 %v1379, -0.5
        %v1403 = vmul.f32 %v1384, -0.5
        %v1404 = vmul.f32 %v1389, 0.5
        %v1405 = vsub.f32 1.5, %v1404
        %v1406 = vmul.f32 %v1394, -0.5
        %v1407 = vmul.f32 %v1399, 0.5
        %v1408 = vsub.f32 1.5, %v1407
        %v1409 = vmul.f32 %v1329, %v1401
        %v1410 = vmul.f32 %v1334, %v1402
        %v1411 = vadd.f32 %v1409, %v1410
        %v1412 = vmul.f32 %v1339, %v1403
        %v1413 = vadd.f32 %v1411, %v1412
        %v1414 = vmul.f32 %v1329, %v1402
        %v1415 = vmul.f32 %v1334, %v1405
        %v1416 = vadd.f32 %v1414, %v1415
        %v1417 = vmul.f32 %v1339, %v1406
        %v1418 = vadd.f32 %v1416, %v1417
        %v1419 = vmul.f32 %v1329, %v1403
        %v1420 = vmul.f32 %v1334, %v1406
        %v1421 = vadd.f32 %v1419, %v1420
        %v1422 = vmul.f32 %v1339, %v1408
        %v1423 = vadd.f32 %v1421, %v1422
        %v1424 = vmul.f32 %v1344, %v1401
        %v1425 = vmul.f32 %v1349, %v1402
        %v1426 = vadd.f32 %v1424, %v1425
        %v1427 = vmul.f32 %v1354, %v1403
        %v1428 = vadd.f32 %v1426, %v1427
        %v1429 = vmul.f32 %v1344, %v1402
        %v1430 = vmul.f32 %v1349, %v1405
        %v1431 = vadd.f32 %v1429, %v1430
        %v1432 = vmul.f32 %v1354, %v1406
        %v1433 = vadd.f32 %v1431, %v1432
        %v1434 = vmul.f32 %v1344, %v1403
        %v1435 = vmul.f32 %v1349, %v1406
        %v1436 = vadd.f32 %v1434, %v1435
        %v1437 = vmul.f32 %v1354, %v1408
        %v1438 = vadd.f32 %v1436, %v1437
        %v1439 = vmul.f32 %v1359, %v1401
        %v1440 = vmul.f32 %v1364, %v1402
        %v1441 = vadd.f32 %v1439, %v1440
        %v1442 = vmul.f32 %v1369, %v1403
        %v1443 = vadd.f32 %v1441, %v1442
        %v1444 = vmul.f32 %v1359, %v1402
        %v1445 = vmul.f32 %v1364, %v1405
        %v1446 = vadd.f32 %v1444, %v1445
        %v1447 = vmul.f32 %v1369, %v1406
        %v1448 = vadd.f32 %v1446, %v1447
        %v1449 = vmul.f32 %v1359, %v1403
        %v1450 = vmul.f32 %v1364, %v1406
        %v1451 = vadd.f32 %v1449, %v1450
        %v1452 = vmul.f32 %v1369, %v1408
        %v1453 = vadd.f32 %v1451, %v1452
        %v1454 = vmul.f32 %v1413, %v1413
        %v1455 = vmul.f32 %v1428, %v1428
        %v1456 = vadd.f32 %v1454, %v1455
        %v1457 = vmul.f32 %v1443, %v1443
        %v1458 = vadd.f32 %v1456, %v1457
        %v1459 = vmul.f32 %v1413, %v1418
        %v1460 = vmul.f32 %v1428, %v1433
        %v1461 = vadd.f32 %v1459, %v1460
        %v1462 = vmul.f32 %v1443, %v1448
        %v1463 = vadd.f32 %v1461, %v1462
        %v1464 = vmul.f32 %v1413, %v1423
        %v1465 = vmul.f32 %v1428, %v1438
        %v1466 = vadd.f32 %v1464, %v1465
        %v1467 = vmul.f32 %v1443, %v1453
        %v1468 = vadd.f32 %v1466, %v1467
        %v1469 = vmul.f32 %v1418, %v1418
        %v1470 = vmul.f32 %v1433, %v1433
        %v1471 = vadd.f32 %v1469, %v1470
        %v1472 = vmul.f32 %v1448, %v1448
        %v1473 = vadd.f32 %v1471, %v1472
        %v1474 = vmul.f32 %v1418, %v1423
        %v1475 = vmul.f32 %v1433, %v1438
        %v1476 = vadd.f32 %v1474, %v1475
        %v1477 = vmul.f32 %v1448, %v1453
        %v1478 = vadd.f32 %v1476, %v1477
        %v1479 = vmul.f32 %v1423, %v1423
        %v1480 = vmul.f32 %v1438, %v1438
        %v1481 = vadd.f32 %v1479, %v1480
        %v1482 = vmul.f32 %v1453, %v1453
        %v1483 = vadd.f32 %v1481, %v1482
        %v1484 = vmul.f32 %v1458, 0.5
        %v1485 = vsub.f32 1.5, %v1484
        %v1486 = vmul.f32 %v1463, -0.5
        %v1487 = vmul.f32 %v1468, -0.5
        %v1488 = vmul.f32 %v1473, 0.5
        %v1489 = vsub.f32 1.5, %v1488
        %v1490 = vmul.f32 %v1478, -0.5
        %v1491 = vmul.f32 %v1483, 0.5
        %v1492 = vsub.f32 1.5, %v1491
        %v1493 = vmul.f32 %v1413, %v1485
        %v1494 = vmul.f32 %v1418, %v1486
        %v1495 = vadd.f32 %v1493, %v1494
        %v1496 = vmul.f32 %v1423, %v1487
        %v1497 = vadd.f32 %v1495, %v1496
        %v1498 = vmul.f32 %v1413, %v1486
        %v1499 = vmul.f32 %v1418, %v1489
        %v1500 = vadd.f32 %v1498, %v1499
        %v1501 = vmul.f32 %v1423, %v1490
        %v1502 = vadd.f32 %v1500, %v1501
        %v1503 = vmul.f32 %v1413, %v1487
        %v1504 = vmul.f32 %v1418, %v1490
        %v1505 = vadd.f32 %v1503, %v1504
        %v1506 = vmul.f32 %v1423, %v1492
        %v1507 = vadd.f32 %v1505, %v1506
        %v1508 = vmul.f32 %v1428, %v1485
        %v1509 = vmul.f32 %v1433, %v1486
        %v1510 = vadd.f32 %v1508, %v1509
        %v1511 = vmul.f32 %v1438, %v1487
        %v1512 = vadd.f32 %v1510, %v1511
        %v1513 = vmul.f32 %v1428, %v1486
        %v1514 = vmul.f32 %v1433, %v1489
        %v1515 = vadd.f32 %v1513, %v1514
        %v1516 = vmul.f32 %v1438, %v1490
        %v1517 = vadd.f32 %v1515, %v1516
        %v1518 = vmul.f32 %v1428, %v1487
        %v1519 = vmul.f32 %v1433, %v1490
        %v1520 = vadd.f32 %v1518, %v1519
        %v1521 = vmul.f32 %v1438, %v1492
        %v1522 = vadd.f32 %v1520, %v1521
        %v1523 = vmul.f32 %v1443, %v1485
        %v1524 = vmul.f32 %v1448, %v1486
        %v1525 = vadd.f32 %v1523, %v1524
        %v1526 = vmul.f32 %v1453, %v1487
        %v1527 = vadd.f32 %v1525, %v1526
        %v1528 = vmul.f32 %v1443, %v1486
        %v1529 = vmul.f32 %v1448, %v1489
        %v1530 = vadd.f32 %v1528, %v1529
        %v1531 = vmul.f32 %v1453, %v1490
        %v1532 = vadd.f32 %v1530, %v1531
        %v1533 = vmul.f32 %v1443, %v1487
        %v1534 = vmul.f32 %v1448, %v1490
        %v1535 = vadd.f32 %v1533, %v1534
        %v1536 = vmul.f32 %v1453, %v1492
        %v1537 = vadd.f32 %v1535, %v1536
        %v1538 = vmul.f32 %v1497, %v1497
        %v1539 = vmul.f32 %v1512, %v1512
        %v1540 = vadd.f32 %v1538, %v1539
        %v1541 = vmul.f32 %v1527, %v1527
        %v1542 = vadd.f32 %v1540, %v1541
        %v1543 = vmul.f32 %v1497, %v1502
        %v1544 = vmul.f32 %v1512, %v1517
        %v1545 = vadd.f32 %v1543, %v1544
        %v1546 = vmul.f32 %v1527, %v1532
        %v1547 = vadd.f32 %v1545, %v1546
        %v1548 = vmul.f32 %v1497, %v1507
        %v1549 = vmul.f32 %v1512, %v1522
        %v1550 = vadd.f32 %v1548, %v1549
        %v1551 = vmul.f32 %v1527, %v1537
        %v1552 = vadd.f32 %v1550, %v1551
        %v1553 = vmul.f32 %v1502, %v1502
        %v1554 = vmul.f32 %v1517, %v1517
        %v1555 = vadd.f32 %v1553, %v1554
        %v1556 = vmul.f32 %v1532, %v1532
        %v1557 = vadd.f32 %v1555, %v1556
        %v1558 = vmul.f32 %v1502, %v1507
        %v1559 = vmul.f32 %v1517, %v1522
        %v1560 = vadd.f32 %v1558, %v1559
        %v1561 = vmul.f32 %v1532, %v1537
        %v1562 = vadd.f32 %v1560, %v1561
        %v1563 = vmul.f32 %v1507, %v1507
        %v1564 = vmul.f32 %v1522, %v1522
        %v1565 = vadd.f32 %v1563, %v1564
        %v1566 = vmul.f32 %v1537, %v1537
        %v1567 = vadd.f32 %v1565, %v1566
        %v1568 = vmul.f32 %v1542, 0.5
        %v1569 = vsub.f32 1.5, %v1568
        %v1570 = vmul.f32 %v1547, -0.5
        %v1571 = vmul.f32 %v1552, -0.5
        %v1572 = vmul.f32 %v1557, 0.5
        %v1573 = vsub.f32 1.5, %v1572
        %v1574 = vmul.f32 %v1562, -0.5
        %v1575 = vmul.f32 %v1567, 0.5
        %v1576 = vsub.f32 1.5, %v1575
        %v1577 = vmul.f32 %v1497, %v1569
        %v1578 = vmul.f32 %v1502, %v1570
        %v1579 = vadd.f32 %v1577, %v1578
        %v1580 = vmul.f32 %v1507, %v1571
        %v1581 = vadd.f32 %v1579, %v1580
        %v1582 = vmul.f32 %v1497, %v1570
        %v1583 = vmul.f32 %v1502, %v1573
        %v1584 = vadd.f32 %v1582, %v1583
        %v1585 = vmul.f32 %v1507, %v1574
        %v1586 = vadd.f32 %v1584, %v1585
        %v1587 = vmul.f32 %v1497, %v1571
        %v1588 = vmul.f32 %v1502, %v1574
        %v1589 = vadd.f32 %v1587, %v1588
        %v1590 = vmul.f32 %v1507, %v1576
        %v1591 = vadd.f32 %v1589, %v1590
        %v1592 = vmul.f32 %v1512, %v1569
        %v1593 = vmul.f32 %v1517, %v1570
        %v1594 = vadd.f32 %v1592, %v1593
        %v1595 = vmul.f32 %v1522, %v1571
        %v1596 = vadd.f32 %v1594, %v1595
        %v1597 = vmul.f32 %v1512, %v1570
        %v1598 = vmul.f32 %v1517, %v1573
        %v1599 = vadd.f32 %v1597, %v1598
        %v1600 = vmul.f32 %v1522, %v1574
        %v1601 = vadd.f32 %v1599, %v1600
        %v1602 = vmul.f32 %v1512, %v1571
        %v1603 = vmul.f32 %v1517, %v1574
        %v1604 = vadd.f32 %v1602, %v1603
        %v1605 = vmul.f32 %v1522, %v1576
        %v1606 = vadd.f32 %v1604, %v1605
        %v1607 = vmul.f32 %v1527, %v1569
        %v1608 = vmul.f32 %v1532, %v1570
        %v1609 = vadd.f32 %v1607, %v1608
        %v1610 = vmul.f32 %v1537, %v1571
        %v1611 = vadd.f32 %v1609, %v1610
        %v1612 = vmul.f32 %v1527, %v1570
        %v1613 = vmul.f32 %v1532, %v1573
        %v1614 = vadd.f32 %v1612, %v1613
        %v1615 = vmul.f32 %v1537, %v1574
        %v1616 = vadd.f32 %v1614, %v1615
        %v1617 = vmul.f32 %v1527, %v1571
        %v1618 = vmul.f32 %v1532, %v1574
        %v1619 = vadd.f32 %v1617, %v1618
        %v1620 = vmul.f32 %v1537, %v1576
        %v1621 = vadd.f32 %v1619, %v1620
        %v1622 = vmul.f32 %v1581, %v1581
        %v1623 = vmul.f32 %v1596, %v1596
        %v1624 = vadd.f32 %v1622, %v1623
        %v1625 = vmul.f32 %v1611, %v1611
        %v1626 = vadd.f32 %v1624, %v1625
        %v1627 = vmul.f32 %v1581, %v1586
        %v1628 = vmul.f32 %v1596, %v1601
        %v1629 = vadd.f32 %v1627, %v1628
        %v1630 = vmul.f32 %v1611, %v1616
        %v1631 = vadd.f32 %v1629, %v1630
        %v1632 = vmul.f32 %v1581, %v1591
        %v1633 = vmul.f32 %v1596, %v1606
        %v1634 = vadd.f32 %v1632, %v1633
        %v1635 = vmul.f32 %v1611, %v1621
        %v1636 = vadd.f32 %v1634, %v1635
        %v1637 = vmul.f32 %v1586, %v1586
        %v1638 = vmul.f32 %v1601, %v1601
        %v1639 = vadd.f32 %v1637, %v1638
        %v1640 = vmul.f32 %v1616, %v1616
        %v1641 = vadd.f32 %v1639, %v1640
        %v1642 = vmul.f32 %v1586, %v1591
        %v1643 = vmul.f32 %v1601, %v1606
        %v1644 = vadd.f32 %v1642, %v1643
        %v1645 = vmul.f32 %v1616, %v1621
        %v1646 = vadd.f32 %v1644, %v1645
        %v1647 = vmul.f32 %v1591, %v1591
        %v1648 = vmul.f32 %v1606, %v1606
        %v1649 = vadd.f32 %v1647, %v1648
        %v1650 = vmul.f32 %v1621, %v1621
        %v1651 = vadd.f32 %v1649, %v1650
        %v1652 = vmul.f32 %v1626, 0.5
        %v1653 = vsub.f32 1.5, %v1652
        %v1654 = vmul.f32 %v1631, -0.5
        %v1655 = vmul.f32 %v1636, -0.5
        %v1656 = vmul.f32 %v1641, 0.5
        %v1657 = vsub.f32 1.5, %v1656
        %v1658 = vmul.f32 %v1646, -0.5
        %v1659 = vmul.f32 %v1651, 0.5
        %v1660 = vsub.f32 1.5, %v1659
        %v1661 = vmul.f32 %v1581, %v1653
        %v1662 = vmul.f32 %v1586, %v1654
        %v1663 = vadd.f32 %v1661, %v1662
        %v1664 = vmul.f32 %v1591, %v1655
        %v1665 = vadd.f32 %v1663, %v1664
        %v1666 = vmul.f32 %v1581, %v1654
        %v1667 = vmul.f32 %v1586, %v1657
        %v1668 = vadd.f32 %v1666, %v1667
        %v1669 = vmul.f32 %v1591, %v1658
        %v1670 = vadd.f32 %v1668, %v1669
        %v1671 = vmul.f32 %v1581, %v1655
        %v1672 = vmul.f32 %v1586, %v1658
        %v1673 = vadd.f32 %v1671, %v1672
        %v1674 = vmul.f32 %v1591, %v1660
        %v1675 = vadd.f32 %v1673, %v1674
        %v1676 = vmul.f32 %v1596, %v1653
        %v1677 = vmul.f32 %v1601, %v1654
        %v1678 = vadd.f32 %v1676, %v1677
        %v1679 = vmul.f32 %v1606, %v1655
        %v1680 = vadd.f32 %v1678, %v1679
        %v1681 = vmul.f32 %v1596, %v1654
        %v1682 = vmul.f32 %v1601, %v1657
        %v1683 = vadd.f32 %v1681, %v1682
        %v1684 = vmul.f32 %v1606, %v1658
        %v1685 = vadd.f32 %v1683, %v1684
        %v1686 = vmul.f32 %v1596, %v1655
        %v1687 = vmul.f32 %v1601, %v1658
        %v1688 = vadd.f32 %v1686, %v1687
        %v1689 = vmul.f32 %v1606, %v1660
        %v1690 = vadd.f32 %v1688, %v1689
        %v1691 = vmul.f32 %v1611, %v1653
        %v1692 = vmul.f32 %v1616, %v1654
        %v1693 = vadd.f32 %v1691, %v1692
        %v1694 = vmul.f32 %v1621, %v1655
        %v1695 = vadd.f32 %v1693, %v1694
        %v1696 = vmul.f32 %v1611, %v1654
        %v1697 = vmul.f32 %v1616, %v1657
        %v1698 = vadd.f32 %v1696, %v1697
        %v1699 = vmul.f32 %v1621, %v1658
        %v1700 = vadd.f32 %v1698, %v1699
        %v1701 = vmul.f32 %v1611, %v1655
        %v1702 = vmul.f32 %v1616, %v1658
        %v1703 = vadd.f32 %v1701, %v1702
        %v1704 = vmul.f32 %v1621, %v1660
        %v1705 = vadd.f32 %v1703, %v1704
        %v1706 = vmul.f32 %v1665, %v1665
        %v1707 = vmul.f32 %v1680, %v1680
        %v1708 = vadd.f32 %v1706, %v1707
        %v1709 = vmul.f32 %v1695, %v1695
        %v1710 = vadd.f32 %v1708, %v1709
        %v1711 = vmul.f32 %v1665, %v1670
        %v1712 = vmul.f32 %v1680, %v1685
        %v1713 = vadd.f32 %v1711, %v1712
        %v1714 = vmul.f32 %v1695, %v1700
        %v1715 = vadd.f32 %v1713, %v1714
        %v1716 = vmul.f32 %v1665, %v1675
        %v1717 = vmul.f32 %v1680, %v1690
        %v1718 = vadd.f32 %v1716, %v1717
        %v1719 = vmul.f32 %v1695, %v1705
        %v1720 = vadd.f32 %v1718, %v1719
        %v1721 = vmul.f32 %v1670, %v1670
        %v1722 = vmul.f32 %v1685, %v1685
        %v1723 = vadd.f32 %v1721, %v1722
        %v1724 = vmul.f32 %v1700, %v1700
        %v1725 = vadd.f32 %v1723, %v1724
        %v1726 = vmul.f32 %v1670, %v1675
        %v1727 = vmul.f32 %v1685, %v1690
        %v1728 = vadd.f32 %v1726, %v1727
        %v1729 = vmul.f32 %v1700, %v1705
        %v1730 = vadd.f32 %v1728, %v1729
        %v1731 = vmul.f32 %v1675, %v1675
        %v1732 = vmul.f32 %v1690, %v1690
        %v1733 = vadd.f32 %v1731, %v1732
        %v1734 = vmul.f32 %v1705, %v1705
        %v1735 = vadd.f32 %v1733, %v1734
        %v1736 = vmul.f32 %v1710, 0.5
        %v1737 = vsub.f32 1.5, %v1736
        %v1738 = vmul.f32 %v1715, -0.5
        %v1739 = vmul.f32 %v1720, -0.5
        %v1740 = vmul.f32 %v1725, 0.5
        %v1741 = vsub.f32 1.5, %v1740
        %v1742 = vmul.f32 %v1730, -0.5
        %v1743 = vmul.f32 %v1735, 0.5
        %v1744 = vsub.f32 1.5, %v1743
        %v1745 = vmul.f32 %v1665, %v1737
        %v1746 = vmul.f32 %v1670, %v1738
        %v1747 = vadd.f32 %v1745, %v1746
        %v1748 = vmul.f32 %v1675, %v1739
        %v1749 = vadd.f32 %v1747, %v1748
        %v1750 = vmul.f32 %v1665, %v1738
        %v1751 = vmul.f32 %v1670, %v1741
        %v1752 = vadd.f32 %v1750, %v1751
        %v1753 = vmul.f32 %v1675, %v1742
        %v1754 = vadd.f32 %v1752, %v1753
        %v1755 = vmul.f32 %v1665, %v1739
        %v1756 = vmul.f32 %v1670, %v1742
        %v1757 = vadd.f32 %v1755, %v1756
        %v1758 = vmul.f32 %v1675, %v1744
        %v1759 = vadd.f32 %v1757, %v1758
        %v1760 = vmul.f32 %v1680, %v1737
        %v1761 = vmul.f32 %v1685, %v1738
        %v1762 = vadd.f32 %v1760, %v1761
        %v1763 = vmul.f32 %v1690, %v1739
        %v1764 = vadd.f32 %v1762, %v1763
        %v1765 = vmul.f32 %v1680, %v1738
        %v1766 = vmul.f32 %v1685, %v1741
        %v1767 = vadd.f32 %v1765, %v1766
        %v1768 = vmul.f32 %v1690, %v1742
        %v1769 = vadd.f32 %v1767, %v1768
        %v1770 = vmul.f32 %v1680, %v1739
        %v1771 = vmul.f32 %v1685, %v1742
        %v1772 = vadd.f32 %v1770, %v1771
        %v1773 = vmul.f32 %v1690, %v1744
        %v1774 = vadd.f32 %v1772, %v1773
        %v1775 = vmul.f32 %v1695, %v1737
        %v1776 = vmul.f32 %v1700, %v1738
        %v1777 = vadd.f32 %v1775, %v1776
        %v1778 = vmul.f32 %v1705, %v1739
        %v1779 = vadd.f32 %v1777, %v1778
        %v1780 = vmul.f32 %v1695, %v1738
        %v1781 = vmul.f32 %v1700, %v1741
        %v1782 = vadd.f32 %v1780, %v1781
        %v1783 = vmul.f32 %v1705, %v1742
        %v1784 = vadd.f32 %v1782, %v1783
        %v1785 = vmul.f32 %v1695, %v1739
        %v1786 = vmul.f32 %v1700, %v1742
        %v1787 = vadd.f32 %v1785, %v1786
        %v1788 = vmul.f32 %v1705, %v1744
        %v1789 = vadd.f32 %v1787, %v1788
        %v1790 = vmul.f32 %v1749, %v1749
        %v1791 = vmul.f32 %v1764, %v1764
        %v1792 = vadd.f32 %v1790, %v1791
        %v1793 = vmul.f32 %v1779, %v1779
        %v1794 = vadd.f32 %v1792, %v1793
        %v1795 = vmul.f32 %v1749, %v1754
        %v1796 = vmul.f32 %v1764, %v1769
        %v1797 = vadd.f32 %v1795, %v1796
        %v1798 = vmul.f32 %v1779, %v1784
        %v1799 = vadd.f32 %v1797, %v1798
        %v1800 = vmul.f32 %v1749, %v1759
        %v1801 = vmul.f32 %v1764, %v1774
        %v1802 = vadd.f32 %v1800, %v1801
        %v1803 = vmul.f32 %v1779, %v1789
        %v1804 = vadd.f32 %v1802, %v1803
        %v1805 = vmul.f32 %v1754, %v1754
        %v1806 = vmul.f32 %v1769, %v1769
        %v1807 = vadd.f32 %v1805, %v1806
        %v1808 = vmul.f32 %v1784, %v1784
        %v1809 = vadd.f32 %v1807, %v1808
        %v1810 = vmul.f32 %v1754, %v1759
        %v1811 = vmul.f32 %v1769, %v1774
        %v1812 = vadd.f32 %v1810, %v1811
        %v1813 = vmul.f32 %v1784, %v1789
        %v1814 = vadd.f32 %v1812, %v1813
        %v1815 = vmul.f32 %v1759, %v1759
        %v1816 = vmul.f32 %v1774, %v1774
        %v1817 = vadd.f32 %v1815, %v1816
        %v1818 = vmul.f32 %v1789, %v1789
        %v1819 = vadd.f32 %v1817, %v1818
        %v1820 = vmul.f32 %v1794, 0.5
        %v1821 = vsub.f32 1.5, %v1820
        %v1822 = vmul.f32 %v1799, -0.5
        %v1823 = vmul.f32 %v1804, -0.5
        %v1824 = vmul.f32 %v1809, 0.5
        %v1825 = vsub.f32 1.5, %v1824
        %v1826 = vmul.f32 %v1814, -0.5
        %v1827 = vmul.f32 %v1819, 0.5
        %v1828 = vsub.f32 1.5, %v1827
        %v1829 = vmul.f32 %v1749, %v1821
        %v1830 = vmul.f32 %v1754, %v1822
        %v1831 = vadd.f32 %v1829, %v1830
        %v1832 = vmul.f32 %v1759, %v1823
        %v1833 = vadd.f32 %v1831, %v1832
        %v1834 = vmul.f32 %v1749, %v1822
        %v1835 = vmul.f32 %v1754, %v1825
        %v1836 = vadd.f32 %v1834, %v1835
        %v1837 = vmul.f32 %v1759, %v1826
        %v1838 = vadd.f32 %v1836, %v1837
        %v1839 = vmul.f32 %v1749, %v1823
        %v1840 = vmul.f32 %v1754, %v1826
        %v1841 = vadd.f32 %v1839, %v1840
        %v1842 = vmul.f32 %v1759, %v1828
        %v1843 = vadd.f32 %v1841, %v1842
        %v1844 = vmul.f32 %v1764, %v1821
        %v1845 = vmul.f32 %v1769, %v1822
        %v1846 = vadd.f32 %v1844, %v1845
        %v1847 = vmul.f32 %v1774, %v1823
        %v1848 = vadd.f32 %v1846, %v1847
        %v1849 = vmul.f32 %v1764, %v1822
        %v1850 = vmul.f32 %v1769, %v1825
        %v1851 = vadd.f32 %v1849, %v1850
        %v1852 = vmul.f32 %v1774, %v1826
        %v1853 = vadd.f32 %v1851, %v1852
        %v1854 = vmul.f32 %v1764, %v1823
        %v1855 = vmul.f32 %v1769, %v1826
        %v1856 = vadd.f32 %v1854, %v1855
        %v1857 = vmul.f32 %v1774, %v1828
        %v1858 = vadd.f32 %v1856, %v1857
        %v1859 = vmul.f32 %v1779, %v1821
        %v1860 = vmul.f32 %v1784, %v1822
        %v1861 = vadd.f32 %v1859, %v1860
        %v1862 = vmul.f32 %v1789, %v1823
        %v1863 = vadd.f32 %v1861, %v1862
        %v1864 = vmul.f32 %v1779, %v1822
        %v1865 = vmul.f32 %v1784, %v1825
        %v1866 = vadd.f32 %v1864, %v1865
        %v1867 = vmul.f32 %v1789, %v1826
        %v1868 = vadd.f32 %v1866, %v1867
        %v1869 = vmul.f32 %v1779, %v1823
        %v1870 = vmul.f32 %v1784, %v1826
        %v1871 = vadd.f32 %v1869, %v1870
        %v1872 = vmul.f32 %v1789, %v1828
        %v1873 = vadd.f32 %v1871, %v1872
        %v1874 = vmul.f32 %v1833, %v1833
        %v1875 = vmul.f32 %v1848, %v1848
        %v1876 = vadd.f32 %v1874, %v1875
        %v1877 = vmul.f32 %v1863, %v1863
        %v1878 = vadd.f32 %v1876, %v1877
        %v1879 = vmul.f32 %v1833, %v1838
        %v1880 = vmul.f32 %v1848, %v1853
        %v1881 = vadd.f32 %v1879, %v1880
        %v1882 = vmul.f32 %v1863, %v1868
        %v1883 = vadd.f32 %v1881, %v1882
        %v1884 = vmul.f32 %v1833, %v1843
        %v1885 = vmul.f32 %v1848, %v1858
        %v1886 = vadd.f32 %v1884, %v1885
        %v1887 = vmul.f32 %v1863, %v1873
        %v1888 = vadd.f32 %v1886, %v1887
        %v1889 = vmul.f32 %v1838, %v1838
        %v1890 = vmul.f32 %v1853, %v1853
        %v1891 = vadd.f32 %v1889, %v1890
        %v1892 = vmul.f32 %v1868, %v1868
        %v1893 = vadd.f32 %v1891, %v1892
        %v1894 = vmul.f32 %v1838, %v1843
        %v1895 = vmul.f32 %v1853, %v1858
        %v1896 = vadd.f32 %v1894, %v1895
        %v1897 = vmul.f32 %v1868, %v1873
        %v1898 = vadd.f32 %v1896, %v1897
        %v1899 = vmul.f32 %v1843, %v1843
        %v1900 = vmul.f32 %v1858, %v1858
        %v1901 = vadd.f32 %v1899, %v1900
        %v1902 = vmul.f32 %v1873, %v1873
        %v1903 = vadd.f32 %v1901, %v1902
        %v1904 = vmul.f32 %v1878, 0.5
        %v1905 = vsub.f32 1.5, %v1904
        %v1906 = vmul.f32 %v1883, -0.5
        %v1907 = vmul.f32 %v1888, -0.5
        %v1908 = vmul.f32 %v1893, 0.5
        %v1909 = vsub.f32 1.5, %v1908
        %v1910 = vmul.f32 %v1898, -0.5
        %v1911 = vmul.f32 %v1903, 0.5
        %v1912 = vsub.f32 1.5, %v1911
        %v1913 = vmul.f32 %v1833, %v1905
        %v1914 = vmul.f32 %v1838, %v1906
        %v1915 = vadd.f32 %v1913, %v1914
        %v1916 = vmul.f32 %v1843, %v1907
        %v1917 = vadd.f32 %v1915, %v1916
        %v1918 = vmul.f32 %v1833, %v1906
        %v1919 = vmul.f32 %v1838, %v1909
        %v1920 = vadd.f32 %v1918, %v1919
        %v1921 = vmul.f32 %v1843, %v1910
        %v1922 = vadd.f32 %v1920, %v1921
        %v1923 = vmul.f32 %v1833, %v1907
        %v1924 = vmul.f32 %v1838, %v1910
        %v1925 = vadd.f32 %v1923, %v1924
        %v1926 = vmul.f32 %v1843, %v1912
        %v1927 = vadd.f32 %v1925, %v1926
        %v1928 = vmul.f32 %v1848, %v1905
        %v1929 = vmul.f32 %v1853, %v1906
        %v1930 = vadd.f32 %v1928, %v1929
        %v1931 = vmul.f32 %v1858, %v1907
        %v1932 = vadd.f32 %v1930, %v1931
        %v1933 = vmul.f32 %v1848, %v1906
        %v1934 = vmul.f32 %v1853, %v1909
        %v1935 = vadd.f32 %v1933, %v1934
        %v1936 = vmul.f32 %v1858, %v1910
        %v1937 = vadd.f32 %v1935, %v1936
        %v1938 = vmul.f32 %v1848, %v1907
        %v1939 = vmul.f32 %v1853, %v1910
        %v1940 = vadd.f32 %v1938, %v1939
        %v1941 = vmul.f32 %v1858, %v1912
        %v1942 = vadd.f32 %v1940, %v1941
        %v1943 = vmul.f32 %v1863, %v1905
        %v1944 = vmul.f32 %v1868, %v1906
        %v1945 = vadd.f32 %v1943, %v1944
        %v1946 = vmul.f32 %v1873, %v1907
        %v1947 = vadd.f32 %v1945, %v1946
        %v1948 = vmul.f32 %v1863, %v1906
        %v1949 = vmul.f32 %v1868, %v1909
        %v1950 = vadd.f32 %v1948, %v1949
        %v1951 = vmul.f32 %v1873, %v1910
        %v1952 = vadd.f32 %v1950, %v1951
        %v1953 = vmul.f32 %v1863, %v1907
        %v1954 = vmul.f32 %v1868, %v1910
        %v1955 = vadd.f32 %v1953, %v1954
        %v1956 = vmul.f32 %v1873, %v1912
        %v1957 = vadd.f32 %v1955, %v1956
        %v1958 = vmul.f32 %v1917, %v1917
        %v1959 = vmul.f32 %v1932, %v1932
        %v1960 = vadd.f32 %v1958, %v1959
        %v1961 = vmul.f32 %v1947, %v1947
        %v1962 = vadd.f32 %v1960, %v1961
        %v1963 = vmul.f32 %v1917, %v1922
        %v1964 = vmul.f32 %v1932, %v1937
        %v1965 = vadd.f32 %v1963, %v1964
        %v1966 = vmul.f32 %v1947, %v1952
        %v1967 = vadd.f32 %v1965, %v1966
        %v1968 = vmul.f32 %v1917, %v1927
        %v1969 = vmul.f32 %v1932, %v1942
        %v1970 = vadd.f32 %v1968, %v1969
        %v1971 = vmul.f32 %v1947, %v1957
        %v1972 = vadd.f32 %v1970, %v1971
        %v1973 = vmul.f32 %v1922, %v1922
        %v1974 = vmul.f32 %v1937, %v1937
        %v1975 = vadd.f32 %v1973, %v1974
        %v1976 = vmul.f32 %v1952, %v1952
        %v1977 = vadd.f32 %v1975, %v1976
        %v1978 = vmul.f32 %v1922, %v1927
        %v1979 = vmul.f32 %v1937, %v1942
        %v1980 = vadd.f32 %v1978, %v1979
        %v1981 = vmul.f32 %v1952, %v1957
        %v1982 = vadd.f32 %v1980, %v1981
        %v1983 = vmul.f32 %v1927, %v1927
        %v1984 = vmul.f32 %v1942, %v1942
        %v1985 = vadd.f32 %v1983, %v1984
        %v1986 = vmul.f32 %v1957, %v1957
        %v1987 = vadd.f32 %v1985, %v1986
        %v1988 = vmul.f32 %v1962, 0.5
        %v1989 = vsub.f32 1.5, %v1988
        %v1990 = vmul.f32 %v1967, -0.5
        %v1991 = vmul.f32 %v1972, -0.5
        %v1992 = vmul.f32 %v1977, 0.5
        %v1993 = vsub.f32 1.5, %v1992
        %v1994 = vmul.f32 %v1982, -0.5
        %v1995 = vmul.f32 %v1987, 0.5
        %v1996 = vsub.f32 1.5, %v1995
        %v1997 = vmul.f32 %v1917, %v1989
        %v1998 = vmul.f32 %v1922, %v1990
        %v1999 = vadd.f32 %v1997, %v1998
        %v2000 = vmul.f32 %v1927, %v1991
        %v2001 = vadd.f32 %v1999, %v2000
        %v2002 = vmul.f32 %v1917, %v1990
        %v2003 = vmul.f32 %v1922, %v1993
        %v2004 = vadd.f32 %v2002, %v2003
        %v2005 = vmul.f32 %v1927, %v1994
        %v2006 = vadd.f32 %v2004, %v2005
        %v2007 = vmul.f32 %v1917, %v1991
        %v2008 = vmul.f32 %v1922, %v1994
        %v2009 = vadd.f32 %v2007, %v2008
        %v2010 = vmul.f32 %v1927, %v1996
        %v2011 = vadd.f32 %v2009, %v2010
        %v2012 = vmul.f32 %v1932, %v1989
        %v2013 = vmul.f32 %v1937, %v1990
        %v2014 = vadd.f32 %v2012, %v2013
        %v2015 = vmul.f32 %v1942, %v1991
        %v2016 = vadd.f32 %v2014, %v2015
        %v2017 = vmul.f32 %v1932, %v1990
        %v2018 = vmul.f32 %v1937, %v1993
        %v2019 = vadd.f32 %v2017, %v2018
        %v2020 = vmul.f32 %v1942, %v1994
        %v2021 = vadd.f32 %v2019, %v2020
        %v2022 = vmul.f32 %v1932, %v1991
        %v2023 = vmul.f32 %v1937, %v1994
        %v2024 = vadd.f32 %v2022, %v2023
        %v2025 = vmul.f32 %v1942, %v1996
        %v2026 = vadd.f32 %v2024, %v2025
        %v2027 = vmul.f32 %v1947, %v1989
        %v2028 = vmul.f32 %v1952, %v1990
        %v2029 = vadd.f32 %v2027, %v2028
        %v2030 = vmul.f32 %v1957, %v1991
        %v2031 = vadd.f32 %v2029, %v2030
        %v2032 = vmul.f32 %v1947, %v1990
        %v2033 = vmul.f32 %v1952, %v1993
        %v2034 = vadd.f32 %v2032, %v2033
        %v2035 = vmul.f32 %v1957, %v1994
        %v2036 = vadd.f32 %v2034, %v2035
        %v2037 = vmul.f32 %v1947, %v1991
        %v2038 = vmul.f32 %v1952, %v1994
        %v2039 = vadd.f32 %v2037, %v2038
        %v2040 = vmul.f32 %v1957, %v1996
        %v2041 = vadd.f32 %v2039, %v2040
        %v2042 = vmul.f32 %v2001, %v2001
        %v2043 = vmul.f32 %v2016, %v2016
        %v2044 = vadd.f32 %v2042, %v2043
        %v2045 = vmul.f32 %v2031, %v2031
        %v2046 = vadd.f32 %v2044, %v2045
        %v2047 = vmul.f32 %v2001, %v2006
        %v2048 = vmul.f32 %v2016, %v2021
        %v2049 = vadd.f32 %v2047, %v2048
        %v2050 = vmul.f32 %v2031, %v2036
        %v2051 = vadd.f32 %v2049, %v2050
        %v2052 = vmul.f32 %v2001, %v2011
        %v2053 = vmul.f32 %v2016, %v2026
        %v2054 = vadd.f32 %v2052, %v2053
        %v2055 = vmul.f32 %v2031, %v2041
        %v2056 = vadd.f32 %v2054, %v2055
        %v2057 = vmul.f32 %v2006, %v2006
        %v2058 = vmul.f32 %v2021, %v2021
        %v2059 = vadd.f32 %v2057, %v2058
        %v2060 = vmul.f32 %v2036, %v2036
        %v2061 = vadd.f32 %v2059, %v2060
        %v2062 = vmul.f32 %v2006, %v2011
        %v2063 = vmul.f32 %v2021, %v2026
        %v2064 = vadd.f32 %v2062, %v2063
        %v2065 = vmul.f32 %v2036, %v2041
        %v2066 = vadd.f32 %v2064, %v2065
        %v2067 = vmul.f32 %v2011, %v2011
        %v2068 = vmul.f32 %v2026, %v2026
        %v2069 = vadd.f32 %v2067, %v2068
        %v2070 = vmul.f32 %v2041, %v2041
        %v2071 = vadd.f32 %v2069, %v2070
        %v2072 = vmul.f32 %v2046, 0.5
        %v2073 = vsub.f32 1.5, %v2072
        %v2074 = vmul.f32 %v2051, -0.5
        %v2075 = vmul.f32 %v2056, -0.5
        %v2076 = vmul.f32 %v2061, 0.5
        %v2077 = vsub.f32 1.5, %v2076
        %v2078 = vmul.f32 %v2066, -0.5
        %v2079 = vmul.f32 %v2071, 0.5
        %v2080 = vsub.f32 1.5, %v2079
        %v2081 = vmul.f32 %v2001, %v2073
        %v2082 = vmul.f32 %v2006, %v2074
        %v2083 = vadd.f32 %v2081, %v2082
        %v2084 = vmul.f32 %v2011, %v2075
        %v2085 = vadd.f32 %v2083, %v2084
        %v2086 = vmul.f32 %v2001, %v2074
        %v2087 = vmul.f32 %v2006, %v2077
        %v2088 = vadd.f32 %v2086, %v2087
        %v2089 = vmul.f32 %v2011, %v2078
        %v2090 = vadd.f32 %v2088, %v2089
        %v2091 = vmul.f32 %v2001, %v2075
        %v2092 = vmul.f32 %v2006, %v2078
        %v2093 = vadd.f32 %v2091, %v2092
        %v2094 = vmul.f32 %v2011, %v2080
        %v2095 = vadd.f32 %v2093, %v2094
        %v2096 = vmul.f32 %v2016, %v2073
        %v2097 = vmul.f32 %v2021, %v2074
        %v2098 = vadd.f32 %v2096, %v2097
        %v2099 = vmul.f32 %v2026, %v2075
        %v2100 = vadd.f32 %v2098, %v2099
        %v2101 = vmul.f32 %v2016, %v2074
        %v2102 = vmul.f32 %v2021, %v2077
        %v2103 = vadd.f32 %v2101, %v2102
        %v2104 = vmul.f32 %v2026, %v2078
        %v2105 = vadd.f32 %v2103, %v2104
        %v2106 = vmul.f32 %v2016, %v2075
        %v2107 = vmul.f32 %v2021, %v2078
        %v2108 = vadd.f32 %v2106, %v2107
        %v2109 = vmul.f32 %v2026, %v2080
        %v2110 = vadd.f32 %v2108, %v2109
        %v2111 = vmul.f32 %v2031, %v2073
        %v2112 = vmul.f32 %v2036, %v2074
        %v2113 = vadd.f32 %v2111, %v2112
        %v2114 = vmul.f32 %v2041, %v2075
        %v2115 = vadd.f32 %v2113, %v2114
        %v2116 = vmul.f32 %v2031, %v2074
        %v2117 = vmul.f32 %v2036, %v2077
        %v2118 = vadd.f32 %v2116, %v2117
        %v2119 = vmul.f32 %v2041, %v2078
        %v2120 = vadd.f32 %v2118, %v2119
        %v2121 = vmul.f32 %v2031, %v2075
        %v2122 = vmul.f32 %v2036, %v2078
        %v2123 = vadd.f32 %v2121, %v2122
        %v2124 = vmul.f32 %v2041, %v2080
        %v2125 = vadd.f32 %v2123, %v2124
        %v2126 = vld [vmem:[%s370] sm:$0xff]
        %v2127 = vmul.f32 %v469, %v2085
        %v2128 = vmul.f32 %v470, %v2090
        %v2129 = vadd.f32 %v2127, %v2128
        %v2130 = vmul.f32 %v471, %v2095
        %v2131 = vadd.f32 %v2129, %v2130
        %v2132 = vsub.f32 %v2131, %v511
        %v2133 = vmul.f32 %v2132, %v2132
        %v2134 = vmul.f32 %v469, %v2100
        %v2135 = vmul.f32 %v470, %v2105
        %v2136 = vadd.f32 %v2134, %v2135
        %v2137 = vmul.f32 %v471, %v2110
        %v2138 = vadd.f32 %v2136, %v2137
        %v2139 = vsub.f32 %v2138, %v512
        %v2140 = vmul.f32 %v2139, %v2139
        %v2141 = vadd.f32 %v2133, %v2140
        %v2142 = vmul.f32 %v469, %v2115
        %v2143 = vmul.f32 %v470, %v2120
        %v2144 = vadd.f32 %v2142, %v2143
        %v2145 = vmul.f32 %v471, %v2125
        %v2146 = vadd.f32 %v2144, %v2145
        %v2147 = vsub.f32 %v2146, %v513
        %v2148 = vmul.f32 %v2147, %v2147
        %v2149 = vadd.f32 %v2141, %v2148
        %v2150 = vrsqrt.pop %v2149
        %v2151 = vmul.f32 %v2149, %v2150
        %vm2152 = vcmp.eq.f32.partialorder %v2149, inf
        %v2153 = vsel %vm2152, %v2149, %v2151
        %vm2154 = vcmp.eq.f32.partialorder %v2149, 0.0
        %v2155 = vand.u32 %v2149, 2147483648
        %v2156 = vsel %vm2154, %v2155, %v2153
        %v2157 = vmul.f32 %v2156, %v2126
        %v2158 = vrot.slane %v2157, 4
        %v2159 = vadd.f32 %v2157, %v2158
        %v2160 = vrot.slane %v2159, 2
        %v2161 = vadd.f32 %v2159, %v2160
        %v2162 = vrot.slane %v2161, 1
        %v2163 = vadd.f32 %v2161, %v2162
        %v2164 = vrot.slane %v2126, 4
        %v2165 = vadd.f32 %v2126, %v2164
        %v2166 = vrot.slane %v2165, 2
        %v2167 = vadd.f32 %v2165, %v2166
        %v2168 = vrot.slane %v2167, 1
        %v2169 = vadd.f32 %v2167, %v2168
        %2170 = vst [vmem:[%s415] sm:$0x1] %v2163
        %2171 = vst [vmem:[%s421] sm:$0x1] %v2169
        %s2172 = sand.u32 %s171, 1
        %s2173 = scalar_lea.sflag [#allocation4], %s2172
        %s2174 = sand.u32 %s171, 1
        %s2175 = scalar_lea.vmem [#allocation11], %s2174
        %s2176 = sand.u32 %s197, 1
        %s2177 = scalar_lea.sflag [#allocation13], %s2176
        %s2178 = sand.u32 %s197, 1
        %s2179 = scalar_lea.vmem [#allocation12], %s2178
        // Predicated region
        $region61: #{tpu_custom_call.1} parent=39 // pred_check
          %p2180 = pneg %p181
        $region62: #{tpu_custom_call.1} parent=39 // pred_check_branch
          %2182 = sbr.rel (%p2180) target = $region64
        $region63: #{tpu_custom_call.1} parent=39 // pred_region
          %s2184 = ssub.s32 16, 16
          %2185 = vsyncadd %s2173, %s2184
          %s2186 = smul.addr %s33, 16
          %s2187 = scalar_lea.hbm %s5, %s2186
          %s2189 = sshll.u32 %s2175, 4
          %s2190 = int_to_ptr.vmem [resolvable:$true] %s2189
          %2192 = dma.vmem_to_hbm [thread:$0]  %s2190, 16, %s2187, %s2173
        $region64: #{tpu_custom_call.1} parent=39 // pred_fallthru
          _
        // Predicated region
        $region65: #{tpu_custom_call.1} parent=39 // pred_check
          %p2193 = pneg %p207
        $region66: #{tpu_custom_call.1} parent=39 // pred_check_branch
          %2195 = sbr.rel (%p2193) target = $region68
        $region67: #{tpu_custom_call.1} parent=39 // pred_region
          %s2197 = ssub.s32 16, 16
          %2198 = vsyncadd %s2177, %s2197
          %s2199 = smul.addr %s33, 16
          %s2200 = scalar_lea.hbm %s6, %s2199
          %s2202 = sshll.u32 %s2179, 4
          %s2203 = int_to_ptr.vmem [resolvable:$true] %s2202
          %2205 = dma.vmem_to_hbm [thread:$0]  %s2203, 16, %s2200, %s2177
        $region68: #{tpu_custom_call.1} parent=39 // pred_fallthru
          _
      $region40: #{tpu_custom_call.1} parent=5 // pred_fallthru
        _
      %p2206 = scmp.le.s32.totalorder 2, %s28
      // Predicated region
      $region69: #{tpu_custom_call.1} parent=5 // pred_check
        %p2207 = pneg %p2206
      $region70: #{tpu_custom_call.1} parent=5 // pred_check_branch
        %2209 = sbr.rel (%p2207) target = $region72
      $region71: #{tpu_custom_call.1} parent=5 // pred_region
        %s2210 = ssub.s32 %s28, 2
        // Predicated region
        $region73: #{tpu_custom_call.1} parent=71 // pred_check
          %p2211 = pneg %p187
        $region74: #{tpu_custom_call.1} parent=71 // pred_check_branch
          %2213 = sbr.rel (%p2211) target = $region76
        $region75: #{tpu_custom_call.1} parent=71 // pred_region
          %s2214 = sand.u32 %s172, 1
          %s2215 = scalar_lea.sflag [#allocation4], %s2214
          %s2216 = sand.u32 %s172, 1
          %s2217 = scalar_lea.vmem [#allocation11], %s2216
          %2218 = dma.done %s2215, 16
        $region76: #{tpu_custom_call.1} parent=71 // pred_fallthru
          _
        // Predicated region
        $region77: #{tpu_custom_call.1} parent=71 // pred_check
          %p2219 = pneg %p213
        $region78: #{tpu_custom_call.1} parent=71 // pred_check_branch
          %2221 = sbr.rel (%p2219) target = $region80
        $region79: #{tpu_custom_call.1} parent=71 // pred_region
          %s2222 = sand.u32 %s198, 1
          %s2223 = scalar_lea.sflag [#allocation13], %s2222
          %s2224 = sand.u32 %s198, 1
          %s2225 = scalar_lea.vmem [#allocation12], %s2224
          %2226 = dma.done %s2223, 16
        $region80: #{tpu_custom_call.1} parent=71 // pred_fallthru
          _
      $region72: #{tpu_custom_call.1} parent=5 // pred_fallthru
        _
    $region6: #{tpu_custom_call.1} parent=1 // loop_footer
      %s32 = sadd.s32 1, %s28
    $region7: #{tpu_custom_call.1} parent=1 // loop_footer_branch
      %27 = sbr.rel target = $region3
    $region8: #{tpu_custom_call.1} parent=1 // loop_exit
      _
    %2227 = vsyncpa [#allocation3], 1
    %s2228 = scalar_lea.sflag [#allocation3], 1
    %2229 = vsyncpa %s2228, 1
    %2230 = vsyncpa [#allocation6], 1
    %s2231 = scalar_lea.sflag [#allocation6], 1
    %2232 = vsyncpa %s2231, 1
    %2233 = vsyncpa [#allocation9], 1
    %s2234 = scalar_lea.sflag [#allocation9], 1
    %2235 = vsyncpa %s2234, 1
    %2236 = vsyncpa [#allocation4], 1
    %s2237 = scalar_lea.sflag [#allocation4], 1
    %2238 = vsyncpa %s2237, 1
    %2239 = vsyncpa [#allocation13], 1
    %s2240 = scalar_lea.sflag [#allocation13], 1
    %2241 = vsyncpa %s2240, 1

</llo_original>
